<compile_context>
chip_gen: v7x
topology: tpu7x:2x2x1
jax: 0.10.0
libtpu: 0.0.40
codegen_flags: <defaults>
</compile_context>

<pallas_src>
import math

import jax
import jax.numpy as jnp
from jax.experimental import pallas as pl
from jax.experimental.pallas import tpu as pltpu

# ---- model config (small, consistent with BertCrossLayer.__init__) ----
HIDDEN = 32
NUM_HEADS = 4
HEAD_DIM = HIDDEN // NUM_HEADS
INTERMEDIATE = 4 * HIDDEN
LN_EPS = 1e-12
MXU_DTYPE = jnp.bfloat16   # matmul-operand dtype (jnp.float32 for exact parity)


# -------------------- in-kernel helpers (trace-time, unrolled) --------------------

def _layer_norm(y, gamma, beta):
    mean = jnp.mean(y, axis=-1, keepdims=True)
    cent = y - mean
    var = jnp.mean(cent * cent, axis=-1, keepdims=True)
    return cent * jax.lax.rsqrt(var + LN_EPS) * gamma + beta


def _erf(x):
    # Abramowitz & Stegun 7.1.26, |err| < 1.5e-7.  Only exp / VPU ops.
    a1, a2, a3, a4, a5 = 0.254829592, -0.284496736, 1.421413741, -1.453152027, 1.061405429
    sgn = jnp.where(x < 0.0, -1.0, 1.0)
    ax = jnp.abs(x)
    t = 1.0 / (1.0 + 0.3275911 * ax)
    poly = ((((a5 * t + a4) * t + a3) * t + a2) * t + a1) * t
    return sgn * (1.0 - poly * jnp.exp(-ax * ax))


def _gelu_exact(x):
    # HF hidden_act='gelu' is the exact erf form: x * 0.5 * (1 + erf(x/sqrt(2))).
    return 0.5 * x * (1.0 + _erf(x * 0.7071067811865476))


def _dense(x, w_ref, b_ref):
    # x: (Bb, rows, Hin) f32; w: (Hin, Hout) MXU_DTYPE; b: (1, Hout) f32.
    y = jnp.einsum("bsh,hk->bsk", x.astype(MXU_DTYPE), w_ref[...],
                   preferred_element_type=jnp.float32)
    return y + b_ref[...]


def _mha(q, k, v, add_mask, head_mask):
    """Multi-head attention on (Bb, rows, H) slabs with zero lane slicing.

    Heads are disjoint HEAD_DIM lane spans; head h's scores/context are computed
    with full-width matmuls on lane-masked operands and the per-head contexts are
    summed (each lands only on its own lane span), so no 8-lane slices and no
    concat.  Python loop unrolls at trace time.  q already carries 1/sqrt(d)
    (folded into Wq at init).
    """
    kb = k.astype(MXU_DTYPE)
    ctx = None
    for h in range(NUM_HEADS):
        m = head_mask[h:h + 1, :]                         # (1, H) one-hot lane span
        s = jnp.einsum("bsh,bth->bst", (q * m).astype(MXU_DTYPE), kb,
                       preferred_element_type=jnp.float32)
        s = s + add_mask                                  # (Bb, S, T)
        s = s - jnp.max(s, axis=-1, keepdims=True)
        p = jnp.exp(s)
        p = p * pl.reciprocal(jnp.sum(p, axis=-1, keepdims=True), approx=True)
        c = jnp.einsum("bst,bth->bsh", p.astype(MXU_DTYPE),
                       (v * m).astype(MXU_DTYPE),
                       preferred_element_type=jnp.float32)
        ctx = c if ctx is None else ctx + c
    return ctx


# -------------------- fused Pallas kernel --------------------

def _bert_cross_layer_kernel(
        x_ref, enc_ref, ms_ref, me_ref, hm_ref,
        wq_s_ref, bq_s_ref, wk_s_ref, bk_s_ref, wv_s_ref, bv_s_ref,
        wo_s_ref, bo_s_ref, g1_ref, be1_ref,
        wq_c_ref, bq_c_ref, wk_c_ref, bk_c_ref, wv_c_ref, bv_c_ref,
        wo_c_ref, bo_c_ref, g2_ref, be2_ref,
        wi_ref, bi_ref, wo2_ref, bo2_ref, g3_ref, be3_ref,
        o_ref):
    x = x_ref[...]          # (Bb, S, H) f32
    enc = enc_ref[...]      # (Bb, T, H) f32
    mask_s = ms_ref[...]    # (Bb, 1, S) additive
    mask_e = me_ref[...]    # (Bb, 1, T) additive
    hm = hm_ref[...]        # (NUM_HEADS, H) one-hot lane masks

    # ---- self attention (dropout = identity in eval mode) ----
    q = _dense(x, wq_s_ref, bq_s_ref)        # 1/sqrt(d) pre-folded into Wq/bq
    k = _dense(x, wk_s_ref, bk_s_ref)
    v = _dense(x, wv_s_ref, bv_s_ref)
    ctx = _mha(q, k, v, mask_s, hm)
    attn_out = _layer_norm(_dense(ctx, wo_s_ref, bo_s_ref) + x,
                           g1_ref[...], be1_ref[...])

    # ---- cross attention (Q from attn_out; K/V from encoder states) ----
    qc = _dense(attn_out, wq_c_ref, bq_c_ref)
    kc = _dense(enc, wk_c_ref, bk_c_ref)
    vc = _dense(enc, wv_c_ref, bv_c_ref)
    ctx2 = _mha(qc, kc, vc, mask_e, hm)
    cross_out = _layer_norm(_dense(ctx2, wo_c_ref, bo_c_ref) + attn_out,
                            g2_ref[...], be2_ref[...])

    # ---- feed-forward chunk: intermediate (dense+gelu) + output (dense+res+LN) ----
    inter = _gelu_exact(_dense(cross_out, wi_ref, bi_ref))
    out = _layer_norm(_dense(inter, wo2_ref, bo2_ref) + cross_out,
                      g3_ref[...], be3_ref[...])

    o_ref[...] = out.astype(o_ref.dtype)


_WEIGHT_ORDER = (
    "wq_s", "bq_s", "wk_s", "bk_s", "wv_s", "bv_s", "wo_s", "bo_s", "ln1_g", "ln1_b",
    "wq_c", "bq_c", "wk_c", "bk_c", "wv_c", "bv_c", "wo_c", "bo_c", "ln2_g", "ln2_b",
    "wi", "bi", "wo2", "bo2", "ln3_g", "ln3_b",
)


def bert_cross_layer(params, hidden_states, encoder_hidden_states,
                     ext_attention_mask, ext_encoder_attention_mask,
                     batch_block=None):
    """hidden_states: (B,S,H); encoder_hidden_states: (B,T,H);
    extended additive masks: (B,1,1,S) and (B,1,1,T)."""
    B, S, H = hidden_states.shape
    T = encoder_hidden_states.shape[1]
    if batch_block is None:
        # Batch rows per grid step, but keep >= 2 "parallel" steps whenever B >= 2
        # so both v7x TensorCores get work; on single-TC v5e/v6e the extra step
        # costs ~0.35us (negligible).
        batch_block = B // 2 if (B >= 2 and B % 2 == 0) else 1
    assert B % batch_block == 0, (B, batch_block)
    num_steps = B // batch_block

    mask_s = ext_attention_mask.reshape(B, 1, S).astype(jnp.float32)
    mask_e = ext_encoder_attention_mask.reshape(B, 1, T).astype(jnp.float32)

    # One-hot lane masks selecting each head's HEAD_DIM span of the hidden axis.
    head_mask = (jnp.arange(HIDDEN)[None, :] // HEAD_DIM
                 == jnp.arange(NUM_HEADS)[:, None]).astype(jnp.float32)

    weights = [params[name] for name in _WEIGHT_ORDER]

    batch_spec = lambda shape: pl.BlockSpec(shape, lambda b: (b, 0, 0))
    const_spec = lambda shape: pl.BlockSpec(shape, lambda b: (0, 0))  # VMEM-resident

    in_specs = [
        batch_spec((batch_block, S, H)),     # hidden_states
        batch_spec((batch_block, T, H)),     # encoder_hidden_states
        batch_spec((batch_block, 1, S)),     # self-attn additive mask
        batch_spec((batch_block, 1, T)),     # cross-attn additive mask
        const_spec(head_mask.shape),         # per-head lane masks
    ] + [const_spec(w.shape) for w in weights]

    # Advisory cost estimate so XLA schedules neighbours around this tiny call.
    dense_flops = 2 * B * (4 * S * H * H + 2 * S * H * H + 2 * T * H * H
                           + 2 * S * H * INTERMEDIATE)
    attn_flops = 2 * B * NUM_HEADS * (2 * S * S * H + 2 * S * T * H)
    transcendentals = B * (NUM_HEADS * S * (S + T) + S * INTERMEDIATE)
    bytes_accessed = 4 * (hidden_states.size + encoder_hidden_states.size
                          + mask_s.size + mask_e.size + B * S * H)
    bytes_accessed += sum(int(w.size) * w.dtype.itemsize for w in weights)
    cost = pl.CostEstimate(flops=int(dense_flops + attn_flops),
                           transcendentals=int(transcendentals),
                           bytes_accessed=int(bytes_accessed))

    return pl.pallas_call(
        _bert_cross_layer_kernel,
        out_shape=jax.ShapeDtypeStruct((B, S, H), jnp.float32),
        grid=(num_steps,),
        in_specs=in_specs,
        out_specs=batch_spec((batch_block, S, H)),
        compiler_params=pltpu.CompilerParams(dimension_semantics=("parallel",)),
        cost_estimate=cost,
    )(hidden_states, encoder_hidden_states, mask_s, mask_e, head_mask, *weights)


# -------------------- deterministic parameter init --------------------

def init_params(key):
    ks = iter(jax.random.split(key, 10))

    def dense_w(k, fi, fo):
        return 0.02 * jax.random.normal(k, (fi, fo), jnp.float32)

    zeros = lambda n: jnp.zeros((1, n), jnp.float32)
    ones = lambda n: jnp.ones((1, n), jnp.float32)
    scale = 1.0 / math.sqrt(HEAD_DIM)     # folded into Q projections at init
    wd = MXU_DTYPE

    return {
        # --- self-attention ---
        "wq_s": (dense_w(next(ks), HIDDEN, HIDDEN) * scale).astype(wd),
        "bq_s": zeros(HIDDEN) * scale,
        "wk_s": dense_w(next(ks), HIDDEN, HIDDEN).astype(wd), "bk_s": zeros(HIDDEN),
        "wv_s": dense_w(next(ks), HIDDEN, HIDDEN).astype(wd), "bv_s": zeros(HIDDEN),
        "wo_s": dense_w(next(ks), HIDDEN, HIDDEN).astype(wd), "bo_s": zeros(HIDDEN),
        "ln1_g": ones(HIDDEN), "ln1_b": zeros(HIDDEN),
        # --- cross-attention ---
        "wq_c": (dense_w(next(ks), HIDDEN, HIDDEN) * scale).astype(wd),
        "bq_c": zeros(HIDDEN) * scale,
        "wk_c": dense_w(next(ks), HIDDEN, HIDDEN).astype(wd), "bk_c": zeros(HIDDEN),
        "wv_c": dense_w(next(ks), HIDDEN, HIDDEN).astype(wd), "bv_c": zeros(HIDDEN),
        "wo_c": dense_w(next(ks), HIDDEN, HIDDEN).astype(wd), "bo_c": zeros(HIDDEN),
        "ln2_g": ones(HIDDEN), "ln2_b": zeros(HIDDEN),
        # --- feed-forward ---
        "wi": dense_w(next(ks), HIDDEN, INTERMEDIATE).astype(wd), "bi": zeros(INTERMEDIATE),
        "wo2": dense_w(next(ks), INTERMEDIATE, HIDDEN).astype(wd), "bo2": zeros(HIDDEN),
        "ln3_g": ones(HIDDEN), "ln3_b": zeros(HIDDEN),
    }


# -------------------- demo --------------------

if __name__ == "__main__":
    B, S, T = 2, 8, 16  # batch, text seq, encoder (image) seq
    root = jax.random.PRNGKey(0)
    k_param, k_x, k_enc = jax.random.split(root, 3)

    params = init_params(k_param)
    hidden_states = jax.random.normal(k_x, (B, S, HIDDEN), jnp.float32)
    encoder_hidden_states = jax.random.normal(k_enc, (B, T, HIDDEN), jnp.float32)

    # 1/0 validity masks -> BERT extended additive masks (B, 1, 1, L)
    attention_mask = jnp.ones((B, S), jnp.float32)
    encoder_attention_mask = jnp.ones((B, T), jnp.float32).at[:, -2:].set(0.0)
    ext_attention_mask = (1.0 - attention_mask)[:, None, None, :] * -10000.0
    ext_encoder_attention_mask = (1.0 - encoder_attention_mask)[:, None, None, :] * -10000.0

    out = bert_cross_layer(params, hidden_states, encoder_hidden_states,
                           ext_attention_mask, ext_encoder_attention_mask)
    out = jax.block_until_ready(out)

    assert out.shape == (B, S, HIDDEN), out.shape
    assert bool(jnp.isfinite(out).all())
    print("KERNEL_OK")
</pallas_src>

<mosaic_0001>
module attributes {stable_mosaic.version = 11 : i64} {
  func.func @_bert_cross_layer_kernel(%arg0: i32, %arg1: memref<1x8x32xf32, #tpu.memory_space<vmem>>, %arg2: memref<1x16x32xf32, #tpu.memory_space<vmem>>, %arg3: memref<1x1x8xf32, #tpu.memory_space<vmem>>, %arg4: memref<1x1x16xf32, #tpu.memory_space<vmem>>, %arg5: memref<4x32xf32, #tpu.memory_space<vmem>>, %arg6: memref<32x32xbf16, #tpu.memory_space<vmem>>, %arg7: memref<1x32xf32, #tpu.memory_space<vmem>>, %arg8: memref<32x32xbf16, #tpu.memory_space<vmem>>, %arg9: memref<1x32xf32, #tpu.memory_space<vmem>>, %arg10: memref<32x32xbf16, #tpu.memory_space<vmem>>, %arg11: memref<1x32xf32, #tpu.memory_space<vmem>>, %arg12: memref<32x32xbf16, #tpu.memory_space<vmem>>, %arg13: memref<1x32xf32, #tpu.memory_space<vmem>>, %arg14: memref<1x32xf32, #tpu.memory_space<vmem>>, %arg15: memref<1x32xf32, #tpu.memory_space<vmem>>, %arg16: memref<32x32xbf16, #tpu.memory_space<vmem>>, %arg17: memref<1x32xf32, #tpu.memory_space<vmem>>, %arg18: memref<32x32xbf16, #tpu.memory_space<vmem>>, %arg19: memref<1x32xf32, #tpu.memory_space<vmem>>, %arg20: memref<32x32xbf16, #tpu.memory_space<vmem>>, %arg21: memref<1x32xf32, #tpu.memory_space<vmem>>, %arg22: memref<32x32xbf16, #tpu.memory_space<vmem>>, %arg23: memref<1x32xf32, #tpu.memory_space<vmem>>, %arg24: memref<1x32xf32, #tpu.memory_space<vmem>>, %arg25: memref<1x32xf32, #tpu.memory_space<vmem>>, %arg26: memref<32x128xbf16, #tpu.memory_space<vmem>>, %arg27: memref<1x128xf32, #tpu.memory_space<vmem>>, %arg28: memref<128x32xbf16, #tpu.memory_space<vmem>>, %arg29: memref<1x32xf32, #tpu.memory_space<vmem>>, %arg30: memref<1x32xf32, #tpu.memory_space<vmem>>, %arg31: memref<1x32xf32, #tpu.memory_space<vmem>>, %arg32: memref<1x8x32xf32, #tpu.memory_space<vmem>>) attributes {dimension_semantics = [#tpu.dimension_semantics<parallel>], iteration_bounds = array<i64: 2>, scalar_prefetch = 0 : i64, scratch_operands = 0 : i64, tpu.core_type = #tpu.core_type<tc>, window_params = [{transform_indices = @transform_0, window_bounds = array<i64: 1, 8, 32>}, {transform_indices = @transform_1, window_bounds = array<i64: 1, 16, 32>}, {transform_indices = @transform_2, window_bounds = array<i64: 1, 1, 8>}, {transform_indices = @transform_3, window_bounds = array<i64: 1, 1, 16>}, {pipeline_mode = #tpu.pipeline_mode<synchronous>, transform_indices = @transform_4, window_bounds = array<i64: 4, 32>}, {pipeline_mode = #tpu.pipeline_mode<synchronous>, transform_indices = @transform_5, window_bounds = array<i64: 32, 32>}, {pipeline_mode = #tpu.pipeline_mode<synchronous>, transform_indices = @transform_6, window_bounds = array<i64: 1, 32>}, {pipeline_mode = #tpu.pipeline_mode<synchronous>, transform_indices = @transform_7, window_bounds = array<i64: 32, 32>}, {pipeline_mode = #tpu.pipeline_mode<synchronous>, transform_indices = @transform_8, window_bounds = array<i64: 1, 32>}, {pipeline_mode = #tpu.pipeline_mode<synchronous>, transform_indices = @transform_9, window_bounds = array<i64: 32, 32>}, {pipeline_mode = #tpu.pipeline_mode<synchronous>, transform_indices = @transform_10, window_bounds = array<i64: 1, 32>}, {pipeline_mode = #tpu.pipeline_mode<synchronous>, transform_indices = @transform_11, window_bounds = array<i64: 32, 32>}, {pipeline_mode = #tpu.pipeline_mode<synchronous>, transform_indices = @transform_12, window_bounds = array<i64: 1, 32>}, {pipeline_mode = #tpu.pipeline_mode<synchronous>, transform_indices = @transform_13, window_bounds = array<i64: 1, 32>}, {pipeline_mode = #tpu.pipeline_mode<synchronous>, transform_indices = @transform_14, window_bounds = array<i64: 1, 32>}, {pipeline_mode = #tpu.pipeline_mode<synchronous>, transform_indices = @transform_15, window_bounds = array<i64: 32, 32>}, {pipeline_mode = #tpu.pipeline_mode<synchronous>, transform_indices = @transform_16, window_bounds = array<i64: 1, 32>}, {pipeline_mode = #tpu.pipeline_mode<synchronous>, transform_indices = @transform_17, window_bounds = array<i64: 32, 32>}, {pipeline_mode = #tpu.pipeline_mode<synchronous>, transform_indices = @transform_18, window_bounds = array<i64: 1, 32>}, {pipeline_mode = #tpu.pipeline_mode<synchronous>, transform_indices = @transform_19, window_bounds = array<i64: 32, 32>}, {pipeline_mode = #tpu.pipeline_mode<synchronous>, transform_indices = @transform_20, window_bounds = array<i64: 1, 32>}, {pipeline_mode = #tpu.pipeline_mode<synchronous>, transform_indices = @transform_21, window_bounds = array<i64: 32, 32>}, {pipeline_mode = #tpu.pipeline_mode<synchronous>, transform_indices = @transform_22, window_bounds = array<i64: 1, 32>}, {pipeline_mode = #tpu.pipeline_mode<synchronous>, transform_indices = @transform_23, window_bounds = array<i64: 1, 32>}, {pipeline_mode = #tpu.pipeline_mode<synchronous>, transform_indices = @transform_24, window_bounds = array<i64: 1, 32>}, {pipeline_mode = #tpu.pipeline_mode<synchronous>, transform_indices = @transform_25, window_bounds = array<i64: 32, 128>}, {pipeline_mode = #tpu.pipeline_mode<synchronous>, transform_indices = @transform_26, window_bounds = array<i64: 1, 128>}, {pipeline_mode = #tpu.pipeline_mode<synchronous>, transform_indices = @transform_27, window_bounds = array<i64: 128, 32>}, {pipeline_mode = #tpu.pipeline_mode<synchronous>, transform_indices = @transform_28, window_bounds = array<i64: 1, 32>}, {pipeline_mode = #tpu.pipeline_mode<synchronous>, transform_indices = @transform_29, window_bounds = array<i64: 1, 32>}, {pipeline_mode = #tpu.pipeline_mode<synchronous>, transform_indices = @transform_30, window_bounds = array<i64: 1, 32>}, {transform_indices = @transform_31, window_bounds = array<i64: 1, 8, 32>}]} {
    %c0 = arith.constant 0 : index
    %c0_0 = arith.constant 0 : index
    %c0_1 = arith.constant 0 : index
    %0 = vector.load %arg1[%c0, %c0_0, %c0_1] : memref<1x8x32xf32, #tpu.memory_space<vmem>>, vector<1x8x32xf32>
    %c0_2 = arith.constant 0 : index
    %c0_3 = arith.constant 0 : index
    %c0_4 = arith.constant 0 : index
    %1 = vector.load %arg2[%c0_2, %c0_3, %c0_4] : memref<1x16x32xf32, #tpu.memory_space<vmem>>, vector<1x16x32xf32>
    %c0_5 = arith.constant 0 : index
    %c0_6 = arith.constant 0 : index
    %c0_7 = arith.constant 0 : index
    %2 = vector.load %arg3[%c0_5, %c0_6, %c0_7] : memref<1x1x8xf32, #tpu.memory_space<vmem>>, vector<1x1x8xf32>
    %c0_8 = arith.constant 0 : index
    %c0_9 = arith.constant 0 : index
    %c0_10 = arith.constant 0 : index
    %3 = vector.load %arg4[%c0_8, %c0_9, %c0_10] : memref<1x1x16xf32, #tpu.memory_space<vmem>>, vector<1x1x16xf32>
    %c0_11 = arith.constant 0 : index
    %c0_12 = arith.constant 0 : index
    %4 = vector.load %arg5[%c0_11, %c0_12] : memref<4x32xf32, #tpu.memory_space<vmem>>, vector<4x32xf32>
    %5 = arith.truncf %0 : vector<1x8x32xf32> to vector<1x8x32xbf16>
    %c0_13 = arith.constant 0 : index
    %c0_14 = arith.constant 0 : index
    %6 = vector.load %arg6[%c0_13, %c0_14] : memref<32x32xbf16, #tpu.memory_space<vmem>>, vector<32x32xbf16>
    "tpu.trace_start"() <{level = 10 : i32, message = "bsh,hk->bsk"}> : () -> ()
    %cst = arith.constant dense<0.000000e+00> : vector<1x8x32xf32>
    %7 = tpu.matmul %5, %6, %cst {dimension_numbers = #tpu.dot_dimension_numbers<[2], [0], [0, 1], [1], [0, 0, 0, 1, 1, 1], [], []>} : vector<1x8x32xbf16>, vector<32x32xbf16>, vector<1x8x32xf32> -> vector<1x8x32xf32>
    "tpu.trace_stop"() : () -> ()
    %c0_15 = arith.constant 0 : index
    %c0_16 = arith.constant 0 : index
    %8 = vector.load %arg7[%c0_15, %c0_16] : memref<1x32xf32, #tpu.memory_space<vmem>>, vector<1x32xf32>
    %9 = vector.shape_cast %8 : vector<1x32xf32> to vector<1x1x32xf32>
    %10 = vector.broadcast %9 : vector<1x1x32xf32> to vector<1x8x32xf32>
    %11 = arith.addf %7, %10 : vector<1x8x32xf32>
    %12 = arith.truncf %0 : vector<1x8x32xf32> to vector<1x8x32xbf16>
    %c0_17 = arith.constant 0 : index
    %c0_18 = arith.constant 0 : index
    %13 = vector.load %arg8[%c0_17, %c0_18] : memref<32x32xbf16, #tpu.memory_space<vmem>>, vector<32x32xbf16>
    "tpu.trace_start"() <{level = 10 : i32, message = "bsh,hk->bsk"}> : () -> ()
    %cst_19 = arith.constant dense<0.000000e+00> : vector<1x8x32xf32>
    %14 = tpu.matmul %12, %13, %cst_19 {dimension_numbers = #tpu.dot_dimension_numbers<[2], [0], [0, 1], [1], [0, 0, 0, 1, 1, 1], [], []>} : vector<1x8x32xbf16>, vector<32x32xbf16>, vector<1x8x32xf32> -> vector<1x8x32xf32>
    "tpu.trace_stop"() : () -> ()
    %c0_20 = arith.constant 0 : index
    %c0_21 = arith.constant 0 : index
    %15 = vector.load %arg9[%c0_20, %c0_21] : memref<1x32xf32, #tpu.memory_space<vmem>>, vector<1x32xf32>
    %16 = vector.shape_cast %15 : vector<1x32xf32> to vector<1x1x32xf32>
    %17 = vector.broadcast %16 : vector<1x1x32xf32> to vector<1x8x32xf32>
    %18 = arith.addf %14, %17 : vector<1x8x32xf32>
    %19 = arith.truncf %0 : vector<1x8x32xf32> to vector<1x8x32xbf16>
    %c0_22 = arith.constant 0 : index
    %c0_23 = arith.constant 0 : index
    %20 = vector.load %arg10[%c0_22, %c0_23] : memref<32x32xbf16, #tpu.memory_space<vmem>>, vector<32x32xbf16>
    "tpu.trace_start"() <{level = 10 : i32, message = "bsh,hk->bsk"}> : () -> ()
    %cst_24 = arith.constant dense<0.000000e+00> : vector<1x8x32xf32>
    %21 = tpu.matmul %19, %20, %cst_24 {dimension_numbers = #tpu.dot_dimension_numbers<[2], [0], [0, 1], [1], [0, 0, 0, 1, 1, 1], [], []>} : vector<1x8x32xbf16>, vector<32x32xbf16>, vector<1x8x32xf32> -> vector<1x8x32xf32>
    "tpu.trace_stop"() : () -> ()
    %c0_25 = arith.constant 0 : index
    %c0_26 = arith.constant 0 : index
    %22 = vector.load %arg11[%c0_25, %c0_26] : memref<1x32xf32, #tpu.memory_space<vmem>>, vector<1x32xf32>
    %23 = vector.shape_cast %22 : vector<1x32xf32> to vector<1x1x32xf32>
    %24 = vector.broadcast %23 : vector<1x1x32xf32> to vector<1x8x32xf32>
    %25 = arith.addf %21, %24 : vector<1x8x32xf32>
    %26 = arith.truncf %18 : vector<1x8x32xf32> to vector<1x8x32xbf16>
    %27 = vector.extract_strided_slice %4 {offsets = [0, 0], sizes = [1, 32], strides = [1, 1]} : vector<4x32xf32> to vector<1x32xf32>
    %28 = vector.shape_cast %27 : vector<1x32xf32> to vector<1x1x32xf32>
    %29 = vector.broadcast %28 : vector<1x1x32xf32> to vector<1x8x32xf32>
    %30 = arith.mulf %11, %29 : vector<1x8x32xf32>
    %31 = arith.truncf %30 : vector<1x8x32xf32> to vector<1x8x32xbf16>
    "tpu.trace_start"() <{level = 10 : i32, message = "bsh,bth->bst"}> : () -> ()
    %cst_27 = arith.constant dense<0.000000e+00> : vector<1x8x8xf32>
    %32 = tpu.matmul %31, %26, %cst_27 {dimension_numbers = #tpu.dot_dimension_numbers<[2], [2], [1], [1], [0, 0, 0, 1, 1, 1], [0], [0]>} : vector<1x8x32xbf16>, vector<1x8x32xbf16>, vector<1x8x8xf32> -> vector<1x8x8xf32>
    "tpu.trace_stop"() : () -> ()
    %33 = vector.broadcast %2 : vector<1x1x8xf32> to vector<1x8x8xf32>
    %34 = arith.addf %32, %33 : vector<1x8x8xf32>
    %cst_28 = arith.constant dense<0xFF800000> : vector<1x8xf32>
    %35 = vector.multi_reduction <maximumf>, %34, %cst_28 [2] : vector<1x8x8xf32> to vector<1x8xf32>
    %36 = vector.shape_cast %35 : vector<1x8xf32> to vector<1x8x1xf32>
    %37 = vector.broadcast %36 : vector<1x8x1xf32> to vector<1x8x8xf32>
    %38 = arith.subf %34, %37 : vector<1x8x8xf32>
    %39 = math.exp %38 : vector<1x8x8xf32>
    %cst_29 = arith.constant dense<0.000000e+00> : vector<1x8xf32>
    %40 = vector.multi_reduction <add>, %39, %cst_29 [2] : vector<1x8x8xf32> to vector<1x8xf32>
    %41 = vector.shape_cast %40 : vector<1x8xf32> to vector<1x8x1xf32>
    %42 = tpu.reciprocal %41 {approx = true} : vector<1x8x1xf32> -> vector<1x8x1xf32>
    %43 = vector.broadcast %42 : vector<1x8x1xf32> to vector<1x8x8xf32>
    %44 = arith.mulf %39, %43 : vector<1x8x8xf32>
    %45 = arith.truncf %44 : vector<1x8x8xf32> to vector<1x8x8xbf16>
    %46 = vector.shape_cast %27 : vector<1x32xf32> to vector<1x1x32xf32>
    %47 = vector.broadcast %46 : vector<1x1x32xf32> to vector<1x8x32xf32>
    %48 = arith.mulf %25, %47 : vector<1x8x32xf32>
    %49 = arith.truncf %48 : vector<1x8x32xf32> to vector<1x8x32xbf16>
    "tpu.trace_start"() <{level = 10 : i32, message = "bst,bth->bsh"}> : () -> ()
    %cst_30 = arith.constant dense<0.000000e+00> : vector<1x8x32xf32>
    %50 = tpu.matmul %45, %49, %cst_30 {dimension_numbers = #tpu.dot_dimension_numbers<[2], [1], [1], [2], [0, 0, 0, 1, 1, 2], [0], [0]>} : vector<1x8x8xbf16>, vector<1x8x32xbf16>, vector<1x8x32xf32> -> vector<1x8x32xf32>
    "tpu.trace_stop"() : () -> ()
    %51 = vector.extract_strided_slice %4 {offsets = [1, 0], sizes = [1, 32], strides = [1, 1]} : vector<4x32xf32> to vector<1x32xf32>
    %52 = vector.shape_cast %51 : vector<1x32xf32> to vector<1x1x32xf32>
    %53 = vector.broadcast %52 : vector<1x1x32xf32> to vector<1x8x32xf32>
    %54 = arith.mulf %11, %53 : vector<1x8x32xf32>
    %55 = arith.truncf %54 : vector<1x8x32xf32> to vector<1x8x32xbf16>
    "tpu.trace_start"() <{level = 10 : i32, message = "bsh,bth->bst"}> : () -> ()
    %cst_31 = arith.constant dense<0.000000e+00> : vector<1x8x8xf32>
    %56 = tpu.matmul %55, %26, %cst_31 {dimension_numbers = #tpu.dot_dimension_numbers<[2], [2], [1], [1], [0, 0, 0, 1, 1, 1], [0], [0]>} : vector<1x8x32xbf16>, vector<1x8x32xbf16>, vector<1x8x8xf32> -> vector<1x8x8xf32>
    "tpu.trace_stop"() : () -> ()
    %57 = vector.broadcast %2 : vector<1x1x8xf32> to vector<1x8x8xf32>
    %58 = arith.addf %56, %57 : vector<1x8x8xf32>
    %cst_32 = arith.constant dense<0xFF800000> : vector<1x8xf32>
    %59 = vector.multi_reduction <maximumf>, %58, %cst_32 [2] : vector<1x8x8xf32> to vector<1x8xf32>
    %60 = vector.shape_cast %59 : vector<1x8xf32> to vector<1x8x1xf32>
    %61 = vector.broadcast %60 : vector<1x8x1xf32> to vector<1x8x8xf32>
    %62 = arith.subf %58, %61 : vector<1x8x8xf32>
    %63 = math.exp %62 : vector<1x8x8xf32>
    %cst_33 = arith.constant dense<0.000000e+00> : vector<1x8xf32>
    %64 = vector.multi_reduction <add>, %63, %cst_33 [2] : vector<1x8x8xf32> to vector<1x8xf32>
    %65 = vector.shape_cast %64 : vector<1x8xf32> to vector<1x8x1xf32>
    %66 = tpu.reciprocal %65 {approx = true} : vector<1x8x1xf32> -> vector<1x8x1xf32>
    %67 = vector.broadcast %66 : vector<1x8x1xf32> to vector<1x8x8xf32>
    %68 = arith.mulf %63, %67 : vector<1x8x8xf32>
    %69 = arith.truncf %68 : vector<1x8x8xf32> to vector<1x8x8xbf16>
    %70 = vector.shape_cast %51 : vector<1x32xf32> to vector<1x1x32xf32>
    %71 = vector.broadcast %70 : vector<1x1x32xf32> to vector<1x8x32xf32>
    %72 = arith.mulf %25, %71 : vector<1x8x32xf32>
    %73 = arith.truncf %72 : vector<1x8x32xf32> to vector<1x8x32xbf16>
    "tpu.trace_start"() <{level = 10 : i32, message = "bst,bth->bsh"}> : () -> ()
    %cst_34 = arith.constant dense<0.000000e+00> : vector<1x8x32xf32>
    %74 = tpu.matmul %69, %73, %cst_34 {dimension_numbers = #tpu.dot_dimension_numbers<[2], [1], [1], [2], [0, 0, 0, 1, 1, 2], [0], [0]>} : vector<1x8x8xbf16>, vector<1x8x32xbf16>, vector<1x8x32xf32> -> vector<1x8x32xf32>
    "tpu.trace_stop"() : () -> ()
    %75 = arith.addf %50, %74 : vector<1x8x32xf32>
    %76 = vector.extract_strided_slice %4 {offsets = [2, 0], sizes = [1, 32], strides = [1, 1]} : vector<4x32xf32> to vector<1x32xf32>
    %77 = vector.shape_cast %76 : vector<1x32xf32> to vector<1x1x32xf32>
    %78 = vector.broadcast %77 : vector<1x1x32xf32> to vector<1x8x32xf32>
    %79 = arith.mulf %11, %78 : vector<1x8x32xf32>
    %80 = arith.truncf %79 : vector<1x8x32xf32> to vector<1x8x32xbf16>
    "tpu.trace_start"() <{level = 10 : i32, message = "bsh,bth->bst"}> : () -> ()
    %cst_35 = arith.constant dense<0.000000e+00> : vector<1x8x8xf32>
    %81 = tpu.matmul %80, %26, %cst_35 {dimension_numbers = #tpu.dot_dimension_numbers<[2], [2], [1], [1], [0, 0, 0, 1, 1, 1], [0], [0]>} : vector<1x8x32xbf16>, vector<1x8x32xbf16>, vector<1x8x8xf32> -> vector<1x8x8xf32>
    "tpu.trace_stop"() : () -> ()
    %82 = vector.broadcast %2 : vector<1x1x8xf32> to vector<1x8x8xf32>
    %83 = arith.addf %81, %82 : vector<1x8x8xf32>
    %cst_36 = arith.constant dense<0xFF800000> : vector<1x8xf32>
    %84 = vector.multi_reduction <maximumf>, %83, %cst_36 [2] : vector<1x8x8xf32> to vector<1x8xf32>
    %85 = vector.shape_cast %84 : vector<1x8xf32> to vector<1x8x1xf32>
    %86 = vector.broadcast %85 : vector<1x8x1xf32> to vector<1x8x8xf32>
    %87 = arith.subf %83, %86 : vector<1x8x8xf32>
    %88 = math.exp %87 : vector<1x8x8xf32>
    %cst_37 = arith.constant dense<0.000000e+00> : vector<1x8xf32>
    %89 = vector.multi_reduction <add>, %88, %cst_37 [2] : vector<1x8x8xf32> to vector<1x8xf32>
    %90 = vector.shape_cast %89 : vector<1x8xf32> to vector<1x8x1xf32>
    %91 = tpu.reciprocal %90 {approx = true} : vector<1x8x1xf32> -> vector<1x8x1xf32>
    %92 = vector.broadcast %91 : vector<1x8x1xf32> to vector<1x8x8xf32>
    %93 = arith.mulf %88, %92 : vector<1x8x8xf32>
    %94 = arith.truncf %93 : vector<1x8x8xf32> to vector<1x8x8xbf16>
    %95 = vector.shape_cast %76 : vector<1x32xf32> to vector<1x1x32xf32>
    %96 = vector.broadcast %95 : vector<1x1x32xf32> to vector<1x8x32xf32>
    %97 = arith.mulf %25, %96 : vector<1x8x32xf32>
    %98 = arith.truncf %97 : vector<1x8x32xf32> to vector<1x8x32xbf16>
    "tpu.trace_start"() <{level = 10 : i32, message = "bst,bth->bsh"}> : () -> ()
    %cst_38 = arith.constant dense<0.000000e+00> : vector<1x8x32xf32>
    %99 = tpu.matmul %94, %98, %cst_38 {dimension_numbers = #tpu.dot_dimension_numbers<[2], [1], [1], [2], [0, 0, 0, 1, 1, 2], [0], [0]>} : vector<1x8x8xbf16>, vector<1x8x32xbf16>, vector<1x8x32xf32> -> vector<1x8x32xf32>
    "tpu.trace_stop"() : () -> ()
    %100 = arith.addf %75, %99 : vector<1x8x32xf32>
    %101 = vector.extract_strided_slice %4 {offsets = [3, 0], sizes = [1, 32], strides = [1, 1]} : vector<4x32xf32> to vector<1x32xf32>
    %102 = vector.shape_cast %101 : vector<1x32xf32> to vector<1x1x32xf32>
    %103 = vector.broadcast %102 : vector<1x1x32xf32> to vector<1x8x32xf32>
    %104 = arith.mulf %11, %103 : vector<1x8x32xf32>
    %105 = arith.truncf %104 : vector<1x8x32xf32> to vector<1x8x32xbf16>
    "tpu.trace_start"() <{level = 10 : i32, message = "bsh,bth->bst"}> : () -> ()
    %cst_39 = arith.constant dense<0.000000e+00> : vector<1x8x8xf32>
    %106 = tpu.matmul %105, %26, %cst_39 {dimension_numbers = #tpu.dot_dimension_numbers<[2], [2], [1], [1], [0, 0, 0, 1, 1, 1], [0], [0]>} : vector<1x8x32xbf16>, vector<1x8x32xbf16>, vector<1x8x8xf32> -> vector<1x8x8xf32>
    "tpu.trace_stop"() : () -> ()
    %107 = vector.broadcast %2 : vector<1x1x8xf32> to vector<1x8x8xf32>
    %108 = arith.addf %106, %107 : vector<1x8x8xf32>
    %cst_40 = arith.constant dense<0xFF800000> : vector<1x8xf32>
    %109 = vector.multi_reduction <maximumf>, %108, %cst_40 [2] : vector<1x8x8xf32> to vector<1x8xf32>
    %110 = vector.shape_cast %109 : vector<1x8xf32> to vector<1x8x1xf32>
    %111 = vector.broadcast %110 : vector<1x8x1xf32> to vector<1x8x8xf32>
    %112 = arith.subf %108, %111 : vector<1x8x8xf32>
    %113 = math.exp %112 : vector<1x8x8xf32>
    %cst_41 = arith.constant dense<0.000000e+00> : vector<1x8xf32>
    %114 = vector.multi_reduction <add>, %113, %cst_41 [2] : vector<1x8x8xf32> to vector<1x8xf32>
    %115 = vector.shape_cast %114 : vector<1x8xf32> to vector<1x8x1xf32>
    %116 = tpu.reciprocal %115 {approx = true} : vector<1x8x1xf32> -> vector<1x8x1xf32>
    %117 = vector.broadcast %116 : vector<1x8x1xf32> to vector<1x8x8xf32>
    %118 = arith.mulf %113, %117 : vector<1x8x8xf32>
    %119 = arith.truncf %118 : vector<1x8x8xf32> to vector<1x8x8xbf16>
    %120 = vector.shape_cast %101 : vector<1x32xf32> to vector<1x1x32xf32>
    %121 = vector.broadcast %120 : vector<1x1x32xf32> to vector<1x8x32xf32>
    %122 = arith.mulf %25, %121 : vector<1x8x32xf32>
    %123 = arith.truncf %122 : vector<1x8x32xf32> to vector<1x8x32xbf16>
    "tpu.trace_start"() <{level = 10 : i32, message = "bst,bth->bsh"}> : () -> ()
    %cst_42 = arith.constant dense<0.000000e+00> : vector<1x8x32xf32>
    %124 = tpu.matmul %119, %123, %cst_42 {dimension_numbers = #tpu.dot_dimension_numbers<[2], [1], [1], [2], [0, 0, 0, 1, 1, 2], [0], [0]>} : vector<1x8x8xbf16>, vector<1x8x32xbf16>, vector<1x8x32xf32> -> vector<1x8x32xf32>
    "tpu.trace_stop"() : () -> ()
    %125 = arith.addf %100, %124 : vector<1x8x32xf32>
    %126 = arith.truncf %125 : vector<1x8x32xf32> to vector<1x8x32xbf16>
    %c0_43 = arith.constant 0 : index
    %c0_44 = arith.constant 0 : index
    %127 = vector.load %arg12[%c0_43, %c0_44] : memref<32x32xbf16, #tpu.memory_space<vmem>>, vector<32x32xbf16>
    "tpu.trace_start"() <{level = 10 : i32, message = "bsh,hk->bsk"}> : () -> ()
    %cst_45 = arith.constant dense<0.000000e+00> : vector<1x8x32xf32>
    %128 = tpu.matmul %126, %127, %cst_45 {dimension_numbers = #tpu.dot_dimension_numbers<[2], [0], [0, 1], [1], [0, 0, 0, 1, 1, 1], [], []>} : vector<1x8x32xbf16>, vector<32x32xbf16>, vector<1x8x32xf32> -> vector<1x8x32xf32>
    "tpu.trace_stop"() : () -> ()
    %c0_46 = arith.constant 0 : index
    %c0_47 = arith.constant 0 : index
    %129 = vector.load %arg13[%c0_46, %c0_47] : memref<1x32xf32, #tpu.memory_space<vmem>>, vector<1x32xf32>
    %130 = vector.shape_cast %129 : vector<1x32xf32> to vector<1x1x32xf32>
    %131 = vector.broadcast %130 : vector<1x1x32xf32> to vector<1x8x32xf32>
    %132 = arith.addf %128, %131 : vector<1x8x32xf32>
    %133 = arith.addf %132, %0 : vector<1x8x32xf32>
    %c0_48 = arith.constant 0 : index
    %c0_49 = arith.constant 0 : index
    %134 = vector.load %arg14[%c0_48, %c0_49] : memref<1x32xf32, #tpu.memory_space<vmem>>, vector<1x32xf32>
    %c0_50 = arith.constant 0 : index
    %c0_51 = arith.constant 0 : index
    %135 = vector.load %arg15[%c0_50, %c0_51] : memref<1x32xf32, #tpu.memory_space<vmem>>, vector<1x32xf32>
    %cst_52 = arith.constant dense<0.000000e+00> : vector<1x8xf32>
    %136 = vector.multi_reduction <add>, %133, %cst_52 [2] : vector<1x8x32xf32> to vector<1x8xf32>
    %137 = vector.shape_cast %136 : vector<1x8xf32> to vector<1x8x1xf32>
    %cst_53 = arith.constant 3.200000e+01 : f32
    %138 = vector.broadcast %cst_53 : f32 to vector<1x8x1xf32>
    %139 = arith.divf %137, %138 : vector<1x8x1xf32>
    %140 = vector.broadcast %139 : vector<1x8x1xf32> to vector<1x8x32xf32>
    %141 = arith.subf %133, %140 : vector<1x8x32xf32>
    %142 = arith.mulf %141, %141 : vector<1x8x32xf32>
    %cst_54 = arith.constant dense<0.000000e+00> : vector<1x8xf32>
    %143 = vector.multi_reduction <add>, %142, %cst_54 [2] : vector<1x8x32xf32> to vector<1x8xf32>
    %144 = vector.shape_cast %143 : vector<1x8xf32> to vector<1x8x1xf32>
    %cst_55 = arith.constant 3.200000e+01 : f32
    %145 = vector.broadcast %cst_55 : f32 to vector<1x8x1xf32>
    %146 = arith.divf %144, %145 : vector<1x8x1xf32>
    %cst_56 = arith.constant 9.99999996E-13 : f32
    %147 = vector.broadcast %cst_56 : f32 to vector<1x8x1xf32>
    %148 = arith.addf %146, %147 : vector<1x8x1xf32>
    %149 = math.rsqrt %148 : vector<1x8x1xf32>
    %150 = vector.broadcast %149 : vector<1x8x1xf32> to vector<1x8x32xf32>
    %151 = arith.mulf %141, %150 : vector<1x8x32xf32>
    %152 = vector.shape_cast %134 : vector<1x32xf32> to vector<1x1x32xf32>
    %153 = vector.broadcast %152 : vector<1x1x32xf32> to vector<1x8x32xf32>
    %154 = arith.mulf %151, %153 : vector<1x8x32xf32>
    %155 = vector.shape_cast %135 : vector<1x32xf32> to vector<1x1x32xf32>
    %156 = vector.broadcast %155 : vector<1x1x32xf32> to vector<1x8x32xf32>
    %157 = arith.addf %154, %156 : vector<1x8x32xf32>
    %158 = arith.truncf %157 : vector<1x8x32xf32> to vector<1x8x32xbf16>
    %c0_57 = arith.constant 0 : index
    %c0_58 = arith.constant 0 : index
    %159 = vector.load %arg16[%c0_57, %c0_58] : memref<32x32xbf16, #tpu.memory_space<vmem>>, vector<32x32xbf16>
    "tpu.trace_start"() <{level = 10 : i32, message = "bsh,hk->bsk"}> : () -> ()
    %cst_59 = arith.constant dense<0.000000e+00> : vector<1x8x32xf32>
    %160 = tpu.matmul %158, %159, %cst_59 {dimension_numbers = #tpu.dot_dimension_numbers<[2], [0], [0, 1], [1], [0, 0, 0, 1, 1, 1], [], []>} : vector<1x8x32xbf16>, vector<32x32xbf16>, vector<1x8x32xf32> -> vector<1x8x32xf32>
    "tpu.trace_stop"() : () -> ()
    %c0_60 = arith.constant 0 : index
    %c0_61 = arith.constant 0 : index
    %161 = vector.load %arg17[%c0_60, %c0_61] : memref<1x32xf32, #tpu.memory_space<vmem>>, vector<1x32xf32>
    %162 = vector.shape_cast %161 : vector<1x32xf32> to vector<1x1x32xf32>
    %163 = vector.broadcast %162 : vector<1x1x32xf32> to vector<1x8x32xf32>
    %164 = arith.addf %160, %163 : vector<1x8x32xf32>
    %165 = arith.truncf %1 : vector<1x16x32xf32> to vector<1x16x32xbf16>
    %c0_62 = arith.constant 0 : index
    %c0_63 = arith.constant 0 : index
    %166 = vector.load %arg18[%c0_62, %c0_63] : memref<32x32xbf16, #tpu.memory_space<vmem>>, vector<32x32xbf16>
    "tpu.trace_start"() <{level = 10 : i32, message = "bsh,hk->bsk"}> : () -> ()
    %cst_64 = arith.constant dense<0.000000e+00> : vector<1x16x32xf32>
    %167 = tpu.matmul %165, %166, %cst_64 {dimension_numbers = #tpu.dot_dimension_numbers<[2], [0], [0, 1], [1], [0, 0, 0, 1, 1, 1], [], []>} : vector<1x16x32xbf16>, vector<32x32xbf16>, vector<1x16x32xf32> -> vector<1x16x32xf32>
    "tpu.trace_stop"() : () -> ()
    %c0_65 = arith.constant 0 : index
    %c0_66 = arith.constant 0 : index
    %168 = vector.load %arg19[%c0_65, %c0_66] : memref<1x32xf32, #tpu.memory_space<vmem>>, vector<1x32xf32>
    %169 = vector.shape_cast %168 : vector<1x32xf32> to vector<1x1x32xf32>
    %170 = vector.broadcast %169 : vector<1x1x32xf32> to vector<1x16x32xf32>
    %171 = arith.addf %167, %170 : vector<1x16x32xf32>
    %172 = arith.truncf %1 : vector<1x16x32xf32> to vector<1x16x32xbf16>
    %c0_67 = arith.constant 0 : index
    %c0_68 = arith.constant 0 : index
    %173 = vector.load %arg20[%c0_67, %c0_68] : memref<32x32xbf16, #tpu.memory_space<vmem>>, vector<32x32xbf16>
    "tpu.trace_start"() <{level = 10 : i32, message = "bsh,hk->bsk"}> : () -> ()
    %cst_69 = arith.constant dense<0.000000e+00> : vector<1x16x32xf32>
    %174 = tpu.matmul %172, %173, %cst_69 {dimension_numbers = #tpu.dot_dimension_numbers<[2], [0], [0, 1], [1], [0, 0, 0, 1, 1, 1], [], []>} : vector<1x16x32xbf16>, vector<32x32xbf16>, vector<1x16x32xf32> -> vector<1x16x32xf32>
    "tpu.trace_stop"() : () -> ()
    %c0_70 = arith.constant 0 : index
    %c0_71 = arith.constant 0 : index
    %175 = vector.load %arg21[%c0_70, %c0_71] : memref<1x32xf32, #tpu.memory_space<vmem>>, vector<1x32xf32>
    %176 = vector.shape_cast %175 : vector<1x32xf32> to vector<1x1x32xf32>
    %177 = vector.broadcast %176 : vector<1x1x32xf32> to vector<1x16x32xf32>
    %178 = arith.addf %174, %177 : vector<1x16x32xf32>
    %179 = arith.truncf %171 : vector<1x16x32xf32> to vector<1x16x32xbf16>
    %180 = vector.extract_strided_slice %4 {offsets = [0, 0], sizes = [1, 32], strides = [1, 1]} : vector<4x32xf32> to vector<1x32xf32>
    %181 = vector.shape_cast %180 : vector<1x32xf32> to vector<1x1x32xf32>
    %182 = vector.broadcast %181 : vector<1x1x32xf32> to vector<1x8x32xf32>
    %183 = arith.mulf %164, %182 : vector<1x8x32xf32>
    %184 = arith.truncf %183 : vector<1x8x32xf32> to vector<1x8x32xbf16>
    "tpu.trace_start"() <{level = 10 : i32, message = "bsh,bth->bst"}> : () -> ()
    %cst_72 = arith.constant dense<0.000000e+00> : vector<1x8x16xf32>
    %185 = tpu.matmul %184, %179, %cst_72 {dimension_numbers = #tpu.dot_dimension_numbers<[2], [2], [1], [1], [0, 0, 0, 1, 1, 1], [0], [0]>} : vector<1x8x32xbf16>, vector<1x16x32xbf16>, vector<1x8x16xf32> -> vector<1x8x16xf32>
    "tpu.trace_stop"() : () -> ()
    %186 = vector.broadcast %3 : vector<1x1x16xf32> to vector<1x8x16xf32>
    %187 = arith.addf %185, %186 : vector<1x8x16xf32>
    %cst_73 = arith.constant dense<0xFF800000> : vector<1x8xf32>
    %188 = vector.multi_reduction <maximumf>, %187, %cst_73 [2] : vector<1x8x16xf32> to vector<1x8xf32>
    %189 = vector.shape_cast %188 : vector<1x8xf32> to vector<1x8x1xf32>
    %190 = vector.broadcast %189 : vector<1x8x1xf32> to vector<1x8x16xf32>
    %191 = arith.subf %187, %190 : vector<1x8x16xf32>
    %192 = math.exp %191 : vector<1x8x16xf32>
    %cst_74 = arith.constant dense<0.000000e+00> : vector<1x8xf32>
    %193 = vector.multi_reduction <add>, %192, %cst_74 [2] : vector<1x8x16xf32> to vector<1x8xf32>
    %194 = vector.shape_cast %193 : vector<1x8xf32> to vector<1x8x1xf32>
    %195 = tpu.reciprocal %194 {approx = true} : vector<1x8x1xf32> -> vector<1x8x1xf32>
    %196 = vector.broadcast %195 : vector<1x8x1xf32> to vector<1x8x16xf32>
    %197 = arith.mulf %192, %196 : vector<1x8x16xf32>
    %198 = arith.truncf %197 : vector<1x8x16xf32> to vector<1x8x16xbf16>
    %199 = vector.shape_cast %180 : vector<1x32xf32> to vector<1x1x32xf32>
    %200 = vector.broadcast %199 : vector<1x1x32xf32> to vector<1x16x32xf32>
    %201 = arith.mulf %178, %200 : vector<1x16x32xf32>
    %202 = arith.truncf %201 : vector<1x16x32xf32> to vector<1x16x32xbf16>
    "tpu.trace_start"() <{level = 10 : i32, message = "bst,bth->bsh"}> : () -> ()
    %cst_75 = arith.constant dense<0.000000e+00> : vector<1x8x32xf32>
    %203 = tpu.matmul %198, %202, %cst_75 {dimension_numbers = #tpu.dot_dimension_numbers<[2], [1], [1], [2], [0, 0, 0, 1, 1, 2], [0], [0]>} : vector<1x8x16xbf16>, vector<1x16x32xbf16>, vector<1x8x32xf32> -> vector<1x8x32xf32>
    "tpu.trace_stop"() : () -> ()
    %204 = vector.extract_strided_slice %4 {offsets = [1, 0], sizes = [1, 32], strides = [1, 1]} : vector<4x32xf32> to vector<1x32xf32>
    %205 = vector.shape_cast %204 : vector<1x32xf32> to vector<1x1x32xf32>
    %206 = vector.broadcast %205 : vector<1x1x32xf32> to vector<1x8x32xf32>
    %207 = arith.mulf %164, %206 : vector<1x8x32xf32>
    %208 = arith.truncf %207 : vector<1x8x32xf32> to vector<1x8x32xbf16>
    "tpu.trace_start"() <{level = 10 : i32, message = "bsh,bth->bst"}> : () -> ()
    %cst_76 = arith.constant dense<0.000000e+00> : vector<1x8x16xf32>
    %209 = tpu.matmul %208, %179, %cst_76 {dimension_numbers = #tpu.dot_dimension_numbers<[2], [2], [1], [1], [0, 0, 0, 1, 1, 1], [0], [0]>} : vector<1x8x32xbf16>, vector<1x16x32xbf16>, vector<1x8x16xf32> -> vector<1x8x16xf32>
    "tpu.trace_stop"() : () -> ()
    %210 = vector.broadcast %3 : vector<1x1x16xf32> to vector<1x8x16xf32>
    %211 = arith.addf %209, %210 : vector<1x8x16xf32>
    %cst_77 = arith.constant dense<0xFF800000> : vector<1x8xf32>
    %212 = vector.multi_reduction <maximumf>, %211, %cst_77 [2] : vector<1x8x16xf32> to vector<1x8xf32>
    %213 = vector.shape_cast %212 : vector<1x8xf32> to vector<1x8x1xf32>
    %214 = vector.broadcast %213 : vector<1x8x1xf32> to vector<1x8x16xf32>
    %215 = arith.subf %211, %214 : vector<1x8x16xf32>
    %216 = math.exp %215 : vector<1x8x16xf32>
    %cst_78 = arith.constant dense<0.000000e+00> : vector<1x8xf32>
    %217 = vector.multi_reduction <add>, %216, %cst_78 [2] : vector<1x8x16xf32> to vector<1x8xf32>
    %218 = vector.shape_cast %217 : vector<1x8xf32> to vector<1x8x1xf32>
    %219 = tpu.reciprocal %218 {approx = true} : vector<1x8x1xf32> -> vector<1x8x1xf32>
    %220 = vector.broadcast %219 : vector<1x8x1xf32> to vector<1x8x16xf32>
    %221 = arith.mulf %216, %220 : vector<1x8x16xf32>
    %222 = arith.truncf %221 : vector<1x8x16xf32> to vector<1x8x16xbf16>
    %223 = vector.shape_cast %204 : vector<1x32xf32> to vector<1x1x32xf32>
    %224 = vector.broadcast %223 : vector<1x1x32xf32> to vector<1x16x32xf32>
    %225 = arith.mulf %178, %224 : vector<1x16x32xf32>
    %226 = arith.truncf %225 : vector<1x16x32xf32> to vector<1x16x32xbf16>
    "tpu.trace_start"() <{level = 10 : i32, message = "bst,bth->bsh"}> : () -> ()
    %cst_79 = arith.constant dense<0.000000e+00> : vector<1x8x32xf32>
    %227 = tpu.matmul %222, %226, %cst_79 {dimension_numbers = #tpu.dot_dimension_numbers<[2], [1], [1], [2], [0, 0, 0, 1, 1, 2], [0], [0]>} : vector<1x8x16xbf16>, vector<1x16x32xbf16>, vector<1x8x32xf32> -> vector<1x8x32xf32>
    "tpu.trace_stop"() : () -> ()
    %228 = arith.addf %203, %227 : vector<1x8x32xf32>
    %229 = vector.extract_strided_slice %4 {offsets = [2, 0], sizes = [1, 32], strides = [1, 1]} : vector<4x32xf32> to vector<1x32xf32>
    %230 = vector.shape_cast %229 : vector<1x32xf32> to vector<1x1x32xf32>
    %231 = vector.broadcast %230 : vector<1x1x32xf32> to vector<1x8x32xf32>
    %232 = arith.mulf %164, %231 : vector<1x8x32xf32>
    %233 = arith.truncf %232 : vector<1x8x32xf32> to vector<1x8x32xbf16>
    "tpu.trace_start"() <{level = 10 : i32, message = "bsh,bth->bst"}> : () -> ()
    %cst_80 = arith.constant dense<0.000000e+00> : vector<1x8x16xf32>
    %234 = tpu.matmul %233, %179, %cst_80 {dimension_numbers = #tpu.dot_dimension_numbers<[2], [2], [1], [1], [0, 0, 0, 1, 1, 1], [0], [0]>} : vector<1x8x32xbf16>, vector<1x16x32xbf16>, vector<1x8x16xf32> -> vector<1x8x16xf32>
    "tpu.trace_stop"() : () -> ()
    %235 = vector.broadcast %3 : vector<1x1x16xf32> to vector<1x8x16xf32>
    %236 = arith.addf %234, %235 : vector<1x8x16xf32>
    %cst_81 = arith.constant dense<0xFF800000> : vector<1x8xf32>
    %237 = vector.multi_reduction <maximumf>, %236, %cst_81 [2] : vector<1x8x16xf32> to vector<1x8xf32>
    %238 = vector.shape_cast %237 : vector<1x8xf32> to vector<1x8x1xf32>
    %239 = vector.broadcast %238 : vector<1x8x1xf32> to vector<1x8x16xf32>
    %240 = arith.subf %236, %239 : vector<1x8x16xf32>
    %241 = math.exp %240 : vector<1x8x16xf32>
    %cst_82 = arith.constant dense<0.000000e+00> : vector<1x8xf32>
    %242 = vector.multi_reduction <add>, %241, %cst_82 [2] : vector<1x8x16xf32> to vector<1x8xf32>
    %243 = vector.shape_cast %242 : vector<1x8xf32> to vector<1x8x1xf32>
    %244 = tpu.reciprocal %243 {approx = true} : vector<1x8x1xf32> -> vector<1x8x1xf32>
    %245 = vector.broadcast %244 : vector<1x8x1xf32> to vector<1x8x16xf32>
    %246 = arith.mulf %241, %245 : vector<1x8x16xf32>
    %247 = arith.truncf %246 : vector<1x8x16xf32> to vector<1x8x16xbf16>
    %248 = vector.shape_cast %229 : vector<1x32xf32> to vector<1x1x32xf32>
    %249 = vector.broadcast %248 : vector<1x1x32xf32> to vector<1x16x32xf32>
    %250 = arith.mulf %178, %249 : vector<1x16x32xf32>
    %251 = arith.truncf %250 : vector<1x16x32xf32> to vector<1x16x32xbf16>
    "tpu.trace_start"() <{level = 10 : i32, message = "bst,bth->bsh"}> : () -> ()
    %cst_83 = arith.constant dense<0.000000e+00> : vector<1x8x32xf32>
    %252 = tpu.matmul %247, %251, %cst_83 {dimension_numbers = #tpu.dot_dimension_numbers<[2], [1], [1], [2], [0, 0, 0, 1, 1, 2], [0], [0]>} : vector<1x8x16xbf16>, vector<1x16x32xbf16>, vector<1x8x32xf32> -> vector<1x8x32xf32>
    "tpu.trace_stop"() : () -> ()
    %253 = arith.addf %228, %252 : vector<1x8x32xf32>
    %254 = vector.extract_strided_slice %4 {offsets = [3, 0], sizes = [1, 32], strides = [1, 1]} : vector<4x32xf32> to vector<1x32xf32>
    %255 = vector.shape_cast %254 : vector<1x32xf32> to vector<1x1x32xf32>
    %256 = vector.broadcast %255 : vector<1x1x32xf32> to vector<1x8x32xf32>
    %257 = arith.mulf %164, %256 : vector<1x8x32xf32>
    %258 = arith.truncf %257 : vector<1x8x32xf32> to vector<1x8x32xbf16>
    "tpu.trace_start"() <{level = 10 : i32, message = "bsh,bth->bst"}> : () -> ()
    %cst_84 = arith.constant dense<0.000000e+00> : vector<1x8x16xf32>
    %259 = tpu.matmul %258, %179, %cst_84 {dimension_numbers = #tpu.dot_dimension_numbers<[2], [2], [1], [1], [0, 0, 0, 1, 1, 1], [0], [0]>} : vector<1x8x32xbf16>, vector<1x16x32xbf16>, vector<1x8x16xf32> -> vector<1x8x16xf32>
    "tpu.trace_stop"() : () -> ()
    %260 = vector.broadcast %3 : vector<1x1x16xf32> to vector<1x8x16xf32>
    %261 = arith.addf %259, %260 : vector<1x8x16xf32>
    %cst_85 = arith.constant dense<0xFF800000> : vector<1x8xf32>
    %262 = vector.multi_reduction <maximumf>, %261, %cst_85 [2] : vector<1x8x16xf32> to vector<1x8xf32>
    %263 = vector.shape_cast %262 : vector<1x8xf32> to vector<1x8x1xf32>
    %264 = vector.broadcast %263 : vector<1x8x1xf32> to vector<1x8x16xf32>
    %265 = arith.subf %261, %264 : vector<1x8x16xf32>
    %266 = math.exp %265 : vector<1x8x16xf32>
    %cst_86 = arith.constant dense<0.000000e+00> : vector<1x8xf32>
    %267 = vector.multi_reduction <add>, %266, %cst_86 [2] : vector<1x8x16xf32> to vector<1x8xf32>
    %268 = vector.shape_cast %267 : vector<1x8xf32> to vector<1x8x1xf32>
    %269 = tpu.reciprocal %268 {approx = true} : vector<1x8x1xf32> -> vector<1x8x1xf32>
    %270 = vector.broadcast %269 : vector<1x8x1xf32> to vector<1x8x16xf32>
    %271 = arith.mulf %266, %270 : vector<1x8x16xf32>
    %272 = arith.truncf %271 : vector<1x8x16xf32> to vector<1x8x16xbf16>
    %273 = vector.shape_cast %254 : vector<1x32xf32> to vector<1x1x32xf32>
    %274 = vector.broadcast %273 : vector<1x1x32xf32> to vector<1x16x32xf32>
    %275 = arith.mulf %178, %274 : vector<1x16x32xf32>
    %276 = arith.truncf %275 : vector<1x16x32xf32> to vector<1x16x32xbf16>
    "tpu.trace_start"() <{level = 10 : i32, message = "bst,bth->bsh"}> : () -> ()
    %cst_87 = arith.constant dense<0.000000e+00> : vector<1x8x32xf32>
    %277 = tpu.matmul %272, %276, %cst_87 {dimension_numbers = #tpu.dot_dimension_numbers<[2], [1], [1], [2], [0, 0, 0, 1, 1, 2], [0], [0]>} : vector<1x8x16xbf16>, vector<1x16x32xbf16>, vector<1x8x32xf32> -> vector<1x8x32xf32>
    "tpu.trace_stop"() : () -> ()
    %278 = arith.addf %253, %277 : vector<1x8x32xf32>
    %279 = arith.truncf %278 : vector<1x8x32xf32> to vector<1x8x32xbf16>
    %c0_88 = arith.constant 0 : index
    %c0_89 = arith.constant 0 : index
    %280 = vector.load %arg22[%c0_88, %c0_89] : memref<32x32xbf16, #tpu.memory_space<vmem>>, vector<32x32xbf16>
    "tpu.trace_start"() <{level = 10 : i32, message = "bsh,hk->bsk"}> : () -> ()
    %cst_90 = arith.constant dense<0.000000e+00> : vector<1x8x32xf32>
    %281 = tpu.matmul %279, %280, %cst_90 {dimension_numbers = #tpu.dot_dimension_numbers<[2], [0], [0, 1], [1], [0, 0, 0, 1, 1, 1], [], []>} : vector<1x8x32xbf16>, vector<32x32xbf16>, vector<1x8x32xf32> -> vector<1x8x32xf32>
    "tpu.trace_stop"() : () -> ()
    %c0_91 = arith.constant 0 : index
    %c0_92 = arith.constant 0 : index
    %282 = vector.load %arg23[%c0_91, %c0_92] : memref<1x32xf32, #tpu.memory_space<vmem>>, vector<1x32xf32>
    %283 = vector.shape_cast %282 : vector<1x32xf32> to vector<1x1x32xf32>
    %284 = vector.broadcast %283 : vector<1x1x32xf32> to vector<1x8x32xf32>
    %285 = arith.addf %281, %284 : vector<1x8x32xf32>
    %286 = arith.addf %285, %157 : vector<1x8x32xf32>
    %c0_93 = arith.constant 0 : index
    %c0_94 = arith.constant 0 : index
    %287 = vector.load %arg24[%c0_93, %c0_94] : memref<1x32xf32, #tpu.memory_space<vmem>>, vector<1x32xf32>
    %c0_95 = arith.constant 0 : index
    %c0_96 = arith.constant 0 : index
    %288 = vector.load %arg25[%c0_95, %c0_96] : memref<1x32xf32, #tpu.memory_space<vmem>>, vector<1x32xf32>
    %cst_97 = arith.constant dense<0.000000e+00> : vector<1x8xf32>
    %289 = vector.multi_reduction <add>, %286, %cst_97 [2] : vector<1x8x32xf32> to vector<1x8xf32>
    %290 = vector.shape_cast %289 : vector<1x8xf32> to vector<1x8x1xf32>
    %cst_98 = arith.constant 3.200000e+01 : f32
    %291 = vector.broadcast %cst_98 : f32 to vector<1x8x1xf32>
    %292 = arith.divf %290, %291 : vector<1x8x1xf32>
    %293 = vector.broadcast %292 : vector<1x8x1xf32> to vector<1x8x32xf32>
    %294 = arith.subf %286, %293 : vector<1x8x32xf32>
    %295 = arith.mulf %294, %294 : vector<1x8x32xf32>
    %cst_99 = arith.constant dense<0.000000e+00> : vector<1x8xf32>
    %296 = vector.multi_reduction <add>, %295, %cst_99 [2] : vector<1x8x32xf32> to vector<1x8xf32>
    %297 = vector.shape_cast %296 : vector<1x8xf32> to vector<1x8x1xf32>
    %cst_100 = arith.constant 3.200000e+01 : f32
    %298 = vector.broadcast %cst_100 : f32 to vector<1x8x1xf32>
    %299 = arith.divf %297, %298 : vector<1x8x1xf32>
    %cst_101 = arith.constant 9.99999996E-13 : f32
    %300 = vector.broadcast %cst_101 : f32 to vector<1x8x1xf32>
    %301 = arith.addf %299, %300 : vector<1x8x1xf32>
    %302 = math.rsqrt %301 : vector<1x8x1xf32>
    %303 = vector.broadcast %302 : vector<1x8x1xf32> to vector<1x8x32xf32>
    %304 = arith.mulf %294, %303 : vector<1x8x32xf32>
    %305 = vector.shape_cast %287 : vector<1x32xf32> to vector<1x1x32xf32>
    %306 = vector.broadcast %305 : vector<1x1x32xf32> to vector<1x8x32xf32>
    %307 = arith.mulf %304, %306 : vector<1x8x32xf32>
    %308 = vector.shape_cast %288 : vector<1x32xf32> to vector<1x1x32xf32>
    %309 = vector.broadcast %308 : vector<1x1x32xf32> to vector<1x8x32xf32>
    %310 = arith.addf %307, %309 : vector<1x8x32xf32>
    %311 = arith.truncf %310 : vector<1x8x32xf32> to vector<1x8x32xbf16>
    %c0_102 = arith.constant 0 : index
    %c0_103 = arith.constant 0 : index
    %312 = vector.load %arg26[%c0_102, %c0_103] : memref<32x128xbf16, #tpu.memory_space<vmem>>, vector<32x128xbf16>
    "tpu.trace_start"() <{level = 10 : i32, message = "bsh,hk->bsk"}> : () -> ()
    %cst_104 = arith.constant dense<0.000000e+00> : vector<1x8x128xf32>
    %313 = tpu.matmul %311, %312, %cst_104 {dimension_numbers = #tpu.dot_dimension_numbers<[2], [0], [0, 1], [1], [0, 0, 0, 1, 1, 1], [], []>} : vector<1x8x32xbf16>, vector<32x128xbf16>, vector<1x8x128xf32> -> vector<1x8x128xf32>
    "tpu.trace_stop"() : () -> ()
    %c0_105 = arith.constant 0 : index
    %c0_106 = arith.constant 0 : index
    %314 = vector.load %arg27[%c0_105, %c0_106] : memref<1x128xf32, #tpu.memory_space<vmem>>, vector<1x128xf32>
    %315 = vector.shape_cast %314 : vector<1x128xf32> to vector<1x1x128xf32>
    %316 = vector.broadcast %315 : vector<1x1x128xf32> to vector<1x8x128xf32>
    %317 = arith.addf %313, %316 : vector<1x8x128xf32>
    %cst_107 = arith.constant 5.000000e-01 : f32
    %318 = vector.broadcast %cst_107 : f32 to vector<1x8x128xf32>
    %319 = arith.mulf %318, %317 : vector<1x8x128xf32>
    %cst_108 = arith.constant 0.707106769 : f32
    %320 = vector.broadcast %cst_108 : f32 to vector<1x8x128xf32>
    %321 = arith.mulf %317, %320 : vector<1x8x128xf32>
    %cst_109 = arith.constant 0.000000e+00 : f32
    %322 = vector.broadcast %cst_109 : f32 to vector<1x8x128xf32>
    %323 = arith.cmpf olt, %321, %322 : vector<1x8x128xf32>
    %cst_110 = arith.constant -1.000000e+00 : f32
    %cst_111 = arith.constant 1.000000e+00 : f32
    %324 = vector.broadcast %cst_110 : f32 to vector<1x8x128xf32>
    %325 = vector.broadcast %cst_111 : f32 to vector<1x8x128xf32>
    %326 = arith.select %323, %324, %325 : vector<1x8x128xi1>, vector<1x8x128xf32>
    %327 = math.absf %321 : vector<1x8x128xf32>
    %cst_112 = arith.constant 0.327591091 : f32
    %328 = vector.broadcast %cst_112 : f32 to vector<1x8x128xf32>
    %329 = arith.mulf %328, %327 : vector<1x8x128xf32>
    %cst_113 = arith.constant 1.000000e+00 : f32
    %330 = vector.broadcast %cst_113 : f32 to vector<1x8x128xf32>
    %331 = arith.addf %330, %329 : vector<1x8x128xf32>
    %cst_114 = arith.constant 1.000000e+00 : f32
    %332 = vector.broadcast %cst_114 : f32 to vector<1x8x128xf32>
    %333 = arith.divf %332, %331 : vector<1x8x128xf32>
    %cst_115 = arith.constant 1.06140542 : f32
    %334 = vector.broadcast %cst_115 : f32 to vector<1x8x128xf32>
    %335 = arith.mulf %334, %333 : vector<1x8x128xf32>
    %cst_116 = arith.constant -1.45315206 : f32
    %336 = vector.broadcast %cst_116 : f32 to vector<1x8x128xf32>
    %337 = arith.addf %335, %336 : vector<1x8x128xf32>
    %338 = arith.mulf %337, %333 : vector<1x8x128xf32>
    %cst_117 = arith.constant 1.42141378 : f32
    %339 = vector.broadcast %cst_117 : f32 to vector<1x8x128xf32>
    %340 = arith.addf %338, %339 : vector<1x8x128xf32>
    %341 = arith.mulf %340, %333 : vector<1x8x128xf32>
    %cst_118 = arith.constant -0.284496725 : f32
    %342 = vector.broadcast %cst_118 : f32 to vector<1x8x128xf32>
    %343 = arith.addf %341, %342 : vector<1x8x128xf32>
    %344 = arith.mulf %343, %333 : vector<1x8x128xf32>
    %cst_119 = arith.constant 0.254829586 : f32
    %345 = vector.broadcast %cst_119 : f32 to vector<1x8x128xf32>
    %346 = arith.addf %344, %345 : vector<1x8x128xf32>
    %347 = arith.mulf %346, %333 : vector<1x8x128xf32>
    %cst_120 = arith.constant 0.000000e+00 : f32
    %348 = vector.broadcast %cst_120 : f32 to vector<1x8x128xf32>
    %349 = arith.subf %348, %327 : vector<1x8x128xf32>
    %350 = arith.mulf %349, %327 : vector<1x8x128xf32>
    %351 = math.exp %350 : vector<1x8x128xf32>
    %352 = arith.mulf %347, %351 : vector<1x8x128xf32>
    %cst_121 = arith.constant 1.000000e+00 : f32
    %353 = vector.broadcast %cst_121 : f32 to vector<1x8x128xf32>
    %354 = arith.subf %353, %352 : vector<1x8x128xf32>
    %355 = arith.mulf %326, %354 : vector<1x8x128xf32>
    %cst_122 = arith.constant 1.000000e+00 : f32
    %356 = vector.broadcast %cst_122 : f32 to vector<1x8x128xf32>
    %357 = arith.addf %356, %355 : vector<1x8x128xf32>
    %358 = arith.mulf %319, %357 : vector<1x8x128xf32>
    %359 = arith.truncf %358 : vector<1x8x128xf32> to vector<1x8x128xbf16>
    %c0_123 = arith.constant 0 : index
    %c0_124 = arith.constant 0 : index
    %360 = vector.load %arg28[%c0_123, %c0_124] : memref<128x32xbf16, #tpu.memory_space<vmem>>, vector<128x32xbf16>
    "tpu.trace_start"() <{level = 10 : i32, message = "bsh,hk->bsk"}> : () -> ()
    %cst_125 = arith.constant dense<0.000000e+00> : vector<1x8x32xf32>
    %361 = tpu.matmul %359, %360, %cst_125 {dimension_numbers = #tpu.dot_dimension_numbers<[2], [0], [0, 1], [1], [0, 0, 0, 1, 1, 1], [], []>} : vector<1x8x128xbf16>, vector<128x32xbf16>, vector<1x8x32xf32> -> vector<1x8x32xf32>
    "tpu.trace_stop"() : () -> ()
    %c0_126 = arith.constant 0 : index
    %c0_127 = arith.constant 0 : index
    %362 = vector.load %arg29[%c0_126, %c0_127] : memref<1x32xf32, #tpu.memory_space<vmem>>, vector<1x32xf32>
    %363 = vector.shape_cast %362 : vector<1x32xf32> to vector<1x1x32xf32>
    %364 = vector.broadcast %363 : vector<1x1x32xf32> to vector<1x8x32xf32>
    %365 = arith.addf %361, %364 : vector<1x8x32xf32>
    %366 = arith.addf %365, %310 : vector<1x8x32xf32>
    %c0_128 = arith.constant 0 : index
    %c0_129 = arith.constant 0 : index
    %367 = vector.load %arg30[%c0_128, %c0_129] : memref<1x32xf32, #tpu.memory_space<vmem>>, vector<1x32xf32>
    %c0_130 = arith.constant 0 : index
    %c0_131 = arith.constant 0 : index
    %368 = vector.load %arg31[%c0_130, %c0_131] : memref<1x32xf32, #tpu.memory_space<vmem>>, vector<1x32xf32>
    %cst_132 = arith.constant dense<0.000000e+00> : vector<1x8xf32>
    %369 = vector.multi_reduction <add>, %366, %cst_132 [2] : vector<1x8x32xf32> to vector<1x8xf32>
    %370 = vector.shape_cast %369 : vector<1x8xf32> to vector<1x8x1xf32>
    %cst_133 = arith.constant 3.200000e+01 : f32
    %371 = vector.broadcast %cst_133 : f32 to vector<1x8x1xf32>
    %372 = arith.divf %370, %371 : vector<1x8x1xf32>
    %373 = vector.broadcast %372 : vector<1x8x1xf32> to vector<1x8x32xf32>
    %374 = arith.subf %366, %373 : vector<1x8x32xf32>
    %375 = arith.mulf %374, %374 : vector<1x8x32xf32>
    %cst_134 = arith.constant dense<0.000000e+00> : vector<1x8xf32>
    %376 = vector.multi_reduction <add>, %375, %cst_134 [2] : vector<1x8x32xf32> to vector<1x8xf32>
    %377 = vector.shape_cast %376 : vector<1x8xf32> to vector<1x8x1xf32>
    %cst_135 = arith.constant 3.200000e+01 : f32
    %378 = vector.broadcast %cst_135 : f32 to vector<1x8x1xf32>
    %379 = arith.divf %377, %378 : vector<1x8x1xf32>
    %cst_136 = arith.constant 9.99999996E-13 : f32
    %380 = vector.broadcast %cst_136 : f32 to vector<1x8x1xf32>
    %381 = arith.addf %379, %380 : vector<1x8x1xf32>
    %382 = math.rsqrt %381 : vector<1x8x1xf32>
    %383 = vector.broadcast %382 : vector<1x8x1xf32> to vector<1x8x32xf32>
    %384 = arith.mulf %374, %383 : vector<1x8x32xf32>
    %385 = vector.shape_cast %367 : vector<1x32xf32> to vector<1x1x32xf32>
    %386 = vector.broadcast %385 : vector<1x1x32xf32> to vector<1x8x32xf32>
    %387 = arith.mulf %384, %386 : vector<1x8x32xf32>
    %388 = vector.shape_cast %368 : vector<1x32xf32> to vector<1x1x32xf32>
    %389 = vector.broadcast %388 : vector<1x1x32xf32> to vector<1x8x32xf32>
    %390 = arith.addf %387, %389 : vector<1x8x32xf32>
    %c0_137 = arith.constant 0 : index
    %c0_138 = arith.constant 0 : index
    %c0_139 = arith.constant 0 : index
    %391 = vector.load %arg32[%c0_137, %c0_138, %c0_139] : memref<1x8x32xf32, #tpu.memory_space<vmem>>, vector<1x8x32xf32>
    tpu.vector_store %arg32[%c0_137, %c0_138, %c0_139], %390 {strides = array<i32>} : memref<1x8x32xf32, #tpu.memory_space<vmem>>, vector<1x8x32xf32>,
    return
  }
  func.func @transform_0(%arg0: i32) -> (i32, i32, i32) {
    %c0_i32 = arith.constant 0 : i32
    %c0_i32_0 = arith.constant 0 : i32
    %c0_i32_1 = arith.constant 0 : i32
    return %arg0, %c0_i32, %c0_i32_0 : i32, i32, i32
  }
  func.func @transform_1(%arg0: i32) -> (i32, i32, i32) {
    %c0_i32 = arith.constant 0 : i32
    %c0_i32_0 = arith.constant 0 : i32
    %c0_i32_1 = arith.constant 0 : i32
    return %arg0, %c0_i32, %c0_i32_0 : i32, i32, i32
  }
  func.func @transform_2(%arg0: i32) -> (i32, i32, i32) {
    %c0_i32 = arith.constant 0 : i32
    %c0_i32_0 = arith.constant 0 : i32
    %c0_i32_1 = arith.constant 0 : i32
    return %arg0, %c0_i32, %c0_i32_0 : i32, i32, i32
  }
  func.func @transform_3(%arg0: i32) -> (i32, i32, i32) {
    %c0_i32 = arith.constant 0 : i32
    %c0_i32_0 = arith.constant 0 : i32
    %c0_i32_1 = arith.constant 0 : i32
    return %arg0, %c0_i32, %c0_i32_0 : i32, i32, i32
  }
  func.func @transform_4(%arg0: i32) -> (i32, i32) {
    %c0_i32 = arith.constant 0 : i32
    %c0_i32_0 = arith.constant 0 : i32
    %c0_i32_1 = arith.constant 0 : i32
    return %c0_i32, %c0_i32_0 : i32, i32
  }
  func.func @transform_5(%arg0: i32) -> (i32, i32) {
    %c0_i32 = arith.constant 0 : i32
    %c0_i32_0 = arith.constant 0 : i32
    %c0_i32_1 = arith.constant 0 : i32
    return %c0_i32, %c0_i32_0 : i32, i32
  }
  func.func @transform_6(%arg0: i32) -> (i32, i32) {
    %c0_i32 = arith.constant 0 : i32
    %c0_i32_0 = arith.constant 0 : i32
    %c0_i32_1 = arith.constant 0 : i32
    return %c0_i32, %c0_i32_0 : i32, i32
  }
  func.func @transform_7(%arg0: i32) -> (i32, i32) {
    %c0_i32 = arith.constant 0 : i32
    %c0_i32_0 = arith.constant 0 : i32
    %c0_i32_1 = arith.constant 0 : i32
    return %c0_i32, %c0_i32_0 : i32, i32
  }
  func.func @transform_8(%arg0: i32) -> (i32, i32) {
    %c0_i32 = arith.constant 0 : i32
    %c0_i32_0 = arith.constant 0 : i32
    %c0_i32_1 = arith.constant 0 : i32
    return %c0_i32, %c0_i32_0 : i32, i32
  }
  func.func @transform_9(%arg0: i32) -> (i32, i32) {
    %c0_i32 = arith.constant 0 : i32
    %c0_i32_0 = arith.constant 0 : i32
    %c0_i32_1 = arith.constant 0 : i32
    return %c0_i32, %c0_i32_0 : i32, i32
  }
  func.func @transform_10(%arg0: i32) -> (i32, i32) {
    %c0_i32 = arith.constant 0 : i32
    %c0_i32_0 = arith.constant 0 : i32
    %c0_i32_1 = arith.constant 0 : i32
    return %c0_i32, %c0_i32_0 : i32, i32
  }
  func.func @transform_11(%arg0: i32) -> (i32, i32) {
    %c0_i32 = arith.constant 0 : i32
    %c0_i32_0 = arith.constant 0 : i32
    %c0_i32_1 = arith.constant 0 : i32
    return %c0_i32, %c0_i32_0 : i32, i32
  }
  func.func @transform_12(%arg0: i32) -> (i32, i32) {
    %c0_i32 = arith.constant 0 : i32
    %c0_i32_0 = arith.constant 0 : i32
    %c0_i32_1 = arith.constant 0 : i32
    return %c0_i32, %c0_i32_0 : i32, i32
  }
  func.func @transform_13(%arg0: i32) -> (i32, i32) {
    %c0_i32 = arith.constant 0 : i32
    %c0_i32_0 = arith.constant 0 : i32
    %c0_i32_1 = arith.constant 0 : i32
    return %c0_i32, %c0_i32_0 : i32, i32
  }
  func.func @transform_14(%arg0: i32) -> (i32, i32) {
    %c0_i32 = arith.constant 0 : i32
    %c0_i32_0 = arith.constant 0 : i32
    %c0_i32_1 = arith.constant 0 : i32
    return %c0_i32, %c0_i32_0 : i32, i32
  }
  func.func @transform_15(%arg0: i32) -> (i32, i32) {
    %c0_i32 = arith.constant 0 : i32
    %c0_i32_0 = arith.constant 0 : i32
    %c0_i32_1 = arith.constant 0 : i32
    return %c0_i32, %c0_i32_0 : i32, i32
  }
  func.func @transform_16(%arg0: i32) -> (i32, i32) {
    %c0_i32 = arith.constant 0 : i32
    %c0_i32_0 = arith.constant 0 : i32
    %c0_i32_1 = arith.constant 0 : i32
    return %c0_i32, %c0_i32_0 : i32, i32
  }
  func.func @transform_17(%arg0: i32) -> (i32, i32) {
    %c0_i32 = arith.constant 0 : i32
    %c0_i32_0 = arith.constant 0 : i32
    %c0_i32_1 = arith.constant 0 : i32
    return %c0_i32, %c0_i32_0 : i32, i32
  }
  func.func @transform_18(%arg0: i32) -> (i32, i32) {
    %c0_i32 = arith.constant 0 : i32
    %c0_i32_0 = arith.constant 0 : i32
    %c0_i32_1 = arith.constant 0 : i32
    return %c0_i32, %c0_i32_0 : i32, i32
  }
  func.func @transform_19(%arg0: i32) -> (i32, i32) {
    %c0_i32 = arith.constant 0 : i32
    %c0_i32_0 = arith.constant 0 : i32
    %c0_i32_1 = arith.constant 0 : i32
    return %c0_i32, %c0_i32_0 : i32, i32
  }
  func.func @transform_20(%arg0: i32) -> (i32, i32) {
    %c0_i32 = arith.constant 0 : i32
    %c0_i32_0 = arith.constant 0 : i32
    %c0_i32_1 = arith.constant 0 : i32
    return %c0_i32, %c0_i32_0 : i32, i32
  }
  func.func @transform_21(%arg0: i32) -> (i32, i32) {
    %c0_i32 = arith.constant 0 : i32
    %c0_i32_0 = arith.constant 0 : i32
    %c0_i32_1 = arith.constant 0 : i32
    return %c0_i32, %c0_i32_0 : i32, i32
  }
  func.func @transform_22(%arg0: i32) -> (i32, i32) {
    %c0_i32 = arith.constant 0 : i32
    %c0_i32_0 = arith.constant 0 : i32
    %c0_i32_1 = arith.constant 0 : i32
    return %c0_i32, %c0_i32_0 : i32, i32
  }
  func.func @transform_23(%arg0: i32) -> (i32, i32) {
    %c0_i32 = arith.constant 0 : i32
    %c0_i32_0 = arith.constant 0 : i32
    %c0_i32_1 = arith.constant 0 : i32
    return %c0_i32, %c0_i32_0 : i32, i32
  }
  func.func @transform_24(%arg0: i32) -> (i32, i32) {
    %c0_i32 = arith.constant 0 : i32
    %c0_i32_0 = arith.constant 0 : i32
    %c0_i32_1 = arith.constant 0 : i32
    return %c0_i32, %c0_i32_0 : i32, i32
  }
  func.func @transform_25(%arg0: i32) -> (i32, i32) {
    %c0_i32 = arith.constant 0 : i32
    %c0_i32_0 = arith.constant 0 : i32
    %c0_i32_1 = arith.constant 0 : i32
    return %c0_i32, %c0_i32_0 : i32, i32
  }
  func.func @transform_26(%arg0: i32) -> (i32, i32) {
    %c0_i32 = arith.constant 0 : i32
    %c0_i32_0 = arith.constant 0 : i32
    %c0_i32_1 = arith.constant 0 : i32
    return %c0_i32, %c0_i32_0 : i32, i32
  }
  func.func @transform_27(%arg0: i32) -> (i32, i32) {
    %c0_i32 = arith.constant 0 : i32
    %c0_i32_0 = arith.constant 0 : i32
    %c0_i32_1 = arith.constant 0 : i32
    return %c0_i32, %c0_i32_0 : i32, i32
  }
  func.func @transform_28(%arg0: i32) -> (i32, i32) {
    %c0_i32 = arith.constant 0 : i32
    %c0_i32_0 = arith.constant 0 : i32
    %c0_i32_1 = arith.constant 0 : i32
    return %c0_i32, %c0_i32_0 : i32, i32
  }
  func.func @transform_29(%arg0: i32) -> (i32, i32) {
    %c0_i32 = arith.constant 0 : i32
    %c0_i32_0 = arith.constant 0 : i32
    %c0_i32_1 = arith.constant 0 : i32
    return %c0_i32, %c0_i32_0 : i32, i32
  }
  func.func @transform_30(%arg0: i32) -> (i32, i32) {
    %c0_i32 = arith.constant 0 : i32
    %c0_i32_0 = arith.constant 0 : i32
    %c0_i32_1 = arith.constant 0 : i32
    return %c0_i32, %c0_i32_0 : i32, i32
  }
  func.func @transform_31(%arg0: i32) -> (i32, i32, i32) {
    %c0_i32 = arith.constant 0 : i32
    %c0_i32_0 = arith.constant 0 : i32
    %c0_i32_1 = arith.constant 0 : i32
    return %arg0, %c0_i32, %c0_i32_0 : i32, i32, i32
  }
}

</mosaic_0001>

<llo_original>
// kernel: tpu_custom_call.1
$region0: #{tpu_custom_call.1}
  #allocation0 [shape = 'u32[]', space=smem, size = 0x4, offset = 0x4, fixed_abs, tag = 'smem constant byte address 0x4 - core index']
  #allocation1 [shape = 'u32[144,128]{1,0:T(1,128)}', space=vmem, size = 0x12000, scoped, tag = 'internal scratch']
  %s0 = inlined_call_operand.smem [shape: u32[32], index: -1, kind: input, shape index: {}]
  %s1 = sld [smem:[%s0]]
  %s2 = scalar_lea.smem %s0, 1
  %s3 = sld [smem:[%s2]]
  %s4 = scalar_lea.smem %s0, 2
  %s5 = sld [smem:[%s4]]
  %s6 = scalar_lea.smem %s0, 3
  %s7 = sld [smem:[%s6]]
  %s8 = scalar_lea.smem %s0, 4
  %s9 = sld [smem:[%s8]]
  %s10 = scalar_lea.smem %s0, 5
  %s11 = sld [smem:[%s10]]
  %s12 = scalar_lea.smem %s0, 6
  %s13 = sld [smem:[%s12]]
  %s14 = scalar_lea.smem %s0, 7
  %s15 = sld [smem:[%s14]]
  %s16 = scalar_lea.smem %s0, 8
  %s17 = sld [smem:[%s16]]
  %s18 = scalar_lea.smem %s0, 9
  %s19 = sld [smem:[%s18]]
  %s20 = scalar_lea.smem %s0, 10
  %s21 = sld [smem:[%s20]]
  %s22 = scalar_lea.smem %s0, 11
  %s23 = sld [smem:[%s22]]
  %s24 = scalar_lea.smem %s0, 12
  %s25 = sld [smem:[%s24]]
  %s26 = scalar_lea.smem %s0, 13
  %s27 = sld [smem:[%s26]]
  %s28 = scalar_lea.smem %s0, 14
  %s29 = sld [smem:[%s28]]
  %s30 = scalar_lea.smem %s0, 15
  %s31 = sld [smem:[%s30]]
  %s32 = scalar_lea.smem %s0, 16
  %s33 = sld [smem:[%s32]]
  %s34 = scalar_lea.smem %s0, 17
  %s35 = sld [smem:[%s34]]
  %s36 = scalar_lea.smem %s0, 18
  %s37 = sld [smem:[%s36]]
  %s38 = scalar_lea.smem %s0, 19
  %s39 = sld [smem:[%s38]]
  %s40 = scalar_lea.smem %s0, 20
  %s41 = sld [smem:[%s40]]
  %s42 = scalar_lea.smem %s0, 21
  %s43 = sld [smem:[%s42]]
  %s44 = scalar_lea.smem %s0, 22
  %s45 = sld [smem:[%s44]]
  %s46 = scalar_lea.smem %s0, 23
  %s47 = sld [smem:[%s46]]
  %s48 = scalar_lea.smem %s0, 24
  %s49 = sld [smem:[%s48]]
  %s50 = scalar_lea.smem %s0, 25
  %s51 = sld [smem:[%s50]]
  %s52 = scalar_lea.smem %s0, 26
  %s53 = sld [smem:[%s52]]
  %s54 = scalar_lea.smem %s0, 27
  %s55 = sld [smem:[%s54]]
  %s56 = scalar_lea.smem %s0, 28
  %s57 = sld [smem:[%s56]]
  %s58 = scalar_lea.smem %s0, 29
  %s59 = sld [smem:[%s58]]
  %s60 = scalar_lea.smem %s0, 30
  %s61 = sld [smem:[%s60]]
  %s62 = scalar_lea.smem %s0, 31
  %s63 = sld [smem:[%s62]]
  %s64 = sld [smem:[#allocation0]]
  $region209: #{tpu_custom_call.1} parent=0
    _
  %s66 = ssub.s32 1, %s64
  %s67 = scalar_select 0, %s66, %s64
  $region1: #{tpu_custom_call.1} parent=0
    #allocation2 [shape = 'u8[1024]{0}', space=vmem, size = 0x400, scoped, tag = 'input window, operand 2']
    #allocation3 [shape = 's32[2]{0}', space=sflag, size = 0x8, scoped, tag = 'scoped memory for tpu_custom_call.1']
    #allocation4 [shape = 's32[2]{0}', space=sflag, size = 0x8, scoped, tag = 'scoped memory for tpu_custom_call.1']
    #allocation5 [shape = 'u8[1024]{0}', space=vmem, size = 0x400, scoped, tag = 'input window, operand 3']
    #allocation6 [shape = 's32[2]{0}', space=sflag, size = 0x8, scoped, tag = 'scoped memory for tpu_custom_call.1']
    #allocation7 [shape = 'u8[2048]{0}', space=vmem, size = 0x800, scoped, tag = 'input window, operand 4, single buffered']
    #allocation8 [shape = 'u8[512]{0}', space=vmem, size = 0x400, scoped, tag = 'input window, operand 6, single buffered']
    #allocation9 [shape = 's32[1]{0}', space=sflag, size = 0x4, scoped, tag = 'scoped memory for tpu_custom_call.1']
    #allocation10 [shape = 'u8[512]{0}', space=vmem, size = 0x400, scoped, tag = 'input window, operand 8, single buffered']
    #allocation11 [shape = 'u8[512]{0}', space=vmem, size = 0x400, scoped, tag = 'input window, operand 10, single buffered']
    #allocation12 [shape = 's32[1]{0}', space=sflag, size = 0x4, scoped, tag = 'scoped memory for tpu_custom_call.1']
    #allocation13 [shape = 'u8[8192]{0}', space=vmem, size = 0x2000, scoped, tag = 'input window, operand 11, single buffered']
    #allocation14 [shape = 'u8[512]{0}', space=vmem, size = 0x400, scoped, tag = 'input window, operand 12, single buffered']
    #allocation15 [shape = 's32[1]{0}', space=sflag, size = 0x4, scoped, tag = 'scoped memory for tpu_custom_call.1']
    #allocation16 [shape = 'u8[512]{0}', space=vmem, size = 0x400, scoped, tag = 'input window, operand 13, single buffered']
    #allocation17 [shape = 'u8[512]{0}', space=vmem, size = 0x400, scoped, tag = 'input window, operand 14, single buffered']
    #allocation18 [shape = 's32[1]{0}', space=sflag, size = 0x4, scoped, tag = 'scoped memory for tpu_custom_call.1']
    #allocation19 [shape = 'u8[512]{0}', space=vmem, size = 0x400, scoped, tag = 'input window, operand 16, single buffered']
    #allocation20 [shape = 'u8[8192]{0}', space=vmem, size = 0x2000, scoped, tag = 'input window, operand 19, single buffered']
    #allocation21 [shape = 's32[1]{0}', space=sflag, size = 0x4, scoped, tag = 'scoped memory for tpu_custom_call.1']
    #allocation22 [shape = 'u8[8192]{0}', space=vmem, size = 0x2000, scoped, tag = 'input window, operand 21, single buffered']
    #allocation23 [shape = 'u8[8192]{0}', space=vmem, size = 0x2000, scoped, tag = 'output window, operand 0']
    %68 = vsyncpa [#allocation3], 0
    %s69 = scalar_lea.sflag [#allocation3], 1
    %70 = vsyncpa %s69, 0
    %71 = vsyncpa [#allocation6], 0
    %s72 = scalar_lea.sflag [#allocation6], 1
    %73 = vsyncpa %s72, 0
    %74 = vsyncpa [#allocation9], 0
    %75 = vsyncpa [#allocation12], 0
    %76 = vsyncpa [#allocation15], 0
    %77 = vsyncpa [#allocation18], 0
    %78 = vsyncpa [#allocation21], 0
    %79 = vsyncpa [#allocation4], 0
    %s80 = scalar_lea.sflag [#allocation4], 1
    %81 = vsyncpa %s80, 0
    loop: start=0, step=1, limit=4
    $region2: #{tpu_custom_call.1} parent=1 // loop_pre_header
      _
    $region3: #{tpu_custom_call.1} parent=1 // loop_header
      %s83 = sphi 0, %s87
      %p84 = scmp.ge.s32.totalorder %s83, 4
      %s93 = sphi 0, %s95
      %s96 = sphi 0, %s93
      %s97 = sphi 0, %s96
      %s113 = sphi 0, %s97
      %s119 = sphi 0, %s121
      %s122 = sphi 0, %s119
      %s123 = sphi 0, %s122
      %s139 = sphi 0, %s123
      %s145 = sphi 0, %s147
      %s148 = sphi 0, %s145
      %s149 = sphi 0, %s148
      %s165 = sphi 0, %s149
      %s171 = sphi 0, %s173
      %s174 = sphi 0, %s171
      %s175 = sphi 0, %s174
      %s191 = sphi 0, %s175
      %s195 = sphi 0, %s195
      %s197 = sphi 0, %s195
      %s198 = sphi 0, %s197
      %s212 = sphi 0, %s198
      %s216 = sphi 0, %s216
      %s218 = sphi 0, %s216
      %s219 = sphi 0, %s218
      %s233 = sphi 0, %s219
      %s237 = sphi 0, %s237
      %s239 = sphi 0, %s237
      %s240 = sphi 0, %s239
      %s254 = sphi 0, %s240
      %s258 = sphi 0, %s258
      %s260 = sphi 0, %s258
      %s261 = sphi 0, %s260
      %s275 = sphi 0, %s261
      %s279 = sphi 0, %s279
      %s281 = sphi 0, %s279
      %s282 = sphi 0, %s281
      %s296 = sphi 0, %s282
      %s300 = sphi 0, %s300
      %s302 = sphi 0, %s300
      %s303 = sphi 0, %s302
      %s317 = sphi 0, %s303
      %s321 = sphi 0, %s321
      %s323 = sphi 0, %s321
      %s324 = sphi 0, %s323
      %s338 = sphi 0, %s324
      %s342 = sphi 0, %s342
      %s344 = sphi 0, %s342
      %s345 = sphi 0, %s344
      %s359 = sphi 0, %s345
      %s363 = sphi 0, %s363
      %s365 = sphi 0, %s363
      %s366 = sphi 0, %s365
      %s380 = sphi 0, %s366
      %s384 = sphi 0, %s384
      %s386 = sphi 0, %s384
      %s387 = sphi 0, %s386
      %s401 = sphi 0, %s387
      %s405 = sphi 0, %s405
      %s407 = sphi 0, %s405
      %s408 = sphi 0, %s407
      %s422 = sphi 0, %s408
      %s426 = sphi 0, %s426
      %s428 = sphi 0, %s426
      %s429 = sphi 0, %s428
      %s443 = sphi 0, %s429
      %s447 = sphi 0, %s447
      %s449 = sphi 0, %s447
      %s450 = sphi 0, %s449
      %s464 = sphi 0, %s450
      %s468 = sphi 0, %s468
      %s470 = sphi 0, %s468
      %s471 = sphi 0, %s470
      %s485 = sphi 0, %s471
      %s489 = sphi 0, %s489
      %s491 = sphi 0, %s489
      %s492 = sphi 0, %s491
      %s506 = sphi 0, %s492
      %s510 = sphi 0, %s510
      %s512 = sphi 0, %s510
      %s513 = sphi 0, %s512
      %s527 = sphi 0, %s513
      %s531 = sphi 0, %s531
      %s533 = sphi 0, %s531
      %s534 = sphi 0, %s533
      %s548 = sphi 0, %s534
      %s552 = sphi 0, %s552
      %s554 = sphi 0, %s552
      %s555 = sphi 0, %s554
      %s569 = sphi 0, %s555
      %s573 = sphi 0, %s573
      %s575 = sphi 0, %s573
      %s576 = sphi 0, %s575
      %s590 = sphi 0, %s576
      %s594 = sphi 0, %s594
      %s596 = sphi 0, %s594
      %s597 = sphi 0, %s596
      %s611 = sphi 0, %s597
      %s615 = sphi 0, %s615
      %s617 = sphi 0, %s615
      %s618 = sphi 0, %s617
      %s632 = sphi 0, %s618
      %s636 = sphi 0, %s636
      %s638 = sphi 0, %s636
      %s639 = sphi 0, %s638
      %s653 = sphi 0, %s639
      %s657 = sphi 0, %s657
      %s659 = sphi 0, %s657
      %s660 = sphi 0, %s659
      %s674 = sphi 0, %s660
      %s678 = sphi 0, %s678
      %s680 = sphi 0, %s678
      %s681 = sphi 0, %s680
      %s695 = sphi 0, %s681
      %s699 = sphi 0, %s699
      %s701 = sphi 0, %s699
      %s702 = sphi 0, %s701
      %s716 = sphi 0, %s702
      %s720 = sphi 0, %s720
      %s722 = sphi 0, %s720
      %s723 = sphi 0, %s722
      %s737 = sphi 0, %s723
      %s741 = sphi 0, %s741
      %s743 = sphi 0, %s741
      %s744 = sphi 0, %s743
      %s758 = sphi 0, %s744
      %s764 = sphi 0, %s766
      %s767 = sphi 0, %s764
      %s768 = sphi 0, %s767
      %s784 = sphi 0, %s768
    $region4: #{tpu_custom_call.1} parent=1 // loop_header_branch
      %86 = sbr.rel (%p84) target = $region8
    $region5: #{tpu_custom_call.1} parent=1 // loop_body
      %s88 = ssub.s32 %s83, 1
      %s89 = ssub.s32 %s83, 2
      %s90 = sadd.s32 %s83, 1
      %s91 = ssub.s32 %s83, %s90
      %p92 = scmp.eq.s32.totalorder %s91, 0
      %s94 = sadd.s32 %s93, 1
      %s95 = scalar_select %p92, %s93, %s94
      %p98 = pneg %p92
      %p99 = scmp.eq.s32.totalorder %s83, 1
      %p100 = por %p98, %p99
      %p101 = scmp.ne.s32.totalorder %s93, %s96
      %p102 = scmp.eq.s32.totalorder %s83, 0
      %p103 = por %p101, %p102
      %p104 = scmp.ne.s32.totalorder %s93, %s96
      %p105 = scmp.eq.s32.totalorder %s88, 1
      %p106 = por %p104, %p105
      %p107 = scmp.ne.s32.totalorder %s96, %s97
      %p108 = scmp.eq.s32.totalorder %s88, 0
      %p109 = por %p107, %p108
      %p110 = scmp.ne.s32.totalorder %s96, %s97
      %p111 = scmp.eq.s32.totalorder %s89, 1
      %p112 = por %p110, %p111
      %p114 = scmp.ne.s32.totalorder %s97, %s113
      %p115 = scmp.eq.s32.totalorder %s89, 0
      %p116 = por %p114, %p115
      %s117 = ssub.s32 %s83, %s90
      %p118 = scmp.eq.s32.totalorder %s117, 0
      %s120 = sadd.s32 %s119, 1
      %s121 = scalar_select %p118, %s119, %s120
      %p124 = pneg %p118
      %p125 = scmp.eq.s32.totalorder %s83, 1
      %p126 = por %p124, %p125
      %p127 = scmp.ne.s32.totalorder %s119, %s122
      %p128 = scmp.eq.s32.totalorder %s83, 0
      %p129 = por %p127, %p128
      %p130 = scmp.ne.s32.totalorder %s119, %s122
      %p131 = scmp.eq.s32.totalorder %s88, 1
      %p132 = por %p130, %p131
      %p133 = scmp.ne.s32.totalorder %s122, %s123
      %p134 = scmp.eq.s32.totalorder %s88, 0
      %p135 = por %p133, %p134
      %p136 = scmp.ne.s32.totalorder %s122, %s123
      %p137 = scmp.eq.s32.totalorder %s89, 1
      %p138 = por %p136, %p137
      %p140 = scmp.ne.s32.totalorder %s123, %s139
      %p141 = scmp.eq.s32.totalorder %s89, 0
      %p142 = por %p140, %p141
      %s143 = ssub.s32 %s83, %s90
      %p144 = scmp.eq.s32.totalorder %s143, 0
      %s146 = sadd.s32 %s145, 1
      %s147 = scalar_select %p144, %s145, %s146
      %p150 = pneg %p144
      %p151 = scmp.eq.s32.totalorder %s83, 1
      %p152 = por %p150, %p151
      %p153 = scmp.ne.s32.totalorder %s145, %s148
      %p154 = scmp.eq.s32.totalorder %s83, 0
      %p155 = por %p153, %p154
      %p156 = scmp.ne.s32.totalorder %s145, %s148
      %p157 = scmp.eq.s32.totalorder %s88, 1
      %p158 = por %p156, %p157
      %p159 = scmp.ne.s32.totalorder %s148, %s149
      %p160 = scmp.eq.s32.totalorder %s88, 0
      %p161 = por %p159, %p160
      %p162 = scmp.ne.s32.totalorder %s148, %s149
      %p163 = scmp.eq.s32.totalorder %s89, 1
      %p164 = por %p162, %p163
      %p166 = scmp.ne.s32.totalorder %s149, %s165
      %p167 = scmp.eq.s32.totalorder %s89, 0
      %p168 = por %p166, %p167
      %s169 = ssub.s32 %s83, %s90
      %p170 = scmp.eq.s32.totalorder %s169, 0
      %s172 = sadd.s32 %s171, 1
      %s173 = scalar_select %p170, %s171, %s172
      %p176 = pneg %p170
      %p177 = scmp.eq.s32.totalorder %s83, 1
      %p178 = por %p176, %p177
      %p179 = scmp.ne.s32.totalorder %s171, %s174
      %p180 = scmp.eq.s32.totalorder %s83, 0
      %p181 = por %p179, %p180
      %p182 = scmp.ne.s32.totalorder %s171, %s174
      %p183 = scmp.eq.s32.totalorder %s88, 1
      %p184 = por %p182, %p183
      %p185 = scmp.ne.s32.totalorder %s174, %s175
      %p186 = scmp.eq.s32.totalorder %s88, 0
      %p187 = por %p185, %p186
      %p188 = scmp.ne.s32.totalorder %s174, %s175
      %p189 = scmp.eq.s32.totalorder %s89, 1
      %p190 = por %p188, %p189
      %p192 = scmp.ne.s32.totalorder %s175, %s191
      %p193 = scmp.eq.s32.totalorder %s89, 0
      %p194 = por %p192, %p193
      %s196 = sadd.s32 %s195, 1
      %p199 = scmp.eq.s32.totalorder %s83, 1
      %p200 = scmp.ne.s32.totalorder %s195, %s197
      %p201 = scmp.eq.s32.totalorder %s83, 0
      %p202 = por %p200, %p201
      %p203 = scmp.ne.s32.totalorder %s195, %s197
      %p204 = scmp.eq.s32.totalorder %s88, 1
      %p205 = por %p203, %p204
      %p206 = scmp.ne.s32.totalorder %s197, %s198
      %p207 = scmp.eq.s32.totalorder %s88, 0
      %p208 = por %p206, %p207
      %p209 = scmp.ne.s32.totalorder %s197, %s198
      %p210 = scmp.eq.s32.totalorder %s89, 1
      %p211 = por %p209, %p210
      %p213 = scmp.ne.s32.totalorder %s198, %s212
      %p214 = scmp.eq.s32.totalorder %s89, 0
      %p215 = por %p213, %p214
      %s217 = sadd.s32 %s216, 1
      %p220 = scmp.eq.s32.totalorder %s83, 1
      %p221 = scmp.ne.s32.totalorder %s216, %s218
      %p222 = scmp.eq.s32.totalorder %s83, 0
      %p223 = por %p221, %p222
      %p224 = scmp.ne.s32.totalorder %s216, %s218
      %p225 = scmp.eq.s32.totalorder %s88, 1
      %p226 = por %p224, %p225
      %p227 = scmp.ne.s32.totalorder %s218, %s219
      %p228 = scmp.eq.s32.totalorder %s88, 0
      %p229 = por %p227, %p228
      %p230 = scmp.ne.s32.totalorder %s218, %s219
      %p231 = scmp.eq.s32.totalorder %s89, 1
      %p232 = por %p230, %p231
      %p234 = scmp.ne.s32.totalorder %s219, %s233
      %p235 = scmp.eq.s32.totalorder %s89, 0
      %p236 = por %p234, %p235
      %s238 = sadd.s32 %s237, 1
      %p241 = scmp.eq.s32.totalorder %s83, 1
      %p242 = scmp.ne.s32.totalorder %s237, %s239
      %p243 = scmp.eq.s32.totalorder %s83, 0
      %p244 = por %p242, %p243
      %p245 = scmp.ne.s32.totalorder %s237, %s239
      %p246 = scmp.eq.s32.totalorder %s88, 1
      %p247 = por %p245, %p246
      %p248 = scmp.ne.s32.totalorder %s239, %s240
      %p249 = scmp.eq.s32.totalorder %s88, 0
      %p250 = por %p248, %p249
      %p251 = scmp.ne.s32.totalorder %s239, %s240
      %p252 = scmp.eq.s32.totalorder %s89, 1
      %p253 = por %p251, %p252
      %p255 = scmp.ne.s32.totalorder %s240, %s254
      %p256 = scmp.eq.s32.totalorder %s89, 0
      %p257 = por %p255, %p256
      %s259 = sadd.s32 %s258, 1
      %p262 = scmp.eq.s32.totalorder %s83, 1
      %p263 = scmp.ne.s32.totalorder %s258, %s260
      %p264 = scmp.eq.s32.totalorder %s83, 0
      %p265 = por %p263, %p264
      %p266 = scmp.ne.s32.totalorder %s258, %s260
      %p267 = scmp.eq.s32.totalorder %s88, 1
      %p268 = por %p266, %p267
      %p269 = scmp.ne.s32.totalorder %s260, %s261
      %p270 = scmp.eq.s32.totalorder %s88, 0
      %p271 = por %p269, %p270
      %p272 = scmp.ne.s32.totalorder %s260, %s261
      %p273 = scmp.eq.s32.totalorder %s89, 1
      %p274 = por %p272, %p273
      %p276 = scmp.ne.s32.totalorder %s261, %s275
      %p277 = scmp.eq.s32.totalorder %s89, 0
      %p278 = por %p276, %p277
      %s280 = sadd.s32 %s279, 1
      %p283 = scmp.eq.s32.totalorder %s83, 1
      %p284 = scmp.ne.s32.totalorder %s279, %s281
      %p285 = scmp.eq.s32.totalorder %s83, 0
      %p286 = por %p284, %p285
      %p287 = scmp.ne.s32.totalorder %s279, %s281
      %p288 = scmp.eq.s32.totalorder %s88, 1
      %p289 = por %p287, %p288
      %p290 = scmp.ne.s32.totalorder %s281, %s282
      %p291 = scmp.eq.s32.totalorder %s88, 0
      %p292 = por %p290, %p291
      %p293 = scmp.ne.s32.totalorder %s281, %s282
      %p294 = scmp.eq.s32.totalorder %s89, 1
      %p295 = por %p293, %p294
      %p297 = scmp.ne.s32.totalorder %s282, %s296
      %p298 = scmp.eq.s32.totalorder %s89, 0
      %p299 = por %p297, %p298
      %s301 = sadd.s32 %s300, 1
      %p304 = scmp.eq.s32.totalorder %s83, 1
      %p305 = scmp.ne.s32.totalorder %s300, %s302
      %p306 = scmp.eq.s32.totalorder %s83, 0
      %p307 = por %p305, %p306
      %p308 = scmp.ne.s32.totalorder %s300, %s302
      %p309 = scmp.eq.s32.totalorder %s88, 1
      %p310 = por %p308, %p309
      %p311 = scmp.ne.s32.totalorder %s302, %s303
      %p312 = scmp.eq.s32.totalorder %s88, 0
      %p313 = por %p311, %p312
      %p314 = scmp.ne.s32.totalorder %s302, %s303
      %p315 = scmp.eq.s32.totalorder %s89, 1
      %p316 = por %p314, %p315
      %p318 = scmp.ne.s32.totalorder %s303, %s317
      %p319 = scmp.eq.s32.totalorder %s89, 0
      %p320 = por %p318, %p319
      %s322 = sadd.s32 %s321, 1
      %p325 = scmp.eq.s32.totalorder %s83, 1
      %p326 = scmp.ne.s32.totalorder %s321, %s323
      %p327 = scmp.eq.s32.totalorder %s83, 0
      %p328 = por %p326, %p327
      %p329 = scmp.ne.s32.totalorder %s321, %s323
      %p330 = scmp.eq.s32.totalorder %s88, 1
      %p331 = por %p329, %p330
      %p332 = scmp.ne.s32.totalorder %s323, %s324
      %p333 = scmp.eq.s32.totalorder %s88, 0
      %p334 = por %p332, %p333
      %p335 = scmp.ne.s32.totalorder %s323, %s324
      %p336 = scmp.eq.s32.totalorder %s89, 1
      %p337 = por %p335, %p336
      %p339 = scmp.ne.s32.totalorder %s324, %s338
      %p340 = scmp.eq.s32.totalorder %s89, 0
      %p341 = por %p339, %p340
      %s343 = sadd.s32 %s342, 1
      %p346 = scmp.eq.s32.totalorder %s83, 1
      %p347 = scmp.ne.s32.totalorder %s342, %s344
      %p348 = scmp.eq.s32.totalorder %s83, 0
      %p349 = por %p347, %p348
      %p350 = scmp.ne.s32.totalorder %s342, %s344
      %p351 = scmp.eq.s32.totalorder %s88, 1
      %p352 = por %p350, %p351
      %p353 = scmp.ne.s32.totalorder %s344, %s345
      %p354 = scmp.eq.s32.totalorder %s88, 0
      %p355 = por %p353, %p354
      %p356 = scmp.ne.s32.totalorder %s344, %s345
      %p357 = scmp.eq.s32.totalorder %s89, 1
      %p358 = por %p356, %p357
      %p360 = scmp.ne.s32.totalorder %s345, %s359
      %p361 = scmp.eq.s32.totalorder %s89, 0
      %p362 = por %p360, %p361
      %s364 = sadd.s32 %s363, 1
      %p367 = scmp.eq.s32.totalorder %s83, 1
      %p368 = scmp.ne.s32.totalorder %s363, %s365
      %p369 = scmp.eq.s32.totalorder %s83, 0
      %p370 = por %p368, %p369
      %p371 = scmp.ne.s32.totalorder %s363, %s365
      %p372 = scmp.eq.s32.totalorder %s88, 1
      %p373 = por %p371, %p372
      %p374 = scmp.ne.s32.totalorder %s365, %s366
      %p375 = scmp.eq.s32.totalorder %s88, 0
      %p376 = por %p374, %p375
      %p377 = scmp.ne.s32.totalorder %s365, %s366
      %p378 = scmp.eq.s32.totalorder %s89, 1
      %p379 = por %p377, %p378
      %p381 = scmp.ne.s32.totalorder %s366, %s380
      %p382 = scmp.eq.s32.totalorder %s89, 0
      %p383 = por %p381, %p382
      %s385 = sadd.s32 %s384, 1
      %p388 = scmp.eq.s32.totalorder %s83, 1
      %p389 = scmp.ne.s32.totalorder %s384, %s386
      %p390 = scmp.eq.s32.totalorder %s83, 0
      %p391 = por %p389, %p390
      %p392 = scmp.ne.s32.totalorder %s384, %s386
      %p393 = scmp.eq.s32.totalorder %s88, 1
      %p394 = por %p392, %p393
      %p395 = scmp.ne.s32.totalorder %s386, %s387
      %p396 = scmp.eq.s32.totalorder %s88, 0
      %p397 = por %p395, %p396
      %p398 = scmp.ne.s32.totalorder %s386, %s387
      %p399 = scmp.eq.s32.totalorder %s89, 1
      %p400 = por %p398, %p399
      %p402 = scmp.ne.s32.totalorder %s387, %s401
      %p403 = scmp.eq.s32.totalorder %s89, 0
      %p404 = por %p402, %p403
      %s406 = sadd.s32 %s405, 1
      %p409 = scmp.eq.s32.totalorder %s83, 1
      %p410 = scmp.ne.s32.totalorder %s405, %s407
      %p411 = scmp.eq.s32.totalorder %s83, 0
      %p412 = por %p410, %p411
      %p413 = scmp.ne.s32.totalorder %s405, %s407
      %p414 = scmp.eq.s32.totalorder %s88, 1
      %p415 = por %p413, %p414
      %p416 = scmp.ne.s32.totalorder %s407, %s408
      %p417 = scmp.eq.s32.totalorder %s88, 0
      %p418 = por %p416, %p417
      %p419 = scmp.ne.s32.totalorder %s407, %s408
      %p420 = scmp.eq.s32.totalorder %s89, 1
      %p421 = por %p419, %p420
      %p423 = scmp.ne.s32.totalorder %s408, %s422
      %p424 = scmp.eq.s32.totalorder %s89, 0
      %p425 = por %p423, %p424
      %s427 = sadd.s32 %s426, 1
      %p430 = scmp.eq.s32.totalorder %s83, 1
      %p431 = scmp.ne.s32.totalorder %s426, %s428
      %p432 = scmp.eq.s32.totalorder %s83, 0
      %p433 = por %p431, %p432
      %p434 = scmp.ne.s32.totalorder %s426, %s428
      %p435 = scmp.eq.s32.totalorder %s88, 1
      %p436 = por %p434, %p435
      %p437 = scmp.ne.s32.totalorder %s428, %s429
      %p438 = scmp.eq.s32.totalorder %s88, 0
      %p439 = por %p437, %p438
      %p440 = scmp.ne.s32.totalorder %s428, %s429
      %p441 = scmp.eq.s32.totalorder %s89, 1
      %p442 = por %p440, %p441
      %p444 = scmp.ne.s32.totalorder %s429, %s443
      %p445 = scmp.eq.s32.totalorder %s89, 0
      %p446 = por %p444, %p445
      %s448 = sadd.s32 %s447, 1
      %p451 = scmp.eq.s32.totalorder %s83, 1
      %p452 = scmp.ne.s32.totalorder %s447, %s449
      %p453 = scmp.eq.s32.totalorder %s83, 0
      %p454 = por %p452, %p453
      %p455 = scmp.ne.s32.totalorder %s447, %s449
      %p456 = scmp.eq.s32.totalorder %s88, 1
      %p457 = por %p455, %p456
      %p458 = scmp.ne.s32.totalorder %s449, %s450
      %p459 = scmp.eq.s32.totalorder %s88, 0
      %p460 = por %p458, %p459
      %p461 = scmp.ne.s32.totalorder %s449, %s450
      %p462 = scmp.eq.s32.totalorder %s89, 1
      %p463 = por %p461, %p462
      %p465 = scmp.ne.s32.totalorder %s450, %s464
      %p466 = scmp.eq.s32.totalorder %s89, 0
      %p467 = por %p465, %p466
      %s469 = sadd.s32 %s468, 1
      %p472 = scmp.eq.s32.totalorder %s83, 1
      %p473 = scmp.ne.s32.totalorder %s468, %s470
      %p474 = scmp.eq.s32.totalorder %s83, 0
      %p475 = por %p473, %p474
      %p476 = scmp.ne.s32.totalorder %s468, %s470
      %p477 = scmp.eq.s32.totalorder %s88, 1
      %p478 = por %p476, %p477
      %p479 = scmp.ne.s32.totalorder %s470, %s471
      %p480 = scmp.eq.s32.totalorder %s88, 0
      %p481 = por %p479, %p480
      %p482 = scmp.ne.s32.totalorder %s470, %s471
      %p483 = scmp.eq.s32.totalorder %s89, 1
      %p484 = por %p482, %p483
      %p486 = scmp.ne.s32.totalorder %s471, %s485
      %p487 = scmp.eq.s32.totalorder %s89, 0
      %p488 = por %p486, %p487
      %s490 = sadd.s32 %s489, 1
      %p493 = scmp.eq.s32.totalorder %s83, 1
      %p494 = scmp.ne.s32.totalorder %s489, %s491
      %p495 = scmp.eq.s32.totalorder %s83, 0
      %p496 = por %p494, %p495
      %p497 = scmp.ne.s32.totalorder %s489, %s491
      %p498 = scmp.eq.s32.totalorder %s88, 1
      %p499 = por %p497, %p498
      %p500 = scmp.ne.s32.totalorder %s491, %s492
      %p501 = scmp.eq.s32.totalorder %s88, 0
      %p502 = por %p500, %p501
      %p503 = scmp.ne.s32.totalorder %s491, %s492
      %p504 = scmp.eq.s32.totalorder %s89, 1
      %p505 = por %p503, %p504
      %p507 = scmp.ne.s32.totalorder %s492, %s506
      %p508 = scmp.eq.s32.totalorder %s89, 0
      %p509 = por %p507, %p508
      %s511 = sadd.s32 %s510, 1
      %p514 = scmp.eq.s32.totalorder %s83, 1
      %p515 = scmp.ne.s32.totalorder %s510, %s512
      %p516 = scmp.eq.s32.totalorder %s83, 0
      %p517 = por %p515, %p516
      %p518 = scmp.ne.s32.totalorder %s510, %s512
      %p519 = scmp.eq.s32.totalorder %s88, 1
      %p520 = por %p518, %p519
      %p521 = scmp.ne.s32.totalorder %s512, %s513
      %p522 = scmp.eq.s32.totalorder %s88, 0
      %p523 = por %p521, %p522
      %p524 = scmp.ne.s32.totalorder %s512, %s513
      %p525 = scmp.eq.s32.totalorder %s89, 1
      %p526 = por %p524, %p525
      %p528 = scmp.ne.s32.totalorder %s513, %s527
      %p529 = scmp.eq.s32.totalorder %s89, 0
      %p530 = por %p528, %p529
      %s532 = sadd.s32 %s531, 1
      %p535 = scmp.eq.s32.totalorder %s83, 1
      %p536 = scmp.ne.s32.totalorder %s531, %s533
      %p537 = scmp.eq.s32.totalorder %s83, 0
      %p538 = por %p536, %p537
      %p539 = scmp.ne.s32.totalorder %s531, %s533
      %p540 = scmp.eq.s32.totalorder %s88, 1
      %p541 = por %p539, %p540
      %p542 = scmp.ne.s32.totalorder %s533, %s534
      %p543 = scmp.eq.s32.totalorder %s88, 0
      %p544 = por %p542, %p543
      %p545 = scmp.ne.s32.totalorder %s533, %s534
      %p546 = scmp.eq.s32.totalorder %s89, 1
      %p547 = por %p545, %p546
      %p549 = scmp.ne.s32.totalorder %s534, %s548
      %p550 = scmp.eq.s32.totalorder %s89, 0
      %p551 = por %p549, %p550
      %s553 = sadd.s32 %s552, 1
      %p556 = scmp.eq.s32.totalorder %s83, 1
      %p557 = scmp.ne.s32.totalorder %s552, %s554
      %p558 = scmp.eq.s32.totalorder %s83, 0
      %p559 = por %p557, %p558
      %p560 = scmp.ne.s32.totalorder %s552, %s554
      %p561 = scmp.eq.s32.totalorder %s88, 1
      %p562 = por %p560, %p561
      %p563 = scmp.ne.s32.totalorder %s554, %s555
      %p564 = scmp.eq.s32.totalorder %s88, 0
      %p565 = por %p563, %p564
      %p566 = scmp.ne.s32.totalorder %s554, %s555
      %p567 = scmp.eq.s32.totalorder %s89, 1
      %p568 = por %p566, %p567
      %p570 = scmp.ne.s32.totalorder %s555, %s569
      %p571 = scmp.eq.s32.totalorder %s89, 0
      %p572 = por %p570, %p571
      %s574 = sadd.s32 %s573, 1
      %p577 = scmp.eq.s32.totalorder %s83, 1
      %p578 = scmp.ne.s32.totalorder %s573, %s575
      %p579 = scmp.eq.s32.totalorder %s83, 0
      %p580 = por %p578, %p579
      %p581 = scmp.ne.s32.totalorder %s573, %s575
      %p582 = scmp.eq.s32.totalorder %s88, 1
      %p583 = por %p581, %p582
      %p584 = scmp.ne.s32.totalorder %s575, %s576
      %p585 = scmp.eq.s32.totalorder %s88, 0
      %p586 = por %p584, %p585
      %p587 = scmp.ne.s32.totalorder %s575, %s576
      %p588 = scmp.eq.s32.totalorder %s89, 1
      %p589 = por %p587, %p588
      %p591 = scmp.ne.s32.totalorder %s576, %s590
      %p592 = scmp.eq.s32.totalorder %s89, 0
      %p593 = por %p591, %p592
      %s595 = sadd.s32 %s594, 1
      %p598 = scmp.eq.s32.totalorder %s83, 1
      %p599 = scmp.ne.s32.totalorder %s594, %s596
      %p600 = scmp.eq.s32.totalorder %s83, 0
      %p601 = por %p599, %p600
      %p602 = scmp.ne.s32.totalorder %s594, %s596
      %p603 = scmp.eq.s32.totalorder %s88, 1
      %p604 = por %p602, %p603
      %p605 = scmp.ne.s32.totalorder %s596, %s597
      %p606 = scmp.eq.s32.totalorder %s88, 0
      %p607 = por %p605, %p606
      %p608 = scmp.ne.s32.totalorder %s596, %s597
      %p609 = scmp.eq.s32.totalorder %s89, 1
      %p610 = por %p608, %p609
      %p612 = scmp.ne.s32.totalorder %s597, %s611
      %p613 = scmp.eq.s32.totalorder %s89, 0
      %p614 = por %p612, %p613
      %s616 = sadd.s32 %s615, 1
      %p619 = scmp.eq.s32.totalorder %s83, 1
      %p620 = scmp.ne.s32.totalorder %s615, %s617
      %p621 = scmp.eq.s32.totalorder %s83, 0
      %p622 = por %p620, %p621
      %p623 = scmp.ne.s32.totalorder %s615, %s617
      %p624 = scmp.eq.s32.totalorder %s88, 1
      %p625 = por %p623, %p624
      %p626 = scmp.ne.s32.totalorder %s617, %s618
      %p627 = scmp.eq.s32.totalorder %s88, 0
      %p628 = por %p626, %p627
      %p629 = scmp.ne.s32.totalorder %s617, %s618
      %p630 = scmp.eq.s32.totalorder %s89, 1
      %p631 = por %p629, %p630
      %p633 = scmp.ne.s32.totalorder %s618, %s632
      %p634 = scmp.eq.s32.totalorder %s89, 0
      %p635 = por %p633, %p634
      %s637 = sadd.s32 %s636, 1
      %p640 = scmp.eq.s32.totalorder %s83, 1
      %p641 = scmp.ne.s32.totalorder %s636, %s638
      %p642 = scmp.eq.s32.totalorder %s83, 0
      %p643 = por %p641, %p642
      %p644 = scmp.ne.s32.totalorder %s636, %s638
      %p645 = scmp.eq.s32.totalorder %s88, 1
      %p646 = por %p644, %p645
      %p647 = scmp.ne.s32.totalorder %s638, %s639
      %p648 = scmp.eq.s32.totalorder %s88, 0
      %p649 = por %p647, %p648
      %p650 = scmp.ne.s32.totalorder %s638, %s639
      %p651 = scmp.eq.s32.totalorder %s89, 1
      %p652 = por %p650, %p651
      %p654 = scmp.ne.s32.totalorder %s639, %s653
      %p655 = scmp.eq.s32.totalorder %s89, 0
      %p656 = por %p654, %p655
      %s658 = sadd.s32 %s657, 1
      %p661 = scmp.eq.s32.totalorder %s83, 1
      %p662 = scmp.ne.s32.totalorder %s657, %s659
      %p663 = scmp.eq.s32.totalorder %s83, 0
      %p664 = por %p662, %p663
      %p665 = scmp.ne.s32.totalorder %s657, %s659
      %p666 = scmp.eq.s32.totalorder %s88, 1
      %p667 = por %p665, %p666
      %p668 = scmp.ne.s32.totalorder %s659, %s660
      %p669 = scmp.eq.s32.totalorder %s88, 0
      %p670 = por %p668, %p669
      %p671 = scmp.ne.s32.totalorder %s659, %s660
      %p672 = scmp.eq.s32.totalorder %s89, 1
      %p673 = por %p671, %p672
      %p675 = scmp.ne.s32.totalorder %s660, %s674
      %p676 = scmp.eq.s32.totalorder %s89, 0
      %p677 = por %p675, %p676
      %s679 = sadd.s32 %s678, 1
      %p682 = scmp.eq.s32.totalorder %s83, 1
      %p683 = scmp.ne.s32.totalorder %s678, %s680
      %p684 = scmp.eq.s32.totalorder %s83, 0
      %p685 = por %p683, %p684
      %p686 = scmp.ne.s32.totalorder %s678, %s680
      %p687 = scmp.eq.s32.totalorder %s88, 1
      %p688 = por %p686, %p687
      %p689 = scmp.ne.s32.totalorder %s680, %s681
      %p690 = scmp.eq.s32.totalorder %s88, 0
      %p691 = por %p689, %p690
      %p692 = scmp.ne.s32.totalorder %s680, %s681
      %p693 = scmp.eq.s32.totalorder %s89, 1
      %p694 = por %p692, %p693
      %p696 = scmp.ne.s32.totalorder %s681, %s695
      %p697 = scmp.eq.s32.totalorder %s89, 0
      %p698 = por %p696, %p697
      %s700 = sadd.s32 %s699, 1
      %p703 = scmp.eq.s32.totalorder %s83, 1
      %p704 = scmp.ne.s32.totalorder %s699, %s701
      %p705 = scmp.eq.s32.totalorder %s83, 0
      %p706 = por %p704, %p705
      %p707 = scmp.ne.s32.totalorder %s699, %s701
      %p708 = scmp.eq.s32.totalorder %s88, 1
      %p709 = por %p707, %p708
      %p710 = scmp.ne.s32.totalorder %s701, %s702
      %p711 = scmp.eq.s32.totalorder %s88, 0
      %p712 = por %p710, %p711
      %p713 = scmp.ne.s32.totalorder %s701, %s702
      %p714 = scmp.eq.s32.totalorder %s89, 1
      %p715 = por %p713, %p714
      %p717 = scmp.ne.s32.totalorder %s702, %s716
      %p718 = scmp.eq.s32.totalorder %s89, 0
      %p719 = por %p717, %p718
      %s721 = sadd.s32 %s720, 1
      %p724 = scmp.eq.s32.totalorder %s83, 1
      %p725 = scmp.ne.s32.totalorder %s720, %s722
      %p726 = scmp.eq.s32.totalorder %s83, 0
      %p727 = por %p725, %p726
      %p728 = scmp.ne.s32.totalorder %s720, %s722
      %p729 = scmp.eq.s32.totalorder %s88, 1
      %p730 = por %p728, %p729
      %p731 = scmp.ne.s32.totalorder %s722, %s723
      %p732 = scmp.eq.s32.totalorder %s88, 0
      %p733 = por %p731, %p732
      %p734 = scmp.ne.s32.totalorder %s722, %s723
      %p735 = scmp.eq.s32.totalorder %s89, 1
      %p736 = por %p734, %p735
      %p738 = scmp.ne.s32.totalorder %s723, %s737
      %p739 = scmp.eq.s32.totalorder %s89, 0
      %p740 = por %p738, %p739
      %s742 = sadd.s32 %s741, 1
      %p745 = scmp.eq.s32.totalorder %s83, 1
      %p746 = scmp.ne.s32.totalorder %s741, %s743
      %p747 = scmp.eq.s32.totalorder %s83, 0
      %p748 = por %p746, %p747
      %p749 = scmp.ne.s32.totalorder %s741, %s743
      %p750 = scmp.eq.s32.totalorder %s88, 1
      %p751 = por %p749, %p750
      %p752 = scmp.ne.s32.totalorder %s743, %s744
      %p753 = scmp.eq.s32.totalorder %s88, 0
      %p754 = por %p752, %p753
      %p755 = scmp.ne.s32.totalorder %s743, %s744
      %p756 = scmp.eq.s32.totalorder %s89, 1
      %p757 = por %p755, %p756
      %p759 = scmp.ne.s32.totalorder %s744, %s758
      %p760 = scmp.eq.s32.totalorder %s89, 0
      %p761 = por %p759, %p760
      %s762 = ssub.s32 %s83, %s90
      %p763 = scmp.eq.s32.totalorder %s762, 0
      %s765 = sadd.s32 %s764, 1
      %s766 = scalar_select %p763, %s764, %s765
      %p769 = pneg %p763
      %p770 = scmp.eq.s32.totalorder %s83, 1
      %p771 = por %p769, %p770
      %p772 = scmp.ne.s32.totalorder %s764, %s767
      %p773 = scmp.eq.s32.totalorder %s83, 0
      %p774 = por %p772, %p773
      %p775 = scmp.ne.s32.totalorder %s764, %s767
      %p776 = scmp.eq.s32.totalorder %s88, 1
      %p777 = por %p775, %p776
      %p778 = scmp.ne.s32.totalorder %s767, %s768
      %p779 = scmp.eq.s32.totalorder %s88, 0
      %p780 = por %p778, %p779
      %p781 = scmp.ne.s32.totalorder %s767, %s768
      %p782 = scmp.eq.s32.totalorder %s89, 1
      %p783 = por %p781, %p782
      %p785 = scmp.ne.s32.totalorder %s768, %s784
      %p786 = scmp.eq.s32.totalorder %s89, 0
      %p787 = por %p785, %p786
      %p788 = scmp.le.s32.totalorder 1, %s83
      %p789 = scmp.lt.s32.totalorder %s83, 3
      %p790 = pnand %p788, %p789
      %p791 = pneg %p790
      // Predicated region
      $region9: #{tpu_custom_call.1} parent=5 // pred_check
        _
      $region10: #{tpu_custom_call.1} parent=5 // pred_check_branch
        %793 = sbr.rel (%p790) target = $region12
      $region11: #{tpu_custom_call.1} parent=5 // pred_region
        %s794 = ssub.s32 %s83, 1
        // Predicated region
        $region13: #{tpu_custom_call.1} parent=11 // pred_check
          %p795 = pneg %p208
        $region14: #{tpu_custom_call.1} parent=11 // pred_check_branch
          %797 = sbr.rel (%p795) target = $region16
        $region15: #{tpu_custom_call.1} parent=11 // pred_region
          %s799 = ssub.s32 64, 64
          %800 = vsyncadd [#allocation6], %s799
          %s802 = sshll.u32 [#allocation7], 4
          %s803 = int_to_ptr.vmem [resolvable:$true] %s802
          %805 = dma.hbm_to_vmem [thread:$0]  %s9, 64, %s803, [#allocation6]
        $region16: #{tpu_custom_call.1} parent=11 // pred_fallthru
          _
        // Predicated region
        $region17: #{tpu_custom_call.1} parent=11 // pred_check
          %p806 = pneg %p229
        $region18: #{tpu_custom_call.1} parent=11 // pred_check_branch
          %808 = sbr.rel (%p806) target = $region20
        $region19: #{tpu_custom_call.1} parent=11 // pred_region
          _
        $region20: #{tpu_custom_call.1} parent=11 // pred_fallthru
          _
        // Predicated region
        $region21: #{tpu_custom_call.1} parent=11 // pred_check
          %p809 = pneg %p250
        $region22: #{tpu_custom_call.1} parent=11 // pred_check_branch
          %811 = sbr.rel (%p809) target = $region24
        $region23: #{tpu_custom_call.1} parent=11 // pred_region
          %s813 = ssub.s32 16, 16
          %814 = vsyncadd [#allocation9], %s813
          %s816 = sshll.u32 [#allocation8], 4
          %s817 = int_to_ptr.vmem [resolvable:$true] %s816
          %819 = dma.hbm_to_vmem [thread:$0]  %s13, 16, %s817, [#allocation9]
        $region24: #{tpu_custom_call.1} parent=11 // pred_fallthru
          _
        // Predicated region
        $region25: #{tpu_custom_call.1} parent=11 // pred_check
          %p820 = pneg %p271
        $region26: #{tpu_custom_call.1} parent=11 // pred_check_branch
          %822 = sbr.rel (%p820) target = $region28
        $region27: #{tpu_custom_call.1} parent=11 // pred_region
          _
        $region28: #{tpu_custom_call.1} parent=11 // pred_fallthru
          _
        // Predicated region
        $region29: #{tpu_custom_call.1} parent=11 // pred_check
          %p823 = pneg %p292
        $region30: #{tpu_custom_call.1} parent=11 // pred_check_branch
          %825 = sbr.rel (%p823) target = $region32
        $region31: #{tpu_custom_call.1} parent=11 // pred_region
          %s827 = ssub.s32 16, 16
          %828 = vsyncadd [#allocation9], %s827
          %s830 = sshll.u32 [#allocation10], 4
          %s831 = int_to_ptr.vmem [resolvable:$true] %s830
          %833 = dma.hbm_to_vmem [thread:$0]  %s17, 16, %s831, [#allocation9]
        $region32: #{tpu_custom_call.1} parent=11 // pred_fallthru
          _
        // Predicated region
        $region33: #{tpu_custom_call.1} parent=11 // pred_check
          %p834 = pneg %p313
        $region34: #{tpu_custom_call.1} parent=11 // pred_check_branch
          %836 = sbr.rel (%p834) target = $region36
        $region35: #{tpu_custom_call.1} parent=11 // pred_region
          _
        $region36: #{tpu_custom_call.1} parent=11 // pred_fallthru
          _
        // Predicated region
        $region37: #{tpu_custom_call.1} parent=11 // pred_check
          %p837 = pneg %p334
        $region38: #{tpu_custom_call.1} parent=11 // pred_check_branch
          %839 = sbr.rel (%p837) target = $region40
        $region39: #{tpu_custom_call.1} parent=11 // pred_region
          %s841 = ssub.s32 16, 16
          %842 = vsyncadd [#allocation12], %s841
          %s844 = sshll.u32 [#allocation11], 4
          %s845 = int_to_ptr.vmem [resolvable:$true] %s844
          %847 = dma.hbm_to_vmem [thread:$0]  %s21, 16, %s845, [#allocation12]
        $region40: #{tpu_custom_call.1} parent=11 // pred_fallthru
          _
        // Predicated region
        $region41: #{tpu_custom_call.1} parent=11 // pred_check
          %p848 = pneg %p355
        $region42: #{tpu_custom_call.1} parent=11 // pred_check_branch
          %850 = sbr.rel (%p848) target = $region44
        $region43: #{tpu_custom_call.1} parent=11 // pred_region
          %s852 = ssub.s32 256, 256
          %853 = vsyncadd [#allocation12], %s852
          %s854 = sshll.u32 [#allocation13], 4
          %s855 = int_to_ptr.vmem [resolvable:$true] %s854
          %860 = dma.hbm_to_vmem [thread:$0]  %s23, 256, %s855, [#allocation12], 64, 64, 4
        $region44: #{tpu_custom_call.1} parent=11 // pred_fallthru
          _
        // Predicated region
        $region45: #{tpu_custom_call.1} parent=11 // pred_check
          %p861 = pneg %p376
        $region46: #{tpu_custom_call.1} parent=11 // pred_check_branch
          %863 = sbr.rel (%p861) target = $region48
        $region47: #{tpu_custom_call.1} parent=11 // pred_region
          %s865 = ssub.s32 16, 16
          %866 = vsyncadd [#allocation15], %s865
          %s868 = sshll.u32 [#allocation14], 4
          %s869 = int_to_ptr.vmem [resolvable:$true] %s868
          %871 = dma.hbm_to_vmem [thread:$0]  %s25, 16, %s869, [#allocation15]
        $region48: #{tpu_custom_call.1} parent=11 // pred_fallthru
          _
        // Predicated region
        $region49: #{tpu_custom_call.1} parent=11 // pred_check
          %p872 = pneg %p397
        $region50: #{tpu_custom_call.1} parent=11 // pred_check_branch
          %874 = sbr.rel (%p872) target = $region52
        $region51: #{tpu_custom_call.1} parent=11 // pred_region
          %s876 = ssub.s32 16, 16
          %877 = vsyncadd [#allocation15], %s876
          %s879 = sshll.u32 [#allocation16], 4
          %s880 = int_to_ptr.vmem [resolvable:$true] %s879
          %882 = dma.hbm_to_vmem [thread:$0]  %s27, 16, %s880, [#allocation15]
        $region52: #{tpu_custom_call.1} parent=11 // pred_fallthru
          _
        // Predicated region
        $region53: #{tpu_custom_call.1} parent=11 // pred_check
          %p883 = pneg %p418
        $region54: #{tpu_custom_call.1} parent=11 // pred_check_branch
          %885 = sbr.rel (%p883) target = $region56
        $region55: #{tpu_custom_call.1} parent=11 // pred_region
          %s887 = ssub.s32 16, 16
          %888 = vsyncadd [#allocation18], %s887
          %s890 = sshll.u32 [#allocation17], 4
          %s891 = int_to_ptr.vmem [resolvable:$true] %s890
          %893 = dma.hbm_to_vmem [thread:$0]  %s29, 16, %s891, [#allocation18]
        $region56: #{tpu_custom_call.1} parent=11 // pred_fallthru
          _
        // Predicated region
        $region57: #{tpu_custom_call.1} parent=11 // pred_check
          %p894 = pneg %p439
        $region58: #{tpu_custom_call.1} parent=11 // pred_check_branch
          %896 = sbr.rel (%p894) target = $region60
        $region59: #{tpu_custom_call.1} parent=11 // pred_region
          _
        $region60: #{tpu_custom_call.1} parent=11 // pred_fallthru
          _
        // Predicated region
        $region61: #{tpu_custom_call.1} parent=11 // pred_check
          %p897 = pneg %p460
        $region62: #{tpu_custom_call.1} parent=11 // pred_check_branch
          %899 = sbr.rel (%p897) target = $region64
        $region63: #{tpu_custom_call.1} parent=11 // pred_region
          %s901 = ssub.s32 16, 16
          %902 = vsyncadd [#allocation18], %s901
          %s904 = sshll.u32 [#allocation19], 4
          %s905 = int_to_ptr.vmem [resolvable:$true] %s904
          %907 = dma.hbm_to_vmem [thread:$0]  %s33, 16, %s905, [#allocation18]
        $region64: #{tpu_custom_call.1} parent=11 // pred_fallthru
          _
        // Predicated region
        $region65: #{tpu_custom_call.1} parent=11 // pred_check
          %p908 = pneg %p481
        $region66: #{tpu_custom_call.1} parent=11 // pred_check_branch
          %910 = sbr.rel (%p908) target = $region68
        $region67: #{tpu_custom_call.1} parent=11 // pred_region
          _
        $region68: #{tpu_custom_call.1} parent=11 // pred_fallthru
          _
        // Predicated region
        $region69: #{tpu_custom_call.1} parent=11 // pred_check
          %p911 = pneg %p502
        $region70: #{tpu_custom_call.1} parent=11 // pred_check_branch
          %913 = sbr.rel (%p911) target = $region72
        $region71: #{tpu_custom_call.1} parent=11 // pred_region
          _
        $region72: #{tpu_custom_call.1} parent=11 // pred_fallthru
          _
        // Predicated region
        $region73: #{tpu_custom_call.1} parent=11 // pred_check
          %p914 = pneg %p523
        $region74: #{tpu_custom_call.1} parent=11 // pred_check_branch
          %916 = sbr.rel (%p914) target = $region76
        $region75: #{tpu_custom_call.1} parent=11 // pred_region
          %s918 = ssub.s32 256, 256
          %919 = vsyncadd [#allocation21], %s918
          %s920 = sshll.u32 [#allocation20], 4
          %s921 = int_to_ptr.vmem [resolvable:$true] %s920
          %926 = dma.hbm_to_vmem [thread:$0]  %s39, 256, %s921, [#allocation21], 64, 64, 4
        $region76: #{tpu_custom_call.1} parent=11 // pred_fallthru
          _
        // Predicated region
        $region77: #{tpu_custom_call.1} parent=11 // pred_check
          %p927 = pneg %p544
        $region78: #{tpu_custom_call.1} parent=11 // pred_check_branch
          %929 = sbr.rel (%p927) target = $region80
        $region79: #{tpu_custom_call.1} parent=11 // pred_region
          _
        $region80: #{tpu_custom_call.1} parent=11 // pred_fallthru
          _
        // Predicated region
        $region81: #{tpu_custom_call.1} parent=11 // pred_check
          %p930 = pneg %p565
        $region82: #{tpu_custom_call.1} parent=11 // pred_check_branch
          %932 = sbr.rel (%p930) target = $region84
        $region83: #{tpu_custom_call.1} parent=11 // pred_region
          %s934 = ssub.s32 256, 256
          %935 = vsyncadd [#allocation21], %s934
          %s936 = sshll.u32 [#allocation22], 4
          %s937 = int_to_ptr.vmem [resolvable:$true] %s936
          %942 = dma.hbm_to_vmem [thread:$0]  %s43, 256, %s937, [#allocation21], 64, 64, 4
        $region84: #{tpu_custom_call.1} parent=11 // pred_fallthru
          _
        // Predicated region
        $region85: #{tpu_custom_call.1} parent=11 // pred_check
          %p943 = pneg %p586
        $region86: #{tpu_custom_call.1} parent=11 // pred_check_branch
          %945 = sbr.rel (%p943) target = $region88
        $region87: #{tpu_custom_call.1} parent=11 // pred_region
          _
        $region88: #{tpu_custom_call.1} parent=11 // pred_fallthru
          _
        // Predicated region
        $region89: #{tpu_custom_call.1} parent=11 // pred_check
          %p946 = pneg %p607
        $region90: #{tpu_custom_call.1} parent=11 // pred_check_branch
          %948 = sbr.rel (%p946) target = $region92
        $region91: #{tpu_custom_call.1} parent=11 // pred_region
          _
        $region92: #{tpu_custom_call.1} parent=11 // pred_fallthru
          _
        // Predicated region
        $region93: #{tpu_custom_call.1} parent=11 // pred_check
          %p949 = pneg %p628
        $region94: #{tpu_custom_call.1} parent=11 // pred_check_branch
          %951 = sbr.rel (%p949) target = $region96
        $region95: #{tpu_custom_call.1} parent=11 // pred_region
          _
        $region96: #{tpu_custom_call.1} parent=11 // pred_fallthru
          _
        // Predicated region
        $region97: #{tpu_custom_call.1} parent=11 // pred_check
          %p952 = pneg %p649
        $region98: #{tpu_custom_call.1} parent=11 // pred_check_branch
          %954 = sbr.rel (%p952) target = $region100
        $region99: #{tpu_custom_call.1} parent=11 // pred_region
          _
        $region100: #{tpu_custom_call.1} parent=11 // pred_fallthru
          _
        // Predicated region
        $region101: #{tpu_custom_call.1} parent=11 // pred_check
          %p955 = pneg %p670
        $region102: #{tpu_custom_call.1} parent=11 // pred_check_branch
          %957 = sbr.rel (%p955) target = $region104
        $region103: #{tpu_custom_call.1} parent=11 // pred_region
          _
        $region104: #{tpu_custom_call.1} parent=11 // pred_fallthru
          _
        // Predicated region
        $region105: #{tpu_custom_call.1} parent=11 // pred_check
          %p958 = pneg %p691
        $region106: #{tpu_custom_call.1} parent=11 // pred_check_branch
          %960 = sbr.rel (%p958) target = $region108
        $region107: #{tpu_custom_call.1} parent=11 // pred_region
          _
        $region108: #{tpu_custom_call.1} parent=11 // pred_fallthru
          _
        // Predicated region
        $region109: #{tpu_custom_call.1} parent=11 // pred_check
          %p961 = pneg %p712
        $region110: #{tpu_custom_call.1} parent=11 // pred_check_branch
          %963 = sbr.rel (%p961) target = $region112
        $region111: #{tpu_custom_call.1} parent=11 // pred_region
          _
        $region112: #{tpu_custom_call.1} parent=11 // pred_fallthru
          _
        // Predicated region
        $region113: #{tpu_custom_call.1} parent=11 // pred_check
          %p964 = pneg %p733
        $region114: #{tpu_custom_call.1} parent=11 // pred_check_branch
          %966 = sbr.rel (%p964) target = $region116
        $region115: #{tpu_custom_call.1} parent=11 // pred_region
          _
        $region116: #{tpu_custom_call.1} parent=11 // pred_fallthru
          _
        // Predicated region
        $region117: #{tpu_custom_call.1} parent=11 // pred_check
          %p967 = pneg %p754
        $region118: #{tpu_custom_call.1} parent=11 // pred_check_branch
          %969 = sbr.rel (%p967) target = $region120
        $region119: #{tpu_custom_call.1} parent=11 // pred_region
          _
        $region120: #{tpu_custom_call.1} parent=11 // pred_fallthru
          _
      $region12: #{tpu_custom_call.1} parent=5 // pred_fallthru
        _
      %p970 = scmp.lt.s32.totalorder %s83, 2
      // Predicated region
      $region121: #{tpu_custom_call.1} parent=5 // pred_check
        %p971 = pneg %p970
      $region122: #{tpu_custom_call.1} parent=5 // pred_check_branch
        %973 = sbr.rel (%p971) target = $region124
      $region123: #{tpu_custom_call.1} parent=5 // pred_region
        // Predicated region
        $region125: #{tpu_custom_call.1} parent=123 // pred_check
          %p974 = pneg %p103
        $region126: #{tpu_custom_call.1} parent=123 // pred_check_branch
          %976 = sbr.rel (%p974) target = $region128
        $region127: #{tpu_custom_call.1} parent=123 // pred_region
          %p977 = scmp.lt.s32.totalorder %s83, 1
          %s978 = scalar_select %p977, %s83, 1
          %s979 = smul.addr %s978, 8
          %s980 = scalar_lea.vmem %s1, %s979
        $region128: #{tpu_custom_call.1} parent=123 // pred_fallthru
          _
        // Predicated region
        $region129: #{tpu_custom_call.1} parent=123 // pred_check
          %p981 = pneg %p129
        $region130: #{tpu_custom_call.1} parent=123 // pred_check_branch
          %983 = sbr.rel (%p981) target = $region132
        $region131: #{tpu_custom_call.1} parent=123 // pred_region
          %p984 = scmp.lt.s32.totalorder %s83, 1
          %s985 = scalar_select %p984, %s83, 1
          %s986 = smul.addr %s985, 2
          %s987 = smul.addr %s986, 8
          %s988 = scalar_lea.vmem %s3, %s987
        $region132: #{tpu_custom_call.1} parent=123 // pred_fallthru
          _
        // Predicated region
        $region133: #{tpu_custom_call.1} parent=123 // pred_check
          %p989 = pneg %p155
        $region134: #{tpu_custom_call.1} parent=123 // pred_check_branch
          %991 = sbr.rel (%p989) target = $region136
        $region135: #{tpu_custom_call.1} parent=123 // pred_region
          %s992 = sand.u32 %s145, 1
          %s993 = scalar_lea.sflag [#allocation3], %s992
          %s994 = sand.u32 %s145, 1
          %s995 = scalar_lea.vmem [#allocation2], %s994
          %s997 = ssub.s32 16, 16
          %998 = vsyncadd %s993, %s997
          %s999 = smul.addr %s83, 16
          %s1000 = scalar_lea.hbm %s5, %s999
          %s1002 = sshll.u32 %s995, 4
          %s1003 = int_to_ptr.vmem [resolvable:$true] %s1002
          %1005 = dma.hbm_to_vmem [thread:$0]  %s1000, 16, %s1003, %s993
        $region136: #{tpu_custom_call.1} parent=123 // pred_fallthru
          _
        // Predicated region
        $region137: #{tpu_custom_call.1} parent=123 // pred_check
          %p1006 = pneg %p181
        $region138: #{tpu_custom_call.1} parent=123 // pred_check_branch
          %1008 = sbr.rel (%p1006) target = $region140
        $region139: #{tpu_custom_call.1} parent=123 // pred_region
          %s1009 = sand.u32 %s83, 1
          %s1010 = scalar_lea.sflag [#allocation6], %s1009
          %s1011 = sand.u32 %s171, 1
          %s1012 = scalar_lea.vmem [#allocation5], %s1011
          %s1014 = ssub.s32 16, 16
          %1015 = vsyncadd %s1010, %s1014
          %s1016 = smul.addr %s83, 16
          %s1017 = scalar_lea.hbm %s7, %s1016
          %s1019 = sshll.u32 %s1012, 4
          %s1020 = int_to_ptr.vmem [resolvable:$true] %s1019
          %1022 = dma.hbm_to_vmem [thread:$0]  %s1017, 16, %s1020, %s1010
        $region140: #{tpu_custom_call.1} parent=123 // pred_fallthru
          _
      $region124: #{tpu_custom_call.1} parent=5 // pred_fallthru
        _
      %p1023 = scmp.le.s32.totalorder 1, %s83
      %p1024 = scmp.lt.s32.totalorder %s83, 3
      %p1025 = pnand %p1023, %p1024
      %p1026 = pneg %p1025
      // Predicated region
      $region141: #{tpu_custom_call.1} parent=5 // pred_check
        _
      $region142: #{tpu_custom_call.1} parent=5 // pred_check_branch
        %1028 = sbr.rel (%p1025) target = $region144
      $region143: #{tpu_custom_call.1} parent=5 // pred_region
        %s1029 = ssub.s32 %s83, 1
        %s1030 = sand.u32 %s148, 1
        %s1031 = scalar_lea.sflag [#allocation3], %s1030
        %s1032 = sand.u32 %s148, 1
        %s1033 = scalar_lea.vmem [#allocation2], %s1032
        // Predicated region
        $region145: #{tpu_custom_call.1} parent=143 // pred_check
          %p1034 = pneg %p161
        $region146: #{tpu_custom_call.1} parent=143 // pred_check_branch
          %1036 = sbr.rel (%p1034) target = $region148
        $region147: #{tpu_custom_call.1} parent=143 // pred_region
          %1037 = dma.done %s1031, 16
        $region148: #{tpu_custom_call.1} parent=143 // pred_fallthru
          _
        %s1038 = sand.u32 %s88, 1
        %s1039 = scalar_lea.sflag [#allocation6], %s1038
        %s1040 = sand.u32 %s174, 1
        %s1041 = scalar_lea.vmem [#allocation5], %s1040
        // Predicated region
        $region149: #{tpu_custom_call.1} parent=143 // pred_check
          %p1042 = pneg %p187
        $region150: #{tpu_custom_call.1} parent=143 // pred_check_branch
          %1044 = sbr.rel (%p1042) target = $region152
        $region151: #{tpu_custom_call.1} parent=143 // pred_region
          %1045 = dma.done %s1039, 16
        $region152: #{tpu_custom_call.1} parent=143 // pred_fallthru
          _
        // Predicated region
        $region153: #{tpu_custom_call.1} parent=143 // pred_check
          %p1046 = pneg %p208
        $region154: #{tpu_custom_call.1} parent=143 // pred_check_branch
          %1048 = sbr.rel (%p1046) target = $region156
        $region155: #{tpu_custom_call.1} parent=143 // pred_region
          %1049 = dma.done [#allocation6], 64
        $region156: #{tpu_custom_call.1} parent=143 // pred_fallthru
          _
        // Predicated region
        $region157: #{tpu_custom_call.1} parent=143 // pred_check
          %p1050 = pneg %p250
        $region158: #{tpu_custom_call.1} parent=143 // pred_check_branch
          %1052 = sbr.rel (%p1050) target = $region160
        $region159: #{tpu_custom_call.1} parent=143 // pred_region
          %1053 = dma.done [#allocation9], 16
        $region160: #{tpu_custom_call.1} parent=143 // pred_fallthru
          _
        // Predicated region
        $region161: #{tpu_custom_call.1} parent=143 // pred_check
          %p1054 = pneg %p292
        $region162: #{tpu_custom_call.1} parent=143 // pred_check_branch
          %1056 = sbr.rel (%p1054) target = $region164
        $region163: #{tpu_custom_call.1} parent=143 // pred_region
          %1057 = dma.done [#allocation9], 16
        $region164: #{tpu_custom_call.1} parent=143 // pred_fallthru
          _
        // Predicated region
        $region165: #{tpu_custom_call.1} parent=143 // pred_check
          %p1058 = pneg %p334
        $region166: #{tpu_custom_call.1} parent=143 // pred_check_branch
          %1060 = sbr.rel (%p1058) target = $region168
        $region167: #{tpu_custom_call.1} parent=143 // pred_region
          %1061 = dma.done [#allocation12], 16
        $region168: #{tpu_custom_call.1} parent=143 // pred_fallthru
          _
        // Predicated region
        $region169: #{tpu_custom_call.1} parent=143 // pred_check
          %p1062 = pneg %p355
        $region170: #{tpu_custom_call.1} parent=143 // pred_check_branch
          %1064 = sbr.rel (%p1062) target = $region172
        $region171: #{tpu_custom_call.1} parent=143 // pred_region
          %1065 = dma.done [#allocation12], 256
        $region172: #{tpu_custom_call.1} parent=143 // pred_fallthru
          _
        // Predicated region
        $region173: #{tpu_custom_call.1} parent=143 // pred_check
          %p1066 = pneg %p376
        $region174: #{tpu_custom_call.1} parent=143 // pred_check_branch
          %1068 = sbr.rel (%p1066) target = $region176
        $region175: #{tpu_custom_call.1} parent=143 // pred_region
          %1069 = dma.done [#allocation15], 16
        $region176: #{tpu_custom_call.1} parent=143 // pred_fallthru
          _
        // Predicated region
        $region177: #{tpu_custom_call.1} parent=143 // pred_check
          %p1070 = pneg %p397
        $region178: #{tpu_custom_call.1} parent=143 // pred_check_branch
          %1072 = sbr.rel (%p1070) target = $region180
        $region179: #{tpu_custom_call.1} parent=143 // pred_region
          %1073 = dma.done [#allocation15], 16
        $region180: #{tpu_custom_call.1} parent=143 // pred_fallthru
          _
        // Predicated region
        $region181: #{tpu_custom_call.1} parent=143 // pred_check
          %p1074 = pneg %p418
        $region182: #{tpu_custom_call.1} parent=143 // pred_check_branch
          %1076 = sbr.rel (%p1074) target = $region184
        $region183: #{tpu_custom_call.1} parent=143 // pred_region
          %1077 = dma.done [#allocation18], 16
        $region184: #{tpu_custom_call.1} parent=143 // pred_fallthru
          _
        // Predicated region
        $region185: #{tpu_custom_call.1} parent=143 // pred_check
          %p1078 = pneg %p460
        $region186: #{tpu_custom_call.1} parent=143 // pred_check_branch
          %1080 = sbr.rel (%p1078) target = $region188
        $region187: #{tpu_custom_call.1} parent=143 // pred_region
          %1081 = dma.done [#allocation18], 16
        $region188: #{tpu_custom_call.1} parent=143 // pred_fallthru
          _
        // Predicated region
        $region189: #{tpu_custom_call.1} parent=143 // pred_check
          %p1082 = pneg %p523
        $region190: #{tpu_custom_call.1} parent=143 // pred_check_branch
          %1084 = sbr.rel (%p1082) target = $region192
        $region191: #{tpu_custom_call.1} parent=143 // pred_region
          %1085 = dma.done [#allocation21], 256
        $region192: #{tpu_custom_call.1} parent=143 // pred_fallthru
          _
        // Predicated region
        $region193: #{tpu_custom_call.1} parent=143 // pred_check
          %p1086 = pneg %p565
        $region194: #{tpu_custom_call.1} parent=143 // pred_check_branch
          %1088 = sbr.rel (%p1086) target = $region196
        $region195: #{tpu_custom_call.1} parent=143 // pred_region
          %1089 = dma.done [#allocation21], 256
        $region196: #{tpu_custom_call.1} parent=143 // pred_fallthru
          _
        %p1090 = scmp.lt.s32.totalorder %s88, 1
        %s1091 = scalar_select %p1090, %s88, 1
        %s1092 = smul.addr %s1091, 8
        %s1093 = scalar_lea.vmem %s1, %s1092
        %p1094 = pneg %p109
        %p1095 = pneg %p106
        %p1096 = scmp.lt.s32.totalorder %s88, 1
        %s1097 = scalar_select %p1096, %s88, 1
        %s1098 = smul.addr %s1097, 2
        %s1099 = smul.addr %s1098, 8
        %s1100 = scalar_lea.vmem %s3, %s1099
        %p1101 = pneg %p135
        %p1102 = pneg %p132
        %s1103 = sand.u32 %s148, 1
        %s1104 = scalar_lea.sflag [#allocation3], %s1103
        %s1105 = sand.u32 %s148, 1
        %s1106 = scalar_lea.vmem [#allocation2], %s1105
        %p1107 = pneg %p161
        %p1108 = pneg %p158
        %s1109 = sand.u32 %s88, 1
        %s1110 = scalar_lea.sflag [#allocation6], %s1109
        %s1111 = sand.u32 %s174, 1
        %s1112 = scalar_lea.vmem [#allocation5], %s1111
        %p1113 = pneg %p187
        %p1114 = pneg %p184
        %p1115 = pneg %p208
        %p1116 = pneg %p205
        %p1117 = pneg %p229
        %p1118 = pneg %p226
        %p1119 = pneg %p250
        %p1120 = pneg %p247
        %p1121 = pneg %p271
        %p1122 = pneg %p268
        %p1123 = pneg %p292
        %p1124 = pneg %p289
        %p1125 = pneg %p313
        %p1126 = pneg %p310
        %p1127 = pneg %p334
        %p1128 = pneg %p331
        %p1129 = pneg %p355
        %p1130 = pneg %p352
        %p1131 = pneg %p376
        %p1132 = pneg %p373
        %p1133 = pneg %p397
        %p1134 = pneg %p394
        %p1135 = pneg %p418
        %p1136 = pneg %p415
        %p1137 = pneg %p439
        %p1138 = pneg %p436
        %p1139 = pneg %p460
        %p1140 = pneg %p457
        %p1141 = pneg %p481
        %p1142 = pneg %p478
        %p1143 = pneg %p502
        %p1144 = pneg %p499
        %p1145 = pneg %p523
        %p1146 = pneg %p520
        %p1147 = pneg %p544
        %p1148 = pneg %p541
        %p1149 = pneg %p565
        %p1150 = pneg %p562
        %p1151 = pneg %p586
        %p1152 = pneg %p583
        %p1153 = pneg %p607
        %p1154 = pneg %p604
        %p1155 = pneg %p628
        %p1156 = pneg %p625
        %p1157 = pneg %p649
        %p1158 = pneg %p646
        %p1159 = pneg %p670
        %p1160 = pneg %p667
        %p1161 = pneg %p691
        %p1162 = pneg %p688
        %p1163 = pneg %p712
        %p1164 = pneg %p709
        %p1165 = pneg %p733
        %p1166 = pneg %p730
        %p1167 = pneg %p754
        %p1168 = pneg %p751
        %p1169 = pneg %p780
        %p1170 = pneg %p777
        %s1171 = sand.u32 %s767, 1
        %s1172 = scalar_lea.sflag [#allocation4], %s1171
        %s1173 = sand.u32 %s767, 1
        %s1174 = smul.addr %s1173, 8
        %s1175 = scalar_lea.vmem [#allocation23], %s1174
        %p1176 = scmp.lt.s32.totalorder %s88, 1
        %s1177 = scalar_select %p1176, %s88, 1
        %s1178 = smul.addr %s1177, 8
        %s1179 = scalar_lea.vmem %s1, %s1178
        %p1180 = scmp.lt.s32.totalorder %s88, 1
        %s1181 = scalar_select %p1180, %s88, 1
        %s1182 = smul.addr %s1181, 2
        %s1183 = smul.addr %s1182, 8
        %s1184 = scalar_lea.vmem %s3, %s1183
        %v1186 = vld [vmem:[%s1179] sm:$0xff]
        %v1187 = vld [vmem:[%s1184] sm:$0xff]
        %v1188 = vld [vmem:[%s1184 + $0x8] sm:$0xff]
        %v1189 = vld [vmem:[%s1033] sm:$0x1]
        %v1190 = vld [vmem:[%s1041] sm:$0x1]
        %v1191 = vld [vmem:[#allocation7] sm:$0xf]
        %v1192 = vpack.c.bf16 %v1186, %v1186
        %v1193 = vld [vmem:[%s11] sm:$0xf]
        %v1194 = vld [vmem:[%s11 + $0x4] sm:$0xf]
        %v1195 = vld [vmem:[%s11 + $0x8] sm:$0xf]
        %v1196 = vld [vmem:[%s11 + $0xc] sm:$0xf]
        %v1197 = vld [vmem:[#allocation8] sm:$0x1]
        %v1199 = vlaneseq
        %v1200 = vshrl.u32 %v1199, 7
        %v1201 = vsub.s32 0, %v1200
        %v1202 = vrot.slane %v1197, %v1201
        %v1208 = vunpack.c.l.b16 %v1193
        %v1209 = vunpack.c.l.b16 %v1194
        %v1210 = vunpack.c.l.b16 %v1195
        %v1211 = vunpack.c.l.b16 %v1196
        %v1212 = vpack.c.b16 %v1209, %v1208
        %v1213 = vpack.c.b16 %v1211, %v1210
        %vm1216 = vcmask 261120
        %v1218 = vsel %vm1216, %v1192, 0
        %1220 = vmatprep.subr.bf16.mxu0 0
        %1221 = vmatpush1.bf16.msra.mxu0 %v1212
        %1222 = vmatprep.subr.bf16.mxu0 0
        %1223 = vmatpush1.bf16.msra.mxu0 %v1213
        %1224 = vmatprep.subr.bf16.mxu0 0
        %1225 = vmatpush1.bf16.msra.mxu0 0
        %1226 = vmatprep.subr.bf16.mxu0 0
        %1227 = vmatpush1.bf16.msra.mxu0 0
        %1228 = vmatprep.subr.bf16.mxu0 0
        %1229 = vmatpush1.bf16.msra.mxu0 0
        %1230 = vmatprep.subr.bf16.mxu0 0
        %1231 = vmatpush1.bf16.msra.mxu0 0
        %1232 = vmatprep.subr.bf16.mxu0 0
        %1233 = vmatpush1.bf16.msra.mxu0 0
        %1234 = vmatprep.subr.bf16.mxu0 0
        %1235 = vmatpush1.bf16.msra.mxu0 0
        %1236 = vmatprep.subr.bf16.mxu0 0
        %1237 = vmatpush1.bf16.msra.mxu0 0
        %1238 = vmatprep.subr.bf16.mxu0 0
        %1239 = vmatpush1.bf16.msra.mxu0 0
        %1240 = vmatprep.subr.bf16.mxu0 0
        %1241 = vmatpush1.bf16.msra.mxu0 0
        %1242 = vmatprep.subr.bf16.mxu0 0
        %1243 = vmatpush1.bf16.msra.mxu0 0
        %1244 = vmatprep.subr.bf16.mxu0 0
        %1245 = vmatpush1.bf16.msra.mxu0 0
        %1246 = vmatprep.subr.bf16.mxu0 0
        %1247 = vmatpush1.bf16.msra.mxu0 0
        %1248 = vmatprep.subr.bf16.mxu0 0
        %1249 = vmatpush1.bf16.msra.mxu0 0
        %1250 = vmatprep.subr.bf16.mxu0 0
        %1251 = vmatpush1.bf16.msra.mxu0 0
        %1252 = vmatprep.mubr.bf16.mxu0 0
        %1253 = vmatmul.mubr.bf16.gmra.mrb[0].mxu0 %v1218
        %v1254 = vpop.f32.mrb[0].mxu0
        %v1255 = vadd.f32 %v1202, %v1254
        %v1256 = vpop.f32.mrb[0].mxu0
        %v1257 = vpop.f32.mrb[0].mxu0
        %v1258 = vpop.f32.mrb[0].mxu0
        %1259 = vdwg.mxu0
        %v1260 = vld [vmem:[%s15] sm:$0xf]
        %v1261 = vld [vmem:[%s15 + $0x4] sm:$0xf]
        %v1262 = vld [vmem:[%s15 + $0x8] sm:$0xf]
        %v1263 = vld [vmem:[%s15 + $0xc] sm:$0xf]
        %v1264 = vld [vmem:[#allocation10] sm:$0x1]
        %v1266 = vlaneseq
        %v1267 = vshrl.u32 %v1266, 7
        %v1268 = vsub.s32 0, %v1267
        %v1269 = vrot.slane %v1264, %v1268
        %v1275 = vunpack.c.l.b16 %v1260
        %v1276 = vunpack.c.l.b16 %v1261
        %v1277 = vunpack.c.l.b16 %v1262
        %v1278 = vunpack.c.l.b16 %v1263
        %v1279 = vpack.c.b16 %v1276, %v1275
        %v1280 = vpack.c.b16 %v1278, %v1277
        %1283 = vmatprep.subr.bf16.mxu0 0
        %1284 = vmatpush1.bf16.msra.mxu0 %v1279
        %1285 = vmatprep.subr.bf16.mxu0 0
        %1286 = vmatpush1.bf16.msra.mxu0 %v1280
        %1287 = vmatprep.subr.bf16.mxu0 0
        %1288 = vmatpush1.bf16.msra.mxu0 0
        %1289 = vmatprep.subr.bf16.mxu0 0
        %1290 = vmatpush1.bf16.msra.mxu0 0
        %1291 = vmatprep.subr.bf16.mxu0 0
        %1292 = vmatpush1.bf16.msra.mxu0 0
        %1293 = vmatprep.subr.bf16.mxu0 0
        %1294 = vmatpush1.bf16.msra.mxu0 0
        %1295 = vmatprep.subr.bf16.mxu0 0
        %1296 = vmatpush1.bf16.msra.mxu0 0
        %1297 = vmatprep.subr.bf16.mxu0 0
        %1298 = vmatpush1.bf16.msra.mxu0 0
        %1299 = vmatprep.subr.bf16.mxu0 0
        %1300 = vmatpush1.bf16.msra.mxu0 0
        %1301 = vmatprep.subr.bf16.mxu0 0
        %1302 = vmatpush1.bf16.msra.mxu0 0
        %1303 = vmatprep.subr.bf16.mxu0 0
        %1304 = vmatpush1.bf16.msra.mxu0 0
        %1305 = vmatprep.subr.bf16.mxu0 0
        %1306 = vmatpush1.bf16.msra.mxu0 0
        %1307 = vmatprep.subr.bf16.mxu0 0
        %1308 = vmatpush1.bf16.msra.mxu0 0
        %1309 = vmatprep.subr.bf16.mxu0 0
        %1310 = vmatpush1.bf16.msra.mxu0 0
        %1311 = vmatprep.subr.bf16.mxu0 0
        %1312 = vmatpush1.bf16.msra.mxu0 0
        %1313 = vmatprep.subr.bf16.mxu0 0
        %1314 = vmatpush1.bf16.msra.mxu0 0
        %1315 = vmatprep.mubr.bf16.mxu0 0
        %1316 = vmatmul.mubr.bf16.gmra.mrb[0].mxu0 %v1218
        %v1317 = vpop.f32.mrb[0].mxu0
        %v1318 = vadd.f32 %v1269, %v1317
        %v1319 = vpop.f32.mrb[0].mxu0
        %v1320 = vpop.f32.mrb[0].mxu0
        %v1321 = vpop.f32.mrb[0].mxu0
        %1322 = vdwg.mxu0
        %v1323 = vld [vmem:[%s19] sm:$0xf]
        %v1324 = vld [vmem:[%s19 + $0x4] sm:$0xf]
        %v1325 = vld [vmem:[%s19 + $0x8] sm:$0xf]
        %v1326 = vld [vmem:[%s19 + $0xc] sm:$0xf]
        %v1327 = vld [vmem:[#allocation11] sm:$0x1]
        %v1329 = vlaneseq
        %v1330 = vshrl.u32 %v1329, 7
        %v1331 = vsub.s32 0, %v1330
        %v1332 = vrot.slane %v1327, %v1331
        %v1338 = vunpack.c.l.b16 %v1323
        %v1339 = vunpack.c.l.b16 %v1324
        %v1340 = vunpack.c.l.b16 %v1325
        %v1341 = vunpack.c.l.b16 %v1326
        %v1342 = vpack.c.b16 %v1339, %v1338
        %v1343 = vpack.c.b16 %v1341, %v1340
        %1346 = vmatprep.subr.bf16.mxu0 0
        %1347 = vmatpush1.bf16.msra.mxu0 %v1342
        %1348 = vmatprep.subr.bf16.mxu0 0
        %1349 = vmatpush1.bf16.msra.mxu0 %v1343
        %1350 = vmatprep.subr.bf16.mxu0 0
        %1351 = vmatpush1.bf16.msra.mxu0 0
        %1352 = vmatprep.subr.bf16.mxu0 0
        %1353 = vmatpush1.bf16.msra.mxu0 0
        %1354 = vmatprep.subr.bf16.mxu0 0
        %1355 = vmatpush1.bf16.msra.mxu0 0
        %1356 = vmatprep.subr.bf16.mxu0 0
        %1357 = vmatpush1.bf16.msra.mxu0 0
        %1358 = vmatprep.subr.bf16.mxu0 0
        %1359 = vmatpush1.bf16.msra.mxu0 0
        %1360 = vmatprep.subr.bf16.mxu0 0
        %1361 = vmatpush1.bf16.msra.mxu0 0
        %1362 = vmatprep.subr.bf16.mxu0 0
        %1363 = vmatpush1.bf16.msra.mxu0 0
        %1364 = vmatprep.subr.bf16.mxu0 0
        %1365 = vmatpush1.bf16.msra.mxu0 0
        %1366 = vmatprep.subr.bf16.mxu0 0
        %1367 = vmatpush1.bf16.msra.mxu0 0
        %1368 = vmatprep.subr.bf16.mxu0 0
        %1369 = vmatpush1.bf16.msra.mxu0 0
        %1370 = vmatprep.subr.bf16.mxu0 0
        %1371 = vmatpush1.bf16.msra.mxu0 0
        %1372 = vmatprep.subr.bf16.mxu0 0
        %1373 = vmatpush1.bf16.msra.mxu0 0
        %1374 = vmatprep.subr.bf16.mxu0 0
        %1375 = vmatpush1.bf16.msra.mxu0 0
        %1376 = vmatprep.subr.bf16.mxu0 0
        %1377 = vmatpush1.bf16.msra.mxu0 0
        %1378 = vmatprep.mubr.bf16.mxu0 0
        %1379 = vmatmul.mubr.bf16.gmra.mrb[0].mxu0 %v1218
        %v1380 = vpop.f32.mrb[0].mxu0
        %v1381 = vadd.f32 %v1332, %v1380
        %v1382 = vpop.f32.mrb[0].mxu0
        %v1383 = vpop.f32.mrb[0].mxu0
        %v1384 = vpop.f32.mrb[0].mxu0
        %1385 = vdwg.mxu0
        %v1386 = vpack.c.bf16 %v1318, %v1318
        %v1387 = vlaneseq
        %v1388 = vshrl.u32 %v1387, 7
        %v1389 = vsub.s32 0, %v1388
        %v1390 = vrot.slane %v1191, %v1389
        %v1391 = vmul.f32 %v1255, %v1390
        %v1392 = vpack.c.bf16 %v1391, %v1391
        %v1394 = vlaneseq
        %v1395 = vshrl.u32 %v1394, 7
        %v1396 = vsub.s32 0, %v1395
        %v1397 = vrot.slane %v1189, %v1396
        %v1400 = vsel %vm1216, %v1392, 0
        %v1403 = vsel %vm1216, %v1386, 0
        %1405 = vmatprep.subr.bf16.mxu0 0
        %1406 = vmatpush1.bf16.xpose.msra.mxu0 %v1403
        %1407 = vmatprep.subr.bf16.mxu0 0
        %1408 = vmatpush1.bf16.xpose.msra.mxu0 0
        %1409 = vmatprep.subr.bf16.mxu0 0
        %1410 = vmatpush1.bf16.xpose.msra.mxu0 0
        %1411 = vmatprep.subr.bf16.mxu0 0
        %1412 = vmatpush1.bf16.xpose.msra.mxu0 0
        %1413 = vmatprep.subr.bf16.mxu0 0
        %1414 = vmatpush1.bf16.xpose.msra.mxu0 0
        %1415 = vmatprep.subr.bf16.mxu0 0
        %1416 = vmatpush1.bf16.xpose.msra.mxu0 0
        %1417 = vmatprep.subr.bf16.mxu0 0
        %1418 = vmatpush1.bf16.xpose.msra.mxu0 0
        %1419 = vmatprep.subr.bf16.mxu0 0
        %1420 = vmatpush1.bf16.xpose.msra.mxu0 0
        %1421 = vmatprep.subr.bf16.mxu0 0
        %1422 = vmatpush1.bf16.xpose.msra.mxu0 0
        %1423 = vmatprep.subr.bf16.mxu0 0
        %1424 = vmatpush1.bf16.xpose.msra.mxu0 0
        %1425 = vmatprep.subr.bf16.mxu0 0
        %1426 = vmatpush1.bf16.xpose.msra.mxu0 0
        %1427 = vmatprep.subr.bf16.mxu0 0
        %1428 = vmatpush1.bf16.xpose.msra.mxu0 0
        %1429 = vmatprep.subr.bf16.mxu0 0
        %1430 = vmatpush1.bf16.xpose.msra.mxu0 0
        %1431 = vmatprep.subr.bf16.mxu0 0
        %1432 = vmatpush1.bf16.xpose.msra.mxu0 0
        %1433 = vmatprep.subr.bf16.mxu0 0
        %1434 = vmatpush1.bf16.xpose.msra.mxu0 0
        %1435 = vmatprep.subr.bf16.mxu0 0
        %1436 = vmatpush1.bf16.xpose.msra.mxu0 0
        %1437 = vmatprep.mubr.bf16.mxu0 0
        %1438 = vmatmul.mubr.bf16.gmra.mrb[0].mxu0 %v1400
        %v1439 = vpop.f32.mrb[0].mxu0
        %v1440 = vadd.f32 %v1397, %v1439
        %v1441 = vpop.f32.mrb[0].mxu0
        %v1442 = vpop.f32.mrb[0].mxu0
        %v1443 = vpop.f32.mrb[0].mxu0
        %1444 = vdwg.mxu0
        %vm1445 = vcmask 64512
        %v1446 = vsel %vm1445, %v1440, -inf
        %1447 = vmax.xlane.f32.xlu0 %v1446
        %v1448 = vpop.xlane.xlu0 %1447
        %v1449 = vsub.f32 %v1440, %v1448
        %v1450 = vmul.f32 %v1449, 1.442695
        %v1451 = vpow.pop %v1450
        %v1452 = vsel %vm1445, %v1451, 0.0
        %1453 = vadd.xlane.f32.xlu0 %v1452
        %v1454 = vpop.xlane.xlu0 %1453
        %v1455 = vrcp.pop %v1454
        %v1456 = vmul.f32 %v1451, %v1455
        %v1457 = vpack.c.bf16 %v1456, %v1456
        %v1458 = vmul.f32 %v1381, %v1390
        %v1459 = vpack.c.bf16 %v1458, %v1458
        %v1460 = vlaneseq
        %v1461 = vshrl.u32 %v1460, 7
        %v1462 = vsub.s32 1, %v1461
        %v1463 = vrot.slane %v1191, %v1462
        %v1464 = vmul.f32 %v1255, %v1463
        %v1465 = vpack.c.bf16 %v1464, %v1464
        %v1467 = vsel %vm1216, %v1465, 0
        %1469 = vmatprep.subr.bf16.mxu0 0
        %1470 = vmatpush1.bf16.xpose.msra.mxu0 %v1403
        %1471 = vmatprep.subr.bf16.mxu0 0
        %1472 = vmatpush1.bf16.xpose.msra.mxu0 0
        %1473 = vmatprep.subr.bf16.mxu0 0
        %1474 = vmatpush1.bf16.xpose.msra.mxu0 0
        %1475 = vmatprep.subr.bf16.mxu0 0
        %1476 = vmatpush1.bf16.xpose.msra.mxu0 0
        %1477 = vmatprep.subr.bf16.mxu0 0
        %1478 = vmatpush1.bf16.xpose.msra.mxu0 0
        %1479 = vmatprep.subr.bf16.mxu0 0
        %1480 = vmatpush1.bf16.xpose.msra.mxu0 0
        %1481 = vmatprep.subr.bf16.mxu0 0
        %1482 = vmatpush1.bf16.xpose.msra.mxu0 0
        %1483 = vmatprep.subr.bf16.mxu0 0
        %1484 = vmatpush1.bf16.xpose.msra.mxu0 0
        %1485 = vmatprep.subr.bf16.mxu0 0
        %1486 = vmatpush1.bf16.xpose.msra.mxu0 0
        %1487 = vmatprep.subr.bf16.mxu0 0
        %1488 = vmatpush1.bf16.xpose.msra.mxu0 0
        %1489 = vmatprep.subr.bf16.mxu0 0
        %1490 = vmatpush1.bf16.xpose.msra.mxu0 0
        %1491 = vmatprep.subr.bf16.mxu0 0
        %1492 = vmatpush1.bf16.xpose.msra.mxu0 0
        %1493 = vmatprep.subr.bf16.mxu0 0
        %1494 = vmatpush1.bf16.xpose.msra.mxu0 0
        %1495 = vmatprep.subr.bf16.mxu0 0
        %1496 = vmatpush1.bf16.xpose.msra.mxu0 0
        %1497 = vmatprep.subr.bf16.mxu0 0
        %1498 = vmatpush1.bf16.xpose.msra.mxu0 0
        %1499 = vmatprep.subr.bf16.mxu0 0
        %1500 = vmatpush1.bf16.xpose.msra.mxu0 0
        %1501 = vmatprep.mubr.bf16.mxu0 0
        %1502 = vmatmul.mubr.bf16.gmra.mrb[0].mxu0 %v1467
        %v1503 = vpop.f32.mrb[0].mxu0
        %v1504 = vadd.f32 %v1397, %v1503
        %v1505 = vpop.f32.mrb[0].mxu0
        %v1506 = vpop.f32.mrb[0].mxu0
        %v1507 = vpop.f32.mrb[0].mxu0
        %1508 = vdwg.mxu0
        %v1509 = vsel %vm1445, %v1504, -inf
        %1510 = vmax.xlane.f32.xlu0 %v1509
        %v1511 = vpop.xlane.xlu0 %1510
        %v1512 = vsub.f32 %v1504, %v1511
        %v1513 = vmul.f32 %v1512, 1.442695
        %v1514 = vpow.pop %v1513
        %v1515 = vsel %vm1445, %v1514, 0.0
        %1516 = vadd.xlane.f32.xlu0 %v1515
        %v1517 = vpop.xlane.xlu0 %1516
        %v1518 = vrcp.pop %v1517
        %v1519 = vmul.f32 %v1514, %v1518
        %v1520 = vpack.c.bf16 %v1519, %v1519
        %v1521 = vmul.f32 %v1381, %v1463
        %v1522 = vpack.c.bf16 %v1521, %v1521
        %v1524 = vsel %vm1445, %v1520, 0
        %vm1526 = vcmask 1043456
        %v1528 = vsel %vm1526, %v1522, 0
        %1530 = vmatprep.subr.bf16.mxu0 0
        %1531 = vmatpush1.bf16.msra.mxu0 %v1528
        %1532 = vmatprep.subr.bf16.mxu0 0
        %1533 = vmatpush1.bf16.msra.mxu0 0
        %1534 = vmatprep.subr.bf16.mxu0 0
        %1535 = vmatpush1.bf16.msra.mxu0 0
        %1536 = vmatprep.subr.bf16.mxu0 0
        %1537 = vmatpush1.bf16.msra.mxu0 0
        %1538 = vmatprep.subr.bf16.mxu0 0
        %1539 = vmatpush1.bf16.msra.mxu0 0
        %1540 = vmatprep.subr.bf16.mxu0 0
        %1541 = vmatpush1.bf16.msra.mxu0 0
        %1542 = vmatprep.subr.bf16.mxu0 0
        %1543 = vmatpush1.bf16.msra.mxu0 0
        %1544 = vmatprep.subr.bf16.mxu0 0
        %1545 = vmatpush1.bf16.msra.mxu0 0
        %1546 = vmatprep.subr.bf16.mxu0 0
        %1547 = vmatpush1.bf16.msra.mxu0 0
        %1548 = vmatprep.subr.bf16.mxu0 0
        %1549 = vmatpush1.bf16.msra.mxu0 0
        %1550 = vmatprep.subr.bf16.mxu0 0
        %1551 = vmatpush1.bf16.msra.mxu0 0
        %1552 = vmatprep.subr.bf16.mxu0 0
        %1553 = vmatpush1.bf16.msra.mxu0 0
        %1554 = vmatprep.subr.bf16.mxu0 0
        %1555 = vmatpush1.bf16.msra.mxu0 0
        %1556 = vmatprep.subr.bf16.mxu0 0
        %1557 = vmatpush1.bf16.msra.mxu0 0
        %1558 = vmatprep.subr.bf16.mxu0 0
        %1559 = vmatpush1.bf16.msra.mxu0 0
        %1560 = vmatprep.subr.bf16.mxu0 0
        %1561 = vmatpush1.bf16.msra.mxu0 0
        %1562 = vmatprep.mubr.bf16.mxu0 0
        %1563 = vmatmul.mubr.bf16.gmra.mrb[0].mxu0 %v1524
        %v1564 = vpop.f32.mrb[0].mxu0
        %v1565 = vadd.f32 0.0, %v1564
        %v1566 = vpop.f32.mrb[0].mxu0
        %v1567 = vpop.f32.mrb[0].mxu0
        %v1568 = vpop.f32.mrb[0].mxu0
        %1569 = vdwg.mxu0
        %v1571 = vsel %vm1445, %v1457, 0
        %v1574 = vsel %vm1526, %v1459, 0
        %1576 = vmatprep.subr.bf16.mxu0 0
        %1577 = vmatpush1.bf16.msra.mxu0 %v1574
        %1578 = vmatprep.subr.bf16.mxu0 0
        %1579 = vmatpush1.bf16.msra.mxu0 0
        %1580 = vmatprep.subr.bf16.mxu0 0
        %1581 = vmatpush1.bf16.msra.mxu0 0
        %1582 = vmatprep.subr.bf16.mxu0 0
        %1583 = vmatpush1.bf16.msra.mxu0 0
        %1584 = vmatprep.subr.bf16.mxu0 0
        %1585 = vmatpush1.bf16.msra.mxu0 0
        %1586 = vmatprep.subr.bf16.mxu0 0
        %1587 = vmatpush1.bf16.msra.mxu0 0
        %1588 = vmatprep.subr.bf16.mxu0 0
        %1589 = vmatpush1.bf16.msra.mxu0 0
        %1590 = vmatprep.subr.bf16.mxu0 0
        %1591 = vmatpush1.bf16.msra.mxu0 0
        %1592 = vmatprep.subr.bf16.mxu0 0
        %1593 = vmatpush1.bf16.msra.mxu0 0
        %1594 = vmatprep.subr.bf16.mxu0 0
        %1595 = vmatpush1.bf16.msra.mxu0 0
        %1596 = vmatprep.subr.bf16.mxu0 0
        %1597 = vmatpush1.bf16.msra.mxu0 0
        %1598 = vmatprep.subr.bf16.mxu0 0
        %1599 = vmatpush1.bf16.msra.mxu0 0
        %1600 = vmatprep.subr.bf16.mxu0 0
        %1601 = vmatpush1.bf16.msra.mxu0 0
        %1602 = vmatprep.subr.bf16.mxu0 0
        %1603 = vmatpush1.bf16.msra.mxu0 0
        %1604 = vmatprep.subr.bf16.mxu0 0
        %1605 = vmatpush1.bf16.msra.mxu0 0
        %1606 = vmatprep.subr.bf16.mxu0 0
        %1607 = vmatpush1.bf16.msra.mxu0 0
        %1608 = vmatprep.mubr.bf16.mxu0 0
        %1609 = vmatmul.mubr.bf16.gmra.mrb[0].mxu0 %v1571
        %v1610 = vpop.f32.mrb[0].mxu0
        %v1611 = vadd.f32 %v1565, %v1610
        %v1612 = vpop.f32.mrb[0].mxu0
        %v1613 = vpop.f32.mrb[0].mxu0
        %v1614 = vpop.f32.mrb[0].mxu0
        %1615 = vdwg.mxu0
        %v1616 = vlaneseq
        %v1617 = vshrl.u32 %v1616, 7
        %v1618 = vsub.s32 2, %v1617
        %v1619 = vrot.slane %v1191, %v1618
        %v1620 = vmul.f32 %v1255, %v1619
        %v1621 = vpack.c.bf16 %v1620, %v1620
        %v1623 = vsel %vm1216, %v1621, 0
        %1625 = vmatprep.subr.bf16.mxu0 0
        %1626 = vmatpush1.bf16.xpose.msra.mxu0 %v1403
        %1627 = vmatprep.subr.bf16.mxu0 0
        %1628 = vmatpush1.bf16.xpose.msra.mxu0 0
        %1629 = vmatprep.subr.bf16.mxu0 0
        %1630 = vmatpush1.bf16.xpose.msra.mxu0 0
        %1631 = vmatprep.subr.bf16.mxu0 0
        %1632 = vmatpush1.bf16.xpose.msra.mxu0 0
        %1633 = vmatprep.subr.bf16.mxu0 0
        %1634 = vmatpush1.bf16.xpose.msra.mxu0 0
        %1635 = vmatprep.subr.bf16.mxu0 0
        %1636 = vmatpush1.bf16.xpose.msra.mxu0 0
        %1637 = vmatprep.subr.bf16.mxu0 0
        %1638 = vmatpush1.bf16.xpose.msra.mxu0 0
        %1639 = vmatprep.subr.bf16.mxu0 0
        %1640 = vmatpush1.bf16.xpose.msra.mxu0 0
        %1641 = vmatprep.subr.bf16.mxu0 0
        %1642 = vmatpush1.bf16.xpose.msra.mxu0 0
        %1643 = vmatprep.subr.bf16.mxu0 0
        %1644 = vmatpush1.bf16.xpose.msra.mxu0 0
        %1645 = vmatprep.subr.bf16.mxu0 0
        %1646 = vmatpush1.bf16.xpose.msra.mxu0 0
        %1647 = vmatprep.subr.bf16.mxu0 0
        %1648 = vmatpush1.bf16.xpose.msra.mxu0 0
        %1649 = vmatprep.subr.bf16.mxu0 0
        %1650 = vmatpush1.bf16.xpose.msra.mxu0 0
        %1651 = vmatprep.subr.bf16.mxu0 0
        %1652 = vmatpush1.bf16.xpose.msra.mxu0 0
        %1653 = vmatprep.subr.bf16.mxu0 0
        %1654 = vmatpush1.bf16.xpose.msra.mxu0 0
        %1655 = vmatprep.subr.bf16.mxu0 0
        %1656 = vmatpush1.bf16.xpose.msra.mxu0 0
        %1657 = vmatprep.mubr.bf16.mxu0 0
        %1658 = vmatmul.mubr.bf16.gmra.mrb[0].mxu0 %v1623
        %v1659 = vpop.f32.mrb[0].mxu0
        %v1660 = vadd.f32 %v1397, %v1659
        %v1661 = vpop.f32.mrb[0].mxu0
        %v1662 = vpop.f32.mrb[0].mxu0
        %v1663 = vpop.f32.mrb[0].mxu0
        %1664 = vdwg.mxu0
        %v1665 = vsel %vm1445, %v1660, -inf
        %1666 = vmax.xlane.f32.xlu0 %v1665
        %v1667 = vpop.xlane.xlu0 %1666
        %v1668 = vsub.f32 %v1660, %v1667
        %v1669 = vmul.f32 %v1668, 1.442695
        %v1670 = vpow.pop %v1669
        %v1671 = vsel %vm1445, %v1670, 0.0
        %1672 = vadd.xlane.f32.xlu0 %v1671
        %v1673 = vpop.xlane.xlu0 %1672
        %v1674 = vrcp.pop %v1673
        %v1675 = vmul.f32 %v1670, %v1674
        %v1676 = vpack.c.bf16 %v1675, %v1675
        %v1677 = vmul.f32 %v1381, %v1619
        %v1678 = vpack.c.bf16 %v1677, %v1677
        %v1680 = vsel %vm1445, %v1676, 0
        %v1683 = vsel %vm1526, %v1678, 0
        %1685 = vmatprep.subr.bf16.mxu0 0
        %1686 = vmatpush1.bf16.msra.mxu0 %v1683
        %1687 = vmatprep.subr.bf16.mxu0 0
        %1688 = vmatpush1.bf16.msra.mxu0 0
        %1689 = vmatprep.subr.bf16.mxu0 0
        %1690 = vmatpush1.bf16.msra.mxu0 0
        %1691 = vmatprep.subr.bf16.mxu0 0
        %1692 = vmatpush1.bf16.msra.mxu0 0
        %1693 = vmatprep.subr.bf16.mxu0 0
        %1694 = vmatpush1.bf16.msra.mxu0 0
        %1695 = vmatprep.subr.bf16.mxu0 0
        %1696 = vmatpush1.bf16.msra.mxu0 0
        %1697 = vmatprep.subr.bf16.mxu0 0
        %1698 = vmatpush1.bf16.msra.mxu0 0
        %1699 = vmatprep.subr.bf16.mxu0 0
        %1700 = vmatpush1.bf16.msra.mxu0 0
        %1701 = vmatprep.subr.bf16.mxu0 0
        %1702 = vmatpush1.bf16.msra.mxu0 0
        %1703 = vmatprep.subr.bf16.mxu0 0
        %1704 = vmatpush1.bf16.msra.mxu0 0
        %1705 = vmatprep.subr.bf16.mxu0 0
        %1706 = vmatpush1.bf16.msra.mxu0 0
        %1707 = vmatprep.subr.bf16.mxu0 0
        %1708 = vmatpush1.bf16.msra.mxu0 0
        %1709 = vmatprep.subr.bf16.mxu0 0
        %1710 = vmatpush1.bf16.msra.mxu0 0
        %1711 = vmatprep.subr.bf16.mxu0 0
        %1712 = vmatpush1.bf16.msra.mxu0 0
        %1713 = vmatprep.subr.bf16.mxu0 0
        %1714 = vmatpush1.bf16.msra.mxu0 0
        %1715 = vmatprep.subr.bf16.mxu0 0
        %1716 = vmatpush1.bf16.msra.mxu0 0
        %1717 = vmatprep.mubr.bf16.mxu0 0
        %1718 = vmatmul.mubr.bf16.gmra.mrb[0].mxu0 %v1680
        %v1719 = vpop.f32.mrb[0].mxu0
        %v1720 = vadd.f32 0.0, %v1719
        %v1721 = vpop.f32.mrb[0].mxu0
        %v1722 = vpop.f32.mrb[0].mxu0
        %v1723 = vpop.f32.mrb[0].mxu0
        %1724 = vdwg.mxu0
        %v1725 = vadd.f32 %v1611, %v1720
        %v1726 = vlaneseq
        %v1727 = vshrl.u32 %v1726, 7
        %v1728 = vsub.s32 3, %v1727
        %v1729 = vrot.slane %v1191, %v1728
        %v1730 = vmul.f32 %v1255, %v1729
        %v1731 = vpack.c.bf16 %v1730, %v1730
        %v1733 = vsel %vm1216, %v1731, 0
        %1735 = vmatprep.subr.bf16.mxu0 0
        %1736 = vmatpush1.bf16.xpose.msra.mxu0 %v1403
        %1737 = vmatprep.subr.bf16.mxu0 0
        %1738 = vmatpush1.bf16.xpose.msra.mxu0 0
        %1739 = vmatprep.subr.bf16.mxu0 0
        %1740 = vmatpush1.bf16.xpose.msra.mxu0 0
        %1741 = vmatprep.subr.bf16.mxu0 0
        %1742 = vmatpush1.bf16.xpose.msra.mxu0 0
        %1743 = vmatprep.subr.bf16.mxu0 0
        %1744 = vmatpush1.bf16.xpose.msra.mxu0 0
        %1745 = vmatprep.subr.bf16.mxu0 0
        %1746 = vmatpush1.bf16.xpose.msra.mxu0 0
        %1747 = vmatprep.subr.bf16.mxu0 0
        %1748 = vmatpush1.bf16.xpose.msra.mxu0 0
        %1749 = vmatprep.subr.bf16.mxu0 0
        %1750 = vmatpush1.bf16.xpose.msra.mxu0 0
        %1751 = vmatprep.subr.bf16.mxu0 0
        %1752 = vmatpush1.bf16.xpose.msra.mxu0 0
        %1753 = vmatprep.subr.bf16.mxu0 0
        %1754 = vmatpush1.bf16.xpose.msra.mxu0 0
        %1755 = vmatprep.subr.bf16.mxu0 0
        %1756 = vmatpush1.bf16.xpose.msra.mxu0 0
        %1757 = vmatprep.subr.bf16.mxu0 0
        %1758 = vmatpush1.bf16.xpose.msra.mxu0 0
        %1759 = vmatprep.subr.bf16.mxu0 0
        %1760 = vmatpush1.bf16.xpose.msra.mxu0 0
        %1761 = vmatprep.subr.bf16.mxu0 0
        %1762 = vmatpush1.bf16.xpose.msra.mxu0 0
        %1763 = vmatprep.subr.bf16.mxu0 0
        %1764 = vmatpush1.bf16.xpose.msra.mxu0 0
        %1765 = vmatprep.subr.bf16.mxu0 0
        %1766 = vmatpush1.bf16.xpose.msra.mxu0 0
        %1767 = vmatprep.mubr.bf16.mxu0 0
        %1768 = vmatmul.mubr.bf16.gmra.mrb[0].mxu0 %v1733
        %v1769 = vpop.f32.mrb[0].mxu0
        %v1770 = vadd.f32 %v1397, %v1769
        %v1771 = vpop.f32.mrb[0].mxu0
        %v1772 = vpop.f32.mrb[0].mxu0
        %v1773 = vpop.f32.mrb[0].mxu0
        %1774 = vdwg.mxu0
        %v1775 = vsel %vm1445, %v1770, -inf
        %1776 = vmax.xlane.f32.xlu0 %v1775
        %v1777 = vpop.xlane.xlu0 %1776
        %v1778 = vsub.f32 %v1770, %v1777
        %v1779 = vmul.f32 %v1778, 1.442695
        %v1780 = vpow.pop %v1779
        %v1781 = vsel %vm1445, %v1780, 0.0
        %1782 = vadd.xlane.f32.xlu0 %v1781
        %v1783 = vpop.xlane.xlu0 %1782
        %v1784 = vrcp.pop %v1783
        %v1785 = vmul.f32 %v1780, %v1784
        %v1786 = vpack.c.bf16 %v1785, %v1785
        %v1787 = vmul.f32 %v1381, %v1729
        %v1788 = vpack.c.bf16 %v1787, %v1787
        %v1790 = vsel %vm1445, %v1786, 0
        %v1793 = vsel %vm1526, %v1788, 0
        %1795 = vmatprep.subr.bf16.mxu0 0
        %1796 = vmatpush1.bf16.msra.mxu0 %v1793
        %1797 = vmatprep.subr.bf16.mxu0 0
        %1798 = vmatpush1.bf16.msra.mxu0 0
        %1799 = vmatprep.subr.bf16.mxu0 0
        %1800 = vmatpush1.bf16.msra.mxu0 0
        %1801 = vmatprep.subr.bf16.mxu0 0
        %1802 = vmatpush1.bf16.msra.mxu0 0
        %1803 = vmatprep.subr.bf16.mxu0 0
        %1804 = vmatpush1.bf16.msra.mxu0 0
        %1805 = vmatprep.subr.bf16.mxu0 0
        %1806 = vmatpush1.bf16.msra.mxu0 0
        %1807 = vmatprep.subr.bf16.mxu0 0
        %1808 = vmatpush1.bf16.msra.mxu0 0
        %1809 = vmatprep.subr.bf16.mxu0 0
        %1810 = vmatpush1.bf16.msra.mxu0 0
        %1811 = vmatprep.subr.bf16.mxu0 0
        %1812 = vmatpush1.bf16.msra.mxu0 0
        %1813 = vmatprep.subr.bf16.mxu0 0
        %1814 = vmatpush1.bf16.msra.mxu0 0
        %1815 = vmatprep.subr.bf16.mxu0 0
        %1816 = vmatpush1.bf16.msra.mxu0 0
        %1817 = vmatprep.subr.bf16.mxu0 0
        %1818 = vmatpush1.bf16.msra.mxu0 0
        %1819 = vmatprep.subr.bf16.mxu0 0
        %1820 = vmatpush1.bf16.msra.mxu0 0
        %1821 = vmatprep.subr.bf16.mxu0 0
        %1822 = vmatpush1.bf16.msra.mxu0 0
        %1823 = vmatprep.subr.bf16.mxu0 0
        %1824 = vmatpush1.bf16.msra.mxu0 0
        %1825 = vmatprep.subr.bf16.mxu0 0
        %1826 = vmatpush1.bf16.msra.mxu0 0
        %1827 = vmatprep.mubr.bf16.mxu0 0
        %1828 = vmatmul.mubr.bf16.gmra.mrb[0].mxu0 %v1790
        %v1829 = vpop.f32.mrb[0].mxu0
        %v1830 = vadd.f32 0.0, %v1829
        %v1831 = vpop.f32.mrb[0].mxu0
        %v1832 = vpop.f32.mrb[0].mxu0
        %v1833 = vpop.f32.mrb[0].mxu0
        %1834 = vdwg.mxu0
        %v1835 = vadd.f32 %v1725, %v1830
        %v1836 = vpack.c.bf16 %v1835, %v1835
        %v1837 = vld [vmem:[#allocation13] sm:$0xf]
        %v1838 = vld [vmem:[#allocation13 + $0x4] sm:$0xf]
        %v1839 = vld [vmem:[#allocation13 + $0x8] sm:$0xf]
        %v1840 = vld [vmem:[#allocation13 + $0xc] sm:$0xf]
        %v1841 = vld [vmem:[#allocation14] sm:$0x1]
        %v1843 = vlaneseq
        %v1844 = vshrl.u32 %v1843, 7
        %v1845 = vsub.s32 0, %v1844
        %v1846 = vrot.slane %v1841, %v1845
        %v1852 = vunpack.c.l.b16 %v1837
        %v1853 = vunpack.c.l.b16 %v1838
        %v1854 = vunpack.c.l.b16 %v1839
        %v1855 = vunpack.c.l.b16 %v1840
        %v1856 = vpack.c.b16 %v1853, %v1852
        %v1857 = vpack.c.b16 %v1855, %v1854
        %v1861 = vsel %vm1216, %v1836, 0
        %1863 = vmatprep.subr.bf16.mxu0 0
        %1864 = vmatpush1.bf16.msra.mxu0 %v1856
        %1865 = vmatprep.subr.bf16.mxu0 0
        %1866 = vmatpush1.bf16.msra.mxu0 %v1857
        %1867 = vmatprep.subr.bf16.mxu0 0
        %1868 = vmatpush1.bf16.msra.mxu0 0
        %1869 = vmatprep.subr.bf16.mxu0 0
        %1870 = vmatpush1.bf16.msra.mxu0 0
        %1871 = vmatprep.subr.bf16.mxu0 0
        %1872 = vmatpush1.bf16.msra.mxu0 0
        %1873 = vmatprep.subr.bf16.mxu0 0
        %1874 = vmatpush1.bf16.msra.mxu0 0
        %1875 = vmatprep.subr.bf16.mxu0 0
        %1876 = vmatpush1.bf16.msra.mxu0 0
        %1877 = vmatprep.subr.bf16.mxu0 0
        %1878 = vmatpush1.bf16.msra.mxu0 0
        %1879 = vmatprep.subr.bf16.mxu0 0
        %1880 = vmatpush1.bf16.msra.mxu0 0
        %1881 = vmatprep.subr.bf16.mxu0 0
        %1882 = vmatpush1.bf16.msra.mxu0 0
        %1883 = vmatprep.subr.bf16.mxu0 0
        %1884 = vmatpush1.bf16.msra.mxu0 0
        %1885 = vmatprep.subr.bf16.mxu0 0
        %1886 = vmatpush1.bf16.msra.mxu0 0
        %1887 = vmatprep.subr.bf16.mxu0 0
        %1888 = vmatpush1.bf16.msra.mxu0 0
        %1889 = vmatprep.subr.bf16.mxu0 0
        %1890 = vmatpush1.bf16.msra.mxu0 0
        %1891 = vmatprep.subr.bf16.mxu0 0
        %1892 = vmatpush1.bf16.msra.mxu0 0
        %1893 = vmatprep.subr.bf16.mxu0 0
        %1894 = vmatpush1.bf16.msra.mxu0 0
        %1895 = vmatprep.mubr.bf16.mxu0 0
        %1896 = vmatmul.mubr.bf16.gmra.mrb[0].mxu0 %v1861
        %v1897 = vpop.f32.mrb[0].mxu0
        %v1898 = vadd.f32 %v1846, %v1897
        %v1899 = vpop.f32.mrb[0].mxu0
        %v1900 = vpop.f32.mrb[0].mxu0
        %v1901 = vpop.f32.mrb[0].mxu0
        %1902 = vdwg.mxu0
        %v1903 = vadd.f32 %v1898, %v1186
        %v1904 = vld [vmem:[#allocation16] sm:$0x1]
        %v1905 = vld [vmem:[#allocation17] sm:$0x1]
        %v1906 = vsel %vm1216, %v1903, 0.0
        %1907 = vadd.xlane.f32.xlu0 %v1906
        %v1908 = vpop.xlane.xlu0 %1907
        %v1909 = vrcp.pop 32.0
        %v1910 = vmul.f32 %v1908, %v1909
        %v1911 = vsub.f32 %v1903, %v1910
        %v1912 = vmul.f32 %v1911, %v1911
        %v1913 = vsel %vm1216, %v1912, 0.0
        %1914 = vadd.xlane.f32.xlu0 %v1913
        %v1915 = vpop.xlane.xlu0 %1914
        %v1916 = vmul.f32 %v1915, %v1909
        %v1917 = vadd.f32 %v1916, 1e-12
        %v1918 = vrsqrt.pop %v1917
        %v1919 = vmul.f32 %v1911, %v1918
        %v1921 = vlaneseq
        %v1922 = vshrl.u32 %v1921, 7
        %v1923 = vsub.s32 0, %v1922
        %v1924 = vrot.slane %v1904, %v1923
        %v1926 = vmul.f32 %v1919, %v1924
        %v1928 = vlaneseq
        %v1929 = vshrl.u32 %v1928, 7
        %v1930 = vsub.s32 0, %v1929
        %v1931 = vrot.slane %v1905, %v1930
        %v1933 = vadd.f32 %v1926, %v1931
        %v1934 = vpack.c.bf16 %v1933, %v1933
        %v1935 = vld [vmem:[%s31] sm:$0xf]
        %v1936 = vld [vmem:[%s31 + $0x4] sm:$0xf]
        %v1937 = vld [vmem:[%s31 + $0x8] sm:$0xf]
        %v1938 = vld [vmem:[%s31 + $0xc] sm:$0xf]
        %v1939 = vld [vmem:[#allocation19] sm:$0x1]
        %v1941 = vlaneseq
        %v1942 = vshrl.u32 %v1941, 7
        %v1943 = vsub.s32 0, %v1942
        %v1944 = vrot.slane %v1939, %v1943
        %v1950 = vunpack.c.l.b16 %v1935
        %v1951 = vunpack.c.l.b16 %v1936
        %v1952 = vunpack.c.l.b16 %v1937
        %v1953 = vunpack.c.l.b16 %v1938
        %v1954 = vpack.c.b16 %v1951, %v1950
        %v1955 = vpack.c.b16 %v1953, %v1952
        %v1959 = vsel %vm1216, %v1934, 0
        %1961 = vmatprep.subr.bf16.mxu0 0
        %1962 = vmatpush1.bf16.msra.mxu0 %v1954
        %1963 = vmatprep.subr.bf16.mxu0 0
        %1964 = vmatpush1.bf16.msra.mxu0 %v1955
        %1965 = vmatprep.subr.bf16.mxu0 0
        %1966 = vmatpush1.bf16.msra.mxu0 0
        %1967 = vmatprep.subr.bf16.mxu0 0
        %1968 = vmatpush1.bf16.msra.mxu0 0
        %1969 = vmatprep.subr.bf16.mxu0 0
        %1970 = vmatpush1.bf16.msra.mxu0 0
        %1971 = vmatprep.subr.bf16.mxu0 0
        %1972 = vmatpush1.bf16.msra.mxu0 0
        %1973 = vmatprep.subr.bf16.mxu0 0
        %1974 = vmatpush1.bf16.msra.mxu0 0
        %1975 = vmatprep.subr.bf16.mxu0 0
        %1976 = vmatpush1.bf16.msra.mxu0 0
        %1977 = vmatprep.subr.bf16.mxu0 0
        %1978 = vmatpush1.bf16.msra.mxu0 0
        %1979 = vmatprep.subr.bf16.mxu0 0
        %1980 = vmatpush1.bf16.msra.mxu0 0
        %1981 = vmatprep.subr.bf16.mxu0 0
        %1982 = vmatpush1.bf16.msra.mxu0 0
        %1983 = vmatprep.subr.bf16.mxu0 0
        %1984 = vmatpush1.bf16.msra.mxu0 0
        %1985 = vmatprep.subr.bf16.mxu0 0
        %1986 = vmatpush1.bf16.msra.mxu0 0
        %1987 = vmatprep.subr.bf16.mxu0 0
        %1988 = vmatpush1.bf16.msra.mxu0 0
        %1989 = vmatprep.subr.bf16.mxu0 0
        %1990 = vmatpush1.bf16.msra.mxu0 0
        %1991 = vmatprep.subr.bf16.mxu0 0
        %1992 = vmatpush1.bf16.msra.mxu0 0
        %1993 = vmatprep.mubr.bf16.mxu0 0
        %1994 = vmatmul.mubr.bf16.gmra.mrb[0].mxu0 %v1959
        %v1995 = vpop.f32.mrb[0].mxu0
        %v1996 = vadd.f32 %v1944, %v1995
        %v1997 = vpop.f32.mrb[0].mxu0
        %v1998 = vpop.f32.mrb[0].mxu0
        %v1999 = vpop.f32.mrb[0].mxu0
        %2000 = vdwg.mxu0
        %v2001 = vpack.c.bf16 %v1188, %v1187
        %v2002 = vld [vmem:[%s35] sm:$0xf]
        %v2003 = vld [vmem:[%s35 + $0x4] sm:$0xf]
        %v2004 = vld [vmem:[%s35 + $0x8] sm:$0xf]
        %v2005 = vld [vmem:[%s35 + $0xc] sm:$0xf]
        %v2006 = vld [vmem:[%s37] sm:$0x1]
        %v2008 = vlaneseq
        %v2009 = vshrl.u32 %v2008, 7
        %v2010 = vsub.s32 0, %v2009
        %v2011 = vrot.slane %v2006, %v2010
        %v2017 = vunpack.c.l.b16 %v2002
        %v2018 = vunpack.c.l.b16 %v2003
        %v2019 = vunpack.c.l.b16 %v2004
        %v2020 = vunpack.c.l.b16 %v2005
        %v2021 = vpack.c.b16 %v2018, %v2017
        %v2022 = vpack.c.b16 %v2020, %v2019
        %v2026 = vsel %vm1216, %v2001, 0
        %2028 = vmatprep.subr.bf16.mxu0 0
        %2029 = vmatpush1.bf16.msra.mxu0 %v2021
        %2030 = vmatprep.subr.bf16.mxu0 0
        %2031 = vmatpush1.bf16.msra.mxu0 %v2022
        %2032 = vmatprep.subr.bf16.mxu0 0
        %2033 = vmatpush1.bf16.msra.mxu0 0
        %2034 = vmatprep.subr.bf16.mxu0 0
        %2035 = vmatpush1.bf16.msra.mxu0 0
        %2036 = vmatprep.subr.bf16.mxu0 0
        %2037 = vmatpush1.bf16.msra.mxu0 0
        %2038 = vmatprep.subr.bf16.mxu0 0
        %2039 = vmatpush1.bf16.msra.mxu0 0
        %2040 = vmatprep.subr.bf16.mxu0 0
        %2041 = vmatpush1.bf16.msra.mxu0 0
        %2042 = vmatprep.subr.bf16.mxu0 0
        %2043 = vmatpush1.bf16.msra.mxu0 0
        %2044 = vmatprep.subr.bf16.mxu0 0
        %2045 = vmatpush1.bf16.msra.mxu0 0
        %2046 = vmatprep.subr.bf16.mxu0 0
        %2047 = vmatpush1.bf16.msra.mxu0 0
        %2048 = vmatprep.subr.bf16.mxu0 0
        %2049 = vmatpush1.bf16.msra.mxu0 0
        %2050 = vmatprep.subr.bf16.mxu0 0
        %2051 = vmatpush1.bf16.msra.mxu0 0
        %2052 = vmatprep.subr.bf16.mxu0 0
        %2053 = vmatpush1.bf16.msra.mxu0 0
        %2054 = vmatprep.subr.bf16.mxu0 0
        %2055 = vmatpush1.bf16.msra.mxu0 0
        %2056 = vmatprep.subr.bf16.mxu0 0
        %2057 = vmatpush1.bf16.msra.mxu0 0
        %2058 = vmatprep.subr.bf16.mxu0 0
        %2059 = vmatpush1.bf16.msra.mxu0 0
        %2060 = vmatprep.mubr.bf16.mxu0 0
        %2061 = vmatmul.mubr.bf16.gmra.mrb[0].mxu0 %v2026
        %v2062 = vpop.f32.mrb[0].mxu0
        %v2063 = vadd.f32 %v2011, %v2062
        %v2064 = vpop.f32.mrb[0].mxu0
        %v2065 = vpop.f32.mrb[0].mxu0
        %v2066 = vadd.f32 %v2011, %v2065
        %v2067 = vpop.f32.mrb[0].mxu0
        %2068 = vdwg.mxu0
        %v2069 = vld [vmem:[#allocation20] sm:$0xf]
        %v2070 = vld [vmem:[#allocation20 + $0x4] sm:$0xf]
        %v2071 = vld [vmem:[#allocation20 + $0x8] sm:$0xf]
        %v2072 = vld [vmem:[#allocation20 + $0xc] sm:$0xf]
        %v2073 = vld [vmem:[%s41] sm:$0x1]
        %v2075 = vlaneseq
        %v2076 = vshrl.u32 %v2075, 7
        %v2077 = vsub.s32 0, %v2076
        %v2078 = vrot.slane %v2073, %v2077
        %v2084 = vunpack.c.l.b16 %v2069
        %v2085 = vunpack.c.l.b16 %v2070
        %v2086 = vunpack.c.l.b16 %v2071
        %v2087 = vunpack.c.l.b16 %v2072
        %v2088 = vpack.c.b16 %v2085, %v2084
        %v2089 = vpack.c.b16 %v2087, %v2086
        %2092 = vmatprep.subr.bf16.mxu0 0
        %2093 = vmatpush1.bf16.msra.mxu0 %v2088
        %2094 = vmatprep.subr.bf16.mxu0 0
        %2095 = vmatpush1.bf16.msra.mxu0 %v2089
        %2096 = vmatprep.subr.bf16.mxu0 0
        %2097 = vmatpush1.bf16.msra.mxu0 0
        %2098 = vmatprep.subr.bf16.mxu0 0
        %2099 = vmatpush1.bf16.msra.mxu0 0
        %2100 = vmatprep.subr.bf16.mxu0 0
        %2101 = vmatpush1.bf16.msra.mxu0 0
        %2102 = vmatprep.subr.bf16.mxu0 0
        %2103 = vmatpush1.bf16.msra.mxu0 0
        %2104 = vmatprep.subr.bf16.mxu0 0
        %2105 = vmatpush1.bf16.msra.mxu0 0
        %2106 = vmatprep.subr.bf16.mxu0 0
        %2107 = vmatpush1.bf16.msra.mxu0 0
        %2108 = vmatprep.subr.bf16.mxu0 0
        %2109 = vmatpush1.bf16.msra.mxu0 0
        %2110 = vmatprep.subr.bf16.mxu0 0
        %2111 = vmatpush1.bf16.msra.mxu0 0
        %2112 = vmatprep.subr.bf16.mxu0 0
        %2113 = vmatpush1.bf16.msra.mxu0 0
        %2114 = vmatprep.subr.bf16.mxu0 0
        %2115 = vmatpush1.bf16.msra.mxu0 0
        %2116 = vmatprep.subr.bf16.mxu0 0
        %2117 = vmatpush1.bf16.msra.mxu0 0
        %2118 = vmatprep.subr.bf16.mxu0 0
        %2119 = vmatpush1.bf16.msra.mxu0 0
        %2120 = vmatprep.subr.bf16.mxu0 0
        %2121 = vmatpush1.bf16.msra.mxu0 0
        %2122 = vmatprep.subr.bf16.mxu0 0
        %2123 = vmatpush1.bf16.msra.mxu0 0
        %2124 = vmatprep.mubr.bf16.mxu0 0
        %2125 = vmatmul.mubr.bf16.gmra.mrb[0].mxu0 %v2026
        %v2126 = vpop.f32.mrb[0].mxu0
        %v2127 = vadd.f32 %v2078, %v2126
        %v2128 = vpop.f32.mrb[0].mxu0
        %v2129 = vpop.f32.mrb[0].mxu0
        %v2130 = vadd.f32 %v2078, %v2129
        %v2131 = vpop.f32.mrb[0].mxu0
        %2132 = vdwg.mxu0
        %v2133 = vpack.c.bf16 %v2066, %v2063
        %v2134 = vmul.f32 %v1996, %v1390
        %v2135 = vpack.c.bf16 %v2134, %v2134
        %v2137 = vlaneseq
        %v2138 = vshrl.u32 %v2137, 7
        %v2139 = vsub.s32 0, %v2138
        %v2140 = vrot.slane %v1190, %v2139
        %v2143 = vsel %vm1216, %v2135, 0
        %v2146 = vsel %vm1216, %v2133, 0
        %2148 = vmatprep.subr.bf16.mxu0 0
        %2149 = vmatpush1.bf16.xpose.msra.mxu0 %v2146
        %2150 = vmatprep.subr.bf16.mxu0 0
        %2151 = vmatpush1.bf16.xpose.msra.mxu0 0
        %2152 = vmatprep.subr.bf16.mxu0 0
        %2153 = vmatpush1.bf16.xpose.msra.mxu0 0
        %2154 = vmatprep.subr.bf16.mxu0 0
        %2155 = vmatpush1.bf16.xpose.msra.mxu0 0
        %2156 = vmatprep.subr.bf16.mxu0 0
        %2157 = vmatpush1.bf16.xpose.msra.mxu0 0
        %2158 = vmatprep.subr.bf16.mxu0 0
        %2159 = vmatpush1.bf16.xpose.msra.mxu0 0
        %2160 = vmatprep.subr.bf16.mxu0 0
        %2161 = vmatpush1.bf16.xpose.msra.mxu0 0
        %2162 = vmatprep.subr.bf16.mxu0 0
        %2163 = vmatpush1.bf16.xpose.msra.mxu0 0
        %2164 = vmatprep.subr.bf16.mxu0 0
        %2165 = vmatpush1.bf16.xpose.msra.mxu0 0
        %2166 = vmatprep.subr.bf16.mxu0 0
        %2167 = vmatpush1.bf16.xpose.msra.mxu0 0
        %2168 = vmatprep.subr.bf16.mxu0 0
        %2169 = vmatpush1.bf16.xpose.msra.mxu0 0
        %2170 = vmatprep.subr.bf16.mxu0 0
        %2171 = vmatpush1.bf16.xpose.msra.mxu0 0
        %2172 = vmatprep.subr.bf16.mxu0 0
        %2173 = vmatpush1.bf16.xpose.msra.mxu0 0
        %2174 = vmatprep.subr.bf16.mxu0 0
        %2175 = vmatpush1.bf16.xpose.msra.mxu0 0
        %2176 = vmatprep.subr.bf16.mxu0 0
        %2177 = vmatpush1.bf16.xpose.msra.mxu0 0
        %2178 = vmatprep.subr.bf16.mxu0 0
        %2179 = vmatpush1.bf16.xpose.msra.mxu0 0
        %2180 = vmatprep.mubr.bf16.mxu0 0
        %2181 = vmatmul.mubr.bf16.gmra.mrb[0].mxu0 %v2143
        %v2182 = vpop.f32.mrb[0].mxu0
        %v2183 = vadd.f32 %v2140, %v2182
        %v2184 = vpop.f32.mrb[0].mxu0
        %v2185 = vpop.f32.mrb[0].mxu0
        %v2186 = vpop.f32.mrb[0].mxu0
        %2187 = vdwg.mxu0
        %vm2188 = vcmask 130048
        %v2189 = vsel %vm2188, %v2183, -inf
        %2190 = vmax.xlane.f32.xlu0 %v2189
        %v2191 = vpop.xlane.xlu0 %2190
        %v2192 = vsub.f32 %v2183, %v2191
        %v2193 = vmul.f32 %v2192, 1.442695
        %v2194 = vpow.pop %v2193
        %v2195 = vsel %vm2188, %v2194, 0.0
        %2196 = vadd.xlane.f32.xlu0 %v2195
        %v2197 = vpop.xlane.xlu0 %2196
        %v2198 = vrcp.pop %v2197
        %v2199 = vmul.f32 %v2194, %v2198
        %v2200 = vpack.c.bf16 %v2199, %v2199
        %v2201 = vmul.f32 %v2127, %v1390
        %v2202 = vmul.f32 %v2130, %v1390
        %v2203 = vpack.c.bf16 %v2202, %v2201
        %v2204 = vmul.f32 %v1996, %v1463
        %v2205 = vpack.c.bf16 %v2204, %v2204
        %v2207 = vsel %vm1216, %v2205, 0
        %2209 = vmatprep.subr.bf16.mxu0 0
        %2210 = vmatpush1.bf16.xpose.msra.mxu0 %v2146
        %2211 = vmatprep.subr.bf16.mxu0 0
        %2212 = vmatpush1.bf16.xpose.msra.mxu0 0
        %2213 = vmatprep.subr.bf16.mxu0 0
        %2214 = vmatpush1.bf16.xpose.msra.mxu0 0
        %2215 = vmatprep.subr.bf16.mxu0 0
        %2216 = vmatpush1.bf16.xpose.msra.mxu0 0
        %2217 = vmatprep.subr.bf16.mxu0 0
        %2218 = vmatpush1.bf16.xpose.msra.mxu0 0
        %2219 = vmatprep.subr.bf16.mxu0 0
        %2220 = vmatpush1.bf16.xpose.msra.mxu0 0
        %2221 = vmatprep.subr.bf16.mxu0 0
        %2222 = vmatpush1.bf16.xpose.msra.mxu0 0
        %2223 = vmatprep.subr.bf16.mxu0 0
        %2224 = vmatpush1.bf16.xpose.msra.mxu0 0
        %2225 = vmatprep.subr.bf16.mxu0 0
        %2226 = vmatpush1.bf16.xpose.msra.mxu0 0
        %2227 = vmatprep.subr.bf16.mxu0 0
        %2228 = vmatpush1.bf16.xpose.msra.mxu0 0
        %2229 = vmatprep.subr.bf16.mxu0 0
        %2230 = vmatpush1.bf16.xpose.msra.mxu0 0
        %2231 = vmatprep.subr.bf16.mxu0 0
        %2232 = vmatpush1.bf16.xpose.msra.mxu0 0
        %2233 = vmatprep.subr.bf16.mxu0 0
        %2234 = vmatpush1.bf16.xpose.msra.mxu0 0
        %2235 = vmatprep.subr.bf16.mxu0 0
        %2236 = vmatpush1.bf16.xpose.msra.mxu0 0
        %2237 = vmatprep.subr.bf16.mxu0 0
        %2238 = vmatpush1.bf16.xpose.msra.mxu0 0
        %2239 = vmatprep.subr.bf16.mxu0 0
        %2240 = vmatpush1.bf16.xpose.msra.mxu0 0
        %2241 = vmatprep.mubr.bf16.mxu0 0
        %2242 = vmatmul.mubr.bf16.gmra.mrb[0].mxu0 %v2207
        %v2243 = vpop.f32.mrb[0].mxu0
        %v2244 = vadd.f32 %v2140, %v2243
        %v2245 = vpop.f32.mrb[0].mxu0
        %v2246 = vpop.f32.mrb[0].mxu0
        %v2247 = vpop.f32.mrb[0].mxu0
        %2248 = vdwg.mxu0
        %v2249 = vsel %vm2188, %v2244, -inf
        %2250 = vmax.xlane.f32.xlu0 %v2249
        %v2251 = vpop.xlane.xlu0 %2250
        %v2252 = vsub.f32 %v2244, %v2251
        %v2253 = vmul.f32 %v2252, 1.442695
        %v2254 = vpow.pop %v2253
        %v2255 = vsel %vm2188, %v2254, 0.0
        %2256 = vadd.xlane.f32.xlu0 %v2255
        %v2257 = vpop.xlane.xlu0 %2256
        %v2258 = vrcp.pop %v2257
        %v2259 = vmul.f32 %v2254, %v2258
        %v2260 = vpack.c.bf16 %v2259, %v2259
        %v2261 = vmul.f32 %v2127, %v1463
        %v2262 = vmul.f32 %v2130, %v1463
        %v2263 = vpack.c.bf16 %v2262, %v2261
        %v2265 = vsel %vm2188, %v2260, 0
        %2267 = vmatprep.subr.bf16.mxu0 0
        %2268 = vmatpush1.bf16.msra.mxu0 %v2263
        %2269 = vmatprep.subr.bf16.mxu0 0
        %2270 = vmatpush1.bf16.msra.mxu0 0
        %2271 = vmatprep.subr.bf16.mxu0 0
        %2272 = vmatpush1.bf16.msra.mxu0 0
        %2273 = vmatprep.subr.bf16.mxu0 0
        %2274 = vmatpush1.bf16.msra.mxu0 0
        %2275 = vmatprep.subr.bf16.mxu0 0
        %2276 = vmatpush1.bf16.msra.mxu0 0
        %2277 = vmatprep.subr.bf16.mxu0 0
        %2278 = vmatpush1.bf16.msra.mxu0 0
        %2279 = vmatprep.subr.bf16.mxu0 0
        %2280 = vmatpush1.bf16.msra.mxu0 0
        %2281 = vmatprep.subr.bf16.mxu0 0
        %2282 = vmatpush1.bf16.msra.mxu0 0
        %2283 = vmatprep.subr.bf16.mxu0 0
        %2284 = vmatpush1.bf16.msra.mxu0 0
        %2285 = vmatprep.subr.bf16.mxu0 0
        %2286 = vmatpush1.bf16.msra.mxu0 0
        %2287 = vmatprep.subr.bf16.mxu0 0
        %2288 = vmatpush1.bf16.msra.mxu0 0
        %2289 = vmatprep.subr.bf16.mxu0 0
        %2290 = vmatpush1.bf16.msra.mxu0 0
        %2291 = vmatprep.subr.bf16.mxu0 0
        %2292 = vmatpush1.bf16.msra.mxu0 0
        %2293 = vmatprep.subr.bf16.mxu0 0
        %2294 = vmatpush1.bf16.msra.mxu0 0
        %2295 = vmatprep.subr.bf16.mxu0 0
        %2296 = vmatpush1.bf16.msra.mxu0 0
        %2297 = vmatprep.subr.bf16.mxu0 0
        %2298 = vmatpush1.bf16.msra.mxu0 0
        %2299 = vmatprep.mubr.bf16.mxu0 0
        %2300 = vmatmul.mubr.bf16.gmra.mrb[0].mxu0 %v2265
        %v2301 = vpop.f32.mrb[0].mxu0
        %v2302 = vadd.f32 0.0, %v2301
        %v2303 = vpop.f32.mrb[0].mxu0
        %v2304 = vpop.f32.mrb[0].mxu0
        %v2305 = vpop.f32.mrb[0].mxu0
        %2306 = vdwg.mxu0
        %v2308 = vsel %vm2188, %v2200, 0
        %2310 = vmatprep.subr.bf16.mxu0 0
        %2311 = vmatpush1.bf16.msra.mxu0 %v2203
        %2312 = vmatprep.subr.bf16.mxu0 0
        %2313 = vmatpush1.bf16.msra.mxu0 0
        %2314 = vmatprep.subr.bf16.mxu0 0
        %2315 = vmatpush1.bf16.msra.mxu0 0
        %2316 = vmatprep.subr.bf16.mxu0 0
        %2317 = vmatpush1.bf16.msra.mxu0 0
        %2318 = vmatprep.subr.bf16.mxu0 0
        %2319 = vmatpush1.bf16.msra.mxu0 0
        %2320 = vmatprep.subr.bf16.mxu0 0
        %2321 = vmatpush1.bf16.msra.mxu0 0
        %2322 = vmatprep.subr.bf16.mxu0 0
        %2323 = vmatpush1.bf16.msra.mxu0 0
        %2324 = vmatprep.subr.bf16.mxu0 0
        %2325 = vmatpush1.bf16.msra.mxu0 0
        %2326 = vmatprep.subr.bf16.mxu0 0
        %2327 = vmatpush1.bf16.msra.mxu0 0
        %2328 = vmatprep.subr.bf16.mxu0 0
        %2329 = vmatpush1.bf16.msra.mxu0 0
        %2330 = vmatprep.subr.bf16.mxu0 0
        %2331 = vmatpush1.bf16.msra.mxu0 0
        %2332 = vmatprep.subr.bf16.mxu0 0
        %2333 = vmatpush1.bf16.msra.mxu0 0
        %2334 = vmatprep.subr.bf16.mxu0 0
        %2335 = vmatpush1.bf16.msra.mxu0 0
        %2336 = vmatprep.subr.bf16.mxu0 0
        %2337 = vmatpush1.bf16.msra.mxu0 0
        %2338 = vmatprep.subr.bf16.mxu0 0
        %2339 = vmatpush1.bf16.msra.mxu0 0
        %2340 = vmatprep.subr.bf16.mxu0 0
        %2341 = vmatpush1.bf16.msra.mxu0 0
        %2342 = vmatprep.mubr.bf16.mxu0 0
        %2343 = vmatmul.mubr.bf16.gmra.mrb[0].mxu0 %v2308
        %v2344 = vpop.f32.mrb[0].mxu0
        %v2345 = vadd.f32 %v2302, %v2344
        %v2346 = vpop.f32.mrb[0].mxu0
        %v2347 = vpop.f32.mrb[0].mxu0
        %v2348 = vpop.f32.mrb[0].mxu0
        %2349 = vdwg.mxu0
        %v2350 = vmul.f32 %v1996, %v1619
        %v2351 = vpack.c.bf16 %v2350, %v2350
        %v2353 = vsel %vm1216, %v2351, 0
        %2355 = vmatprep.subr.bf16.mxu0 0
        %2356 = vmatpush1.bf16.xpose.msra.mxu0 %v2146
        %2357 = vmatprep.subr.bf16.mxu0 0
        %2358 = vmatpush1.bf16.xpose.msra.mxu0 0
        %2359 = vmatprep.subr.bf16.mxu0 0
        %2360 = vmatpush1.bf16.xpose.msra.mxu0 0
        %2361 = vmatprep.subr.bf16.mxu0 0
        %2362 = vmatpush1.bf16.xpose.msra.mxu0 0
        %2363 = vmatprep.subr.bf16.mxu0 0
        %2364 = vmatpush1.bf16.xpose.msra.mxu0 0
        %2365 = vmatprep.subr.bf16.mxu0 0
        %2366 = vmatpush1.bf16.xpose.msra.mxu0 0
        %2367 = vmatprep.subr.bf16.mxu0 0
        %2368 = vmatpush1.bf16.xpose.msra.mxu0 0
        %2369 = vmatprep.subr.bf16.mxu0 0
        %2370 = vmatpush1.bf16.xpose.msra.mxu0 0
        %2371 = vmatprep.subr.bf16.mxu0 0
        %2372 = vmatpush1.bf16.xpose.msra.mxu0 0
        %2373 = vmatprep.subr.bf16.mxu0 0
        %2374 = vmatpush1.bf16.xpose.msra.mxu0 0
        %2375 = vmatprep.subr.bf16.mxu0 0
        %2376 = vmatpush1.bf16.xpose.msra.mxu0 0
        %2377 = vmatprep.subr.bf16.mxu0 0
        %2378 = vmatpush1.bf16.xpose.msra.mxu0 0
        %2379 = vmatprep.subr.bf16.mxu0 0
        %2380 = vmatpush1.bf16.xpose.msra.mxu0 0
        %2381 = vmatprep.subr.bf16.mxu0 0
        %2382 = vmatpush1.bf16.xpose.msra.mxu0 0
        %2383 = vmatprep.subr.bf16.mxu0 0
        %2384 = vmatpush1.bf16.xpose.msra.mxu0 0
        %2385 = vmatprep.subr.bf16.mxu0 0
        %2386 = vmatpush1.bf16.xpose.msra.mxu0 0
        %2387 = vmatprep.mubr.bf16.mxu0 0
        %2388 = vmatmul.mubr.bf16.gmra.mrb[0].mxu0 %v2353
        %v2389 = vpop.f32.mrb[0].mxu0
        %v2390 = vadd.f32 %v2140, %v2389
        %v2391 = vpop.f32.mrb[0].mxu0
        %v2392 = vpop.f32.mrb[0].mxu0
        %v2393 = vpop.f32.mrb[0].mxu0
        %2394 = vdwg.mxu0
        %v2395 = vsel %vm2188, %v2390, -inf
        %2396 = vmax.xlane.f32.xlu0 %v2395
        %v2397 = vpop.xlane.xlu0 %2396
        %v2398 = vsub.f32 %v2390, %v2397
        %v2399 = vmul.f32 %v2398, 1.442695
        %v2400 = vpow.pop %v2399
        %v2401 = vsel %vm2188, %v2400, 0.0
        %2402 = vadd.xlane.f32.xlu0 %v2401
        %v2403 = vpop.xlane.xlu0 %2402
        %v2404 = vrcp.pop %v2403
        %v2405 = vmul.f32 %v2400, %v2404
        %v2406 = vpack.c.bf16 %v2405, %v2405
        %v2407 = vmul.f32 %v2127, %v1619
        %v2408 = vmul.f32 %v2130, %v1619
        %v2409 = vpack.c.bf16 %v2408, %v2407
        %v2411 = vsel %vm2188, %v2406, 0
        %2413 = vmatprep.subr.bf16.mxu0 0
        %2414 = vmatpush1.bf16.msra.mxu0 %v2409
        %2415 = vmatprep.subr.bf16.mxu0 0
        %2416 = vmatpush1.bf16.msra.mxu0 0
        %2417 = vmatprep.subr.bf16.mxu0 0
        %2418 = vmatpush1.bf16.msra.mxu0 0
        %2419 = vmatprep.subr.bf16.mxu0 0
        %2420 = vmatpush1.bf16.msra.mxu0 0
        %2421 = vmatprep.subr.bf16.mxu0 0
        %2422 = vmatpush1.bf16.msra.mxu0 0
        %2423 = vmatprep.subr.bf16.mxu0 0
        %2424 = vmatpush1.bf16.msra.mxu0 0
        %2425 = vmatprep.subr.bf16.mxu0 0
        %2426 = vmatpush1.bf16.msra.mxu0 0
        %2427 = vmatprep.subr.bf16.mxu0 0
        %2428 = vmatpush1.bf16.msra.mxu0 0
        %2429 = vmatprep.subr.bf16.mxu0 0
        %2430 = vmatpush1.bf16.msra.mxu0 0
        %2431 = vmatprep.subr.bf16.mxu0 0
        %2432 = vmatpush1.bf16.msra.mxu0 0
        %2433 = vmatprep.subr.bf16.mxu0 0
        %2434 = vmatpush1.bf16.msra.mxu0 0
        %2435 = vmatprep.subr.bf16.mxu0 0
        %2436 = vmatpush1.bf16.msra.mxu0 0
        %2437 = vmatprep.subr.bf16.mxu0 0
        %2438 = vmatpush1.bf16.msra.mxu0 0
        %2439 = vmatprep.subr.bf16.mxu0 0
        %2440 = vmatpush1.bf16.msra.mxu0 0
        %2441 = vmatprep.subr.bf16.mxu0 0
        %2442 = vmatpush1.bf16.msra.mxu0 0
        %2443 = vmatprep.subr.bf16.mxu0 0
        %2444 = vmatpush1.bf16.msra.mxu0 0
        %2445 = vmatprep.mubr.bf16.mxu0 0
        %2446 = vmatmul.mubr.bf16.gmra.mrb[0].mxu0 %v2411
        %v2447 = vpop.f32.mrb[0].mxu0
        %v2448 = vadd.f32 0.0, %v2447
        %v2449 = vpop.f32.mrb[0].mxu0
        %v2450 = vpop.f32.mrb[0].mxu0
        %v2451 = vpop.f32.mrb[0].mxu0
        %2452 = vdwg.mxu0
        %v2453 = vadd.f32 %v2345, %v2448
        %v2454 = vmul.f32 %v1996, %v1729
        %v2455 = vpack.c.bf16 %v2454, %v2454
        %v2457 = vsel %vm1216, %v2455, 0
        %2459 = vmatprep.subr.bf16.mxu0 0
        %2460 = vmatpush1.bf16.xpose.msra.mxu0 %v2146
        %2461 = vmatprep.subr.bf16.mxu0 0
        %2462 = vmatpush1.bf16.xpose.msra.mxu0 0
        %2463 = vmatprep.subr.bf16.mxu0 0
        %2464 = vmatpush1.bf16.xpose.msra.mxu0 0
        %2465 = vmatprep.subr.bf16.mxu0 0
        %2466 = vmatpush1.bf16.xpose.msra.mxu0 0
        %2467 = vmatprep.subr.bf16.mxu0 0
        %2468 = vmatpush1.bf16.xpose.msra.mxu0 0
        %2469 = vmatprep.subr.bf16.mxu0 0
        %2470 = vmatpush1.bf16.xpose.msra.mxu0 0
        %2471 = vmatprep.subr.bf16.mxu0 0
        %2472 = vmatpush1.bf16.xpose.msra.mxu0 0
        %2473 = vmatprep.subr.bf16.mxu0 0
        %2474 = vmatpush1.bf16.xpose.msra.mxu0 0
        %2475 = vmatprep.subr.bf16.mxu0 0
        %2476 = vmatpush1.bf16.xpose.msra.mxu0 0
        %2477 = vmatprep.subr.bf16.mxu0 0
        %2478 = vmatpush1.bf16.xpose.msra.mxu0 0
        %2479 = vmatprep.subr.bf16.mxu0 0
        %2480 = vmatpush1.bf16.xpose.msra.mxu0 0
        %2481 = vmatprep.subr.bf16.mxu0 0
        %2482 = vmatpush1.bf16.xpose.msra.mxu0 0
        %2483 = vmatprep.subr.bf16.mxu0 0
        %2484 = vmatpush1.bf16.xpose.msra.mxu0 0
        %2485 = vmatprep.subr.bf16.mxu0 0
        %2486 = vmatpush1.bf16.xpose.msra.mxu0 0
        %2487 = vmatprep.subr.bf16.mxu0 0
        %2488 = vmatpush1.bf16.xpose.msra.mxu0 0
        %2489 = vmatprep.subr.bf16.mxu0 0
        %2490 = vmatpush1.bf16.xpose.msra.mxu0 0
        %2491 = vmatprep.mubr.bf16.mxu0 0
        %2492 = vmatmul.mubr.bf16.gmra.mrb[0].mxu0 %v2457
        %v2493 = vpop.f32.mrb[0].mxu0
        %v2494 = vadd.f32 %v2140, %v2493
        %v2495 = vpop.f32.mrb[0].mxu0
        %v2496 = vpop.f32.mrb[0].mxu0
        %v2497 = vpop.f32.mrb[0].mxu0
        %2498 = vdwg.mxu0
        %v2499 = vsel %vm2188, %v2494, -inf
        %2500 = vmax.xlane.f32.xlu0 %v2499
        %v2501 = vpop.xlane.xlu0 %2500
        %v2502 = vsub.f32 %v2494, %v2501
        %v2503 = vmul.f32 %v2502, 1.442695
        %v2504 = vpow.pop %v2503
        %v2505 = vsel %vm2188, %v2504, 0.0
        %2506 = vadd.xlane.f32.xlu0 %v2505
        %v2507 = vpop.xlane.xlu0 %2506
        %v2508 = vrcp.pop %v2507
        %v2509 = vmul.f32 %v2504, %v2508
        %v2510 = vpack.c.bf16 %v2509, %v2509
        %v2511 = vmul.f32 %v2127, %v1729
        %v2512 = vmul.f32 %v2130, %v1729
        %v2513 = vpack.c.bf16 %v2512, %v2511
        %v2515 = vsel %vm2188, %v2510, 0
        %2517 = vmatprep.subr.bf16.mxu0 0
        %2518 = vmatpush1.bf16.msra.mxu0 %v2513
        %2519 = vmatprep.subr.bf16.mxu0 0
        %2520 = vmatpush1.bf16.msra.mxu0 0
        %2521 = vmatprep.subr.bf16.mxu0 0
        %2522 = vmatpush1.bf16.msra.mxu0 0
        %2523 = vmatprep.subr.bf16.mxu0 0
        %2524 = vmatpush1.bf16.msra.mxu0 0
        %2525 = vmatprep.subr.bf16.mxu0 0
        %2526 = vmatpush1.bf16.msra.mxu0 0
        %2527 = vmatprep.subr.bf16.mxu0 0
        %2528 = vmatpush1.bf16.msra.mxu0 0
        %2529 = vmatprep.subr.bf16.mxu0 0
        %2530 = vmatpush1.bf16.msra.mxu0 0
        %2531 = vmatprep.subr.bf16.mxu0 0
        %2532 = vmatpush1.bf16.msra.mxu0 0
        %2533 = vmatprep.subr.bf16.mxu0 0
        %2534 = vmatpush1.bf16.msra.mxu0 0
        %2535 = vmatprep.subr.bf16.mxu0 0
        %2536 = vmatpush1.bf16.msra.mxu0 0
        %2537 = vmatprep.subr.bf16.mxu0 0
        %2538 = vmatpush1.bf16.msra.mxu0 0
        %2539 = vmatprep.subr.bf16.mxu0 0
        %2540 = vmatpush1.bf16.msra.mxu0 0
        %2541 = vmatprep.subr.bf16.mxu0 0
        %2542 = vmatpush1.bf16.msra.mxu0 0
        %2543 = vmatprep.subr.bf16.mxu0 0
        %2544 = vmatpush1.bf16.msra.mxu0 0
        %2545 = vmatprep.subr.bf16.mxu0 0
        %2546 = vmatpush1.bf16.msra.mxu0 0
        %2547 = vmatprep.subr.bf16.mxu0 0
        %2548 = vmatpush1.bf16.msra.mxu0 0
        %2549 = vmatprep.mubr.bf16.mxu0 0
        %2550 = vmatmul.mubr.bf16.gmra.mrb[0].mxu0 %v2515
        %v2551 = vpop.f32.mrb[0].mxu0
        %v2552 = vadd.f32 0.0, %v2551
        %v2553 = vpop.f32.mrb[0].mxu0
        %v2554 = vpop.f32.mrb[0].mxu0
        %v2555 = vpop.f32.mrb[0].mxu0
        %2556 = vdwg.mxu0
        %v2557 = vadd.f32 %v2453, %v2552
        %v2558 = vpack.c.bf16 %v2557, %v2557
        %v2559 = vld [vmem:[#allocation22] sm:$0xf]
        %v2560 = vld [vmem:[#allocation22 + $0x4] sm:$0xf]
        %v2561 = vld [vmem:[#allocation22 + $0x8] sm:$0xf]
        %v2562 = vld [vmem:[#allocation22 + $0xc] sm:$0xf]
        %v2563 = vld [vmem:[%s45] sm:$0x1]
        %v2565 = vlaneseq
        %v2566 = vshrl.u32 %v2565, 7
        %v2567 = vsub.s32 0, %v2566
        %v2568 = vrot.slane %v2563, %v2567
        %v2574 = vunpack.c.l.b16 %v2559
        %v2575 = vunpack.c.l.b16 %v2560
        %v2576 = vunpack.c.l.b16 %v2561
        %v2577 = vunpack.c.l.b16 %v2562
        %v2578 = vpack.c.b16 %v2575, %v2574
        %v2579 = vpack.c.b16 %v2577, %v2576
        %v2583 = vsel %vm1216, %v2558, 0
        %2585 = vmatprep.subr.bf16.mxu0 0
        %2586 = vmatpush1.bf16.msra.mxu0 %v2578
        %2587 = vmatprep.subr.bf16.mxu0 0
        %2588 = vmatpush1.bf16.msra.mxu0 %v2579
        %2589 = vmatprep.subr.bf16.mxu0 0
        %2590 = vmatpush1.bf16.msra.mxu0 0
        %2591 = vmatprep.subr.bf16.mxu0 0
        %2592 = vmatpush1.bf16.msra.mxu0 0
        %2593 = vmatprep.subr.bf16.mxu0 0
        %2594 = vmatpush1.bf16.msra.mxu0 0
        %2595 = vmatprep.subr.bf16.mxu0 0
        %2596 = vmatpush1.bf16.msra.mxu0 0
        %2597 = vmatprep.subr.bf16.mxu0 0
        %2598 = vmatpush1.bf16.msra.mxu0 0
        %2599 = vmatprep.subr.bf16.mxu0 0
        %2600 = vmatpush1.bf16.msra.mxu0 0
        %2601 = vmatprep.subr.bf16.mxu0 0
        %2602 = vmatpush1.bf16.msra.mxu0 0
        %2603 = vmatprep.subr.bf16.mxu0 0
        %2604 = vmatpush1.bf16.msra.mxu0 0
        %2605 = vmatprep.subr.bf16.mxu0 0
        %2606 = vmatpush1.bf16.msra.mxu0 0
        %2607 = vmatprep.subr.bf16.mxu0 0
        %2608 = vmatpush1.bf16.msra.mxu0 0
        %2609 = vmatprep.subr.bf16.mxu0 0
        %2610 = vmatpush1.bf16.msra.mxu0 0
        %2611 = vmatprep.subr.bf16.mxu0 0
        %2612 = vmatpush1.bf16.msra.mxu0 0
        %2613 = vmatprep.subr.bf16.mxu0 0
        %2614 = vmatpush1.bf16.msra.mxu0 0
        %2615 = vmatprep.subr.bf16.mxu0 0
        %2616 = vmatpush1.bf16.msra.mxu0 0
        %2617 = vmatprep.mubr.bf16.mxu0 0
        %2618 = vmatmul.mubr.bf16.gmra.mrb[0].mxu0 %v2583
        %v2619 = vpop.f32.mrb[0].mxu0
        %v2620 = vadd.f32 %v2568, %v2619
        %v2621 = vpop.f32.mrb[0].mxu0
        %v2622 = vpop.f32.mrb[0].mxu0
        %v2623 = vpop.f32.mrb[0].mxu0
        %2624 = vdwg.mxu0
        %v2625 = vadd.f32 %v2620, %v1933
        %v2626 = vld [vmem:[%s47] sm:$0x1]
        %v2627 = vld [vmem:[%s49] sm:$0x1]
        %v2628 = vsel %vm1216, %v2625, 0.0
        %2629 = vadd.xlane.f32.xlu0 %v2628
        %v2630 = vpop.xlane.xlu0 %2629
        %v2631 = vmul.f32 %v2630, %v1909
        %v2632 = vsub.f32 %v2625, %v2631
        %v2633 = vmul.f32 %v2632, %v2632
        %v2634 = vsel %vm1216, %v2633, 0.0
        %2635 = vadd.xlane.f32.xlu0 %v2634
        %v2636 = vpop.xlane.xlu0 %2635
        %v2637 = vmul.f32 %v2636, %v1909
        %v2638 = vadd.f32 %v2637, 1e-12
        %v2639 = vrsqrt.pop %v2638
        %v2640 = vmul.f32 %v2632, %v2639
        %v2642 = vlaneseq
        %v2643 = vshrl.u32 %v2642, 7
        %v2644 = vsub.s32 0, %v2643
        %v2645 = vrot.slane %v2626, %v2644
        %v2647 = vmul.f32 %v2640, %v2645
        %v2649 = vlaneseq
        %v2650 = vshrl.u32 %v2649, 7
        %v2651 = vsub.s32 0, %v2650
        %v2652 = vrot.slane %v2627, %v2651
        %v2654 = vadd.f32 %v2647, %v2652
        %v2655 = vpack.c.bf16 %v2654, %v2654
        %v2656 = vld [vmem:[%s51] sm:$0xf]
        %v2657 = vld [vmem:[%s51 + $0x4] sm:$0xf]
        %v2658 = vld [vmem:[%s51 + $0x8] sm:$0xf]
        %v2659 = vld [vmem:[%s51 + $0xc] sm:$0xf]
        %v2660 = vld [vmem:[%s53] sm:$0x1]
        %v2662 = vlaneseq
        %v2663 = vshrl.u32 %v2662, 7
        %v2664 = vsub.s32 0, %v2663
        %v2665 = vrot.slane %v2660, %v2664
        %v2671 = vunpack.c.l.b16 %v2656
        %v2672 = vunpack.c.l.b16 %v2657
        %v2673 = vunpack.c.l.b16 %v2658
        %v2674 = vunpack.c.l.b16 %v2659
        %v2675 = vpack.c.b16 %v2672, %v2671
        %v2676 = vpack.c.b16 %v2674, %v2673
        %v2680 = vsel %vm1216, %v2655, 0
        %2682 = vmatprep.subr.bf16.mxu0 0
        %2683 = vmatpush1.bf16.msra.mxu0 %v2675
        %2684 = vmatprep.subr.bf16.mxu0 0
        %2685 = vmatpush1.bf16.msra.mxu0 %v2676
        %2686 = vmatprep.subr.bf16.mxu0 0
        %2687 = vmatpush1.bf16.msra.mxu0 0
        %2688 = vmatprep.subr.bf16.mxu0 0
        %2689 = vmatpush1.bf16.msra.mxu0 0
        %2690 = vmatprep.subr.bf16.mxu0 0
        %2691 = vmatpush1.bf16.msra.mxu0 0
        %2692 = vmatprep.subr.bf16.mxu0 0
        %2693 = vmatpush1.bf16.msra.mxu0 0
        %2694 = vmatprep.subr.bf16.mxu0 0
        %2695 = vmatpush1.bf16.msra.mxu0 0
        %2696 = vmatprep.subr.bf16.mxu0 0
        %2697 = vmatpush1.bf16.msra.mxu0 0
        %2698 = vmatprep.subr.bf16.mxu0 0
        %2699 = vmatpush1.bf16.msra.mxu0 0
        %2700 = vmatprep.subr.bf16.mxu0 0
        %2701 = vmatpush1.bf16.msra.mxu0 0
        %2702 = vmatprep.subr.bf16.mxu0 0
        %2703 = vmatpush1.bf16.msra.mxu0 0
        %2704 = vmatprep.subr.bf16.mxu0 0
        %2705 = vmatpush1.bf16.msra.mxu0 0
        %2706 = vmatprep.subr.bf16.mxu0 0
        %2707 = vmatpush1.bf16.msra.mxu0 0
        %2708 = vmatprep.subr.bf16.mxu0 0
        %2709 = vmatpush1.bf16.msra.mxu0 0
        %2710 = vmatprep.subr.bf16.mxu0 0
        %2711 = vmatpush1.bf16.msra.mxu0 0
        %2712 = vmatprep.subr.bf16.mxu0 0
        %2713 = vmatpush1.bf16.msra.mxu0 0
        %2714 = vmatprep.mubr.bf16.mxu0 0
        %2715 = vmatmul.mubr.bf16.gmra.mrb[0].mxu0 %v2680
        %v2716 = vpop.f32.mrb[0].mxu0
        %v2717 = vadd.f32 %v2665, %v2716
        %v2718 = vpop.f32.mrb[0].mxu0
        %v2719 = vpop.f32.mrb[0].mxu0
        %v2720 = vpop.f32.mrb[0].mxu0
        %2721 = vdwg.mxu0
        %v2722 = vmul.f32 %v2717, 0.5
        %v2723 = vmul.f32 %v2717, 0.70710677
        %vm2724 = vcmp.lt.f32.partialorder %v2723, 0.0
        %v2725 = vsel %vm2724, -1.0, 1.0
        %v2726 = vand.u32 2147483647, %v2723
        %v2727 = vmul.f32 %v2726, 0.3275911
        %v2728 = vadd.f32 %v2727, 1.0
        %v2729 = vrcp.pop %v2728
        %v2730 = vmul.f32 1.0, %v2729
        %v2731 = vmul.f32 %v2730, 1.0614054
        %v2732 = vadd.f32 %v2731, -1.4531521
        %v2733 = vmul.f32 %v2732, %v2730
        %v2734 = vadd.f32 %v2733, 1.4214138
        %v2735 = vmul.f32 %v2734, %v2730
        %v2736 = vadd.f32 %v2735, -0.28449672
        %v2737 = vmul.f32 %v2736, %v2730
        %v2738 = vadd.f32 %v2737, 0.2548296
        %v2739 = vmul.f32 %v2738, %v2730
        %v2740 = vsub.f32 0.0, %v2726
        %v2741 = vmul.f32 %v2740, %v2726
        %v2742 = vmul.f32 %v2741, 1.442695
        %v2743 = vpow.pop %v2742
        %v2744 = vmul.f32 %v2739, %v2743
        %v2745 = vsub.f32 1.0, %v2744
        %v2746 = vmul.f32 %v2725, %v2745
        %v2747 = vadd.f32 %v2746, 1.0
        %v2748 = vmul.f32 %v2722, %v2747
        %v2749 = vpack.c.bf16 %v2748, %v2748
        %v2750 = vld [vmem:[%s55] sm:$0xf]
        %v2751 = vld [vmem:[%s55 + $0x4] sm:$0xf]
        %v2752 = vld [vmem:[%s55 + $0x8] sm:$0xf]
        %v2753 = vld [vmem:[%s55 + $0xc] sm:$0xf]
        %v2754 = vld [vmem:[%s55 + $0x10] sm:$0xf]
        %v2755 = vld [vmem:[%s55 + $0x14] sm:$0xf]
        %v2756 = vld [vmem:[%s55 + $0x18] sm:$0xf]
        %v2757 = vld [vmem:[%s55 + $0x1c] sm:$0xf]
        %v2758 = vld [vmem:[%s55 + $0x20] sm:$0xf]
        %v2759 = vld [vmem:[%s55 + $0x24] sm:$0xf]
        %v2760 = vld [vmem:[%s55 + $0x28] sm:$0xf]
        %v2761 = vld [vmem:[%s55 + $0x2c] sm:$0xf]
        %v2762 = vld [vmem:[%s55 + $0x30] sm:$0xf]
        %v2763 = vld [vmem:[%s55 + $0x34] sm:$0xf]
        %v2764 = vld [vmem:[%s55 + $0x38] sm:$0xf]
        %v2765 = vld [vmem:[%s55 + $0x3c] sm:$0xf]
        %v2766 = vld [vmem:[%s57] sm:$0x1]
        %v2768 = vlaneseq
        %v2769 = vshrl.u32 %v2768, 7
        %v2770 = vsub.s32 0, %v2769
        %v2771 = vrot.slane %v2766, %v2770
        %v2789 = vunpack.c.l.b16 %v2750
        %v2790 = vunpack.c.l.b16 %v2751
        %v2791 = vunpack.c.l.b16 %v2752
        %v2792 = vunpack.c.l.b16 %v2753
        %v2793 = vunpack.c.l.b16 %v2754
        %v2794 = vunpack.c.l.b16 %v2755
        %v2795 = vunpack.c.l.b16 %v2756
        %v2796 = vunpack.c.l.b16 %v2757
        %v2797 = vunpack.c.l.b16 %v2758
        %v2798 = vunpack.c.l.b16 %v2759
        %v2799 = vunpack.c.l.b16 %v2760
        %v2800 = vunpack.c.l.b16 %v2761
        %v2801 = vunpack.c.l.b16 %v2762
        %v2802 = vunpack.c.l.b16 %v2763
        %v2803 = vunpack.c.l.b16 %v2764
        %v2804 = vunpack.c.l.b16 %v2765
        %v2805 = vpack.c.b16 %v2790, %v2789
        %v2806 = vpack.c.b16 %v2792, %v2791
        %v2807 = vpack.c.b16 %v2794, %v2793
        %v2808 = vpack.c.b16 %v2796, %v2795
        %v2809 = vpack.c.b16 %v2798, %v2797
        %v2810 = vpack.c.b16 %v2800, %v2799
        %v2811 = vpack.c.b16 %v2802, %v2801
        %v2812 = vpack.c.b16 %v2804, %v2803
        %2821 = vmatprep.subr.bf16.mxu0 0
        %2822 = vmatpush1.bf16.msra.mxu0 %v2805
        %2823 = vmatprep.subr.bf16.mxu0 0
        %2824 = vmatpush1.bf16.msra.mxu0 %v2806
        %2825 = vmatprep.subr.bf16.mxu0 0
        %2826 = vmatpush1.bf16.msra.mxu0 %v2807
        %2827 = vmatprep.subr.bf16.mxu0 0
        %2828 = vmatpush1.bf16.msra.mxu0 %v2808
        %2829 = vmatprep.subr.bf16.mxu0 0
        %2830 = vmatpush1.bf16.msra.mxu0 %v2809
        %2831 = vmatprep.subr.bf16.mxu0 0
        %2832 = vmatpush1.bf16.msra.mxu0 %v2810
        %2833 = vmatprep.subr.bf16.mxu0 0
        %2834 = vmatpush1.bf16.msra.mxu0 %v2811
        %2835 = vmatprep.subr.bf16.mxu0 0
        %2836 = vmatpush1.bf16.msra.mxu0 %v2812
        %2837 = vmatprep.subr.bf16.mxu0 0
        %2838 = vmatpush1.bf16.msra.mxu0 0
        %2839 = vmatprep.subr.bf16.mxu0 0
        %2840 = vmatpush1.bf16.msra.mxu0 0
        %2841 = vmatprep.subr.bf16.mxu0 0
        %2842 = vmatpush1.bf16.msra.mxu0 0
        %2843 = vmatprep.subr.bf16.mxu0 0
        %2844 = vmatpush1.bf16.msra.mxu0 0
        %2845 = vmatprep.subr.bf16.mxu0 0
        %2846 = vmatpush1.bf16.msra.mxu0 0
        %2847 = vmatprep.subr.bf16.mxu0 0
        %2848 = vmatpush1.bf16.msra.mxu0 0
        %2849 = vmatprep.subr.bf16.mxu0 0
        %2850 = vmatpush1.bf16.msra.mxu0 0
        %2851 = vmatprep.subr.bf16.mxu0 0
        %2852 = vmatpush1.bf16.msra.mxu0 0
        %2853 = vmatprep.mubr.bf16.mxu0 0
        %2854 = vmatmul.mubr.bf16.gmra.mrb[0].mxu0 %v2749
        %v2855 = vpop.f32.mrb[0].mxu0
        %v2856 = vadd.f32 %v2771, %v2855
        %v2857 = vpop.f32.mrb[0].mxu0
        %v2858 = vpop.f32.mrb[0].mxu0
        %v2859 = vpop.f32.mrb[0].mxu0
        %2860 = vdwg.mxu0
        %v2861 = vadd.f32 %v2856, %v2654
        %v2862 = vld [vmem:[%s59] sm:$0x1]
        %v2863 = vld [vmem:[%s61] sm:$0x1]
        %v2864 = vsel %vm1216, %v2861, 0.0
        %2865 = vadd.xlane.f32.xlu0 %v2864
        %v2866 = vpop.xlane.xlu0 %2865
        %v2867 = vmul.f32 %v2866, %v1909
        %v2868 = vsub.f32 %v2861, %v2867
        %v2869 = vmul.f32 %v2868, %v2868
        %v2870 = vsel %vm1216, %v2869, 0.0
        %2871 = vadd.xlane.f32.xlu0 %v2870
        %v2872 = vpop.xlane.xlu0 %2871
        %v2873 = vmul.f32 %v2872, %v1909
        %v2874 = vadd.f32 %v2873, 1e-12
        %v2875 = vrsqrt.pop %v2874
        %v2876 = vmul.f32 %v2868, %v2875
        %v2878 = vlaneseq
        %v2879 = vshrl.u32 %v2878, 7
        %v2880 = vsub.s32 0, %v2879
        %v2881 = vrot.slane %v2862, %v2880
        %v2883 = vmul.f32 %v2876, %v2881
        %v2885 = vlaneseq
        %v2886 = vshrl.u32 %v2885, 7
        %v2887 = vsub.s32 0, %v2886
        %v2888 = vrot.slane %v2863, %v2887
        %v2890 = vadd.f32 %v2883, %v2888
        %2891 = vst.msk [vmem:[%s1175] sm:$0xff] %vm1216, %v2890
        %s2892 = sand.u32 %s767, 1
        %s2893 = scalar_lea.sflag [#allocation4], %s2892
        %s2894 = sand.u32 %s767, 1
        %s2895 = smul.addr %s2894, 8
        %s2896 = scalar_lea.vmem [#allocation23], %s2895
        // Predicated region
        $region197: #{tpu_custom_call.1} parent=143 // pred_check
          %p2897 = pneg %p777
        $region198: #{tpu_custom_call.1} parent=143 // pred_check_branch
          %2899 = sbr.rel (%p2897) target = $region200
        $region199: #{tpu_custom_call.1} parent=143 // pred_region
          %s2901 = ssub.s32 128, 128
          %2902 = vsyncadd %s2893, %s2901
          %s2903 = smul.addr %s88, 128
          %s2904 = scalar_lea.hbm %s63, %s2903
          %s2906 = sshll.u32 %s2896, 4
          %s2907 = int_to_ptr.vmem [resolvable:$true] %s2906
          %2909 = dma.vmem_to_hbm [thread:$0]  %s2907, 128, %s2904, %s2893
        $region200: #{tpu_custom_call.1} parent=143 // pred_fallthru
          _
      $region144: #{tpu_custom_call.1} parent=5 // pred_fallthru
        _
      %p2910 = scmp.le.s32.totalorder 2, %s83
      // Predicated region
      $region201: #{tpu_custom_call.1} parent=5 // pred_check
        %p2911 = pneg %p2910
      $region202: #{tpu_custom_call.1} parent=5 // pred_check_branch
        %2913 = sbr.rel (%p2911) target = $region204
      $region203: #{tpu_custom_call.1} parent=5 // pred_region
        %s2914 = ssub.s32 %s83, 2
        // Predicated region
        $region205: #{tpu_custom_call.1} parent=203 // pred_check
          %p2915 = pneg %p783
        $region206: #{tpu_custom_call.1} parent=203 // pred_check_branch
          %2917 = sbr.rel (%p2915) target = $region208
        $region207: #{tpu_custom_call.1} parent=203 // pred_region
          %s2918 = sand.u32 %s768, 1
          %s2919 = scalar_lea.sflag [#allocation4], %s2918
          %s2920 = sand.u32 %s768, 1
          %s2921 = smul.addr %s2920, 8
          %s2922 = scalar_lea.vmem [#allocation23], %s2921
          %2923 = dma.done %s2919, 128
        $region208: #{tpu_custom_call.1} parent=203 // pred_fallthru
          _
      $region204: #{tpu_custom_call.1} parent=5 // pred_fallthru
        _
    $region6: #{tpu_custom_call.1} parent=1 // loop_footer
      %s87 = sadd.s32 1, %s83
    $region7: #{tpu_custom_call.1} parent=1 // loop_footer_branch
      %82 = sbr.rel target = $region3
    $region8: #{tpu_custom_call.1} parent=1 // loop_exit
      _
    %2924 = vsyncpa [#allocation3], 1
    %s2925 = scalar_lea.sflag [#allocation3], 1
    %2926 = vsyncpa %s2925, 1
    %2927 = vsyncpa [#allocation6], 1
    %s2928 = scalar_lea.sflag [#allocation6], 1
    %2929 = vsyncpa %s2928, 1
    %2930 = vsyncpa [#allocation9], 1
    %2931 = vsyncpa [#allocation12], 1
    %2932 = vsyncpa [#allocation15], 1
    %2933 = vsyncpa [#allocation18], 1
    %2934 = vsyncpa [#allocation21], 1
    %2935 = vsyncpa [#allocation4], 1
    %s2936 = scalar_lea.sflag [#allocation4], 1
    %2937 = vsyncpa %s2936, 1

</llo_original>
